<compile_context>
chip_gen: v6e
topology: v6e:2x2x1
jax: 0.10.0
libtpu: 0.0.40
codegen_flags: <defaults>
</compile_context>

<pallas_src>
import numpy as np

import jax
import jax.numpy as jnp
from jax.experimental import pallas as pl
from jax.experimental.pallas import tpu as pltpu

_BN_EPS = 1e-5


def _vmem():
    # Full-array block resident in VMEM (arrays here are tiny; no tiling).
    return pl.BlockSpec(memory_space=pltpu.MemorySpace.VMEM)


# ---------------------------------------------------------------------------
# Single fused generator kernel
# ---------------------------------------------------------------------------
def _generator_kernel(z_ref, g0, s0,
                      g1, s1, k1, ga1, be1,
                      g2, s2, k2, ga2, be2,
                      g3, s3, k3, ga3, be3,
                      out_ref):
    def conv_t(act, g_ref, s_ref):
        # ConvTranspose2d(k=4) as 4 MXU matmul pairs:
        #   width/channel scatter via G_kh, height scatter via S_kh.
        acc = None
        for kh in range(4):
            y = jnp.dot(act.astype(jnp.bfloat16), g_ref[kh],
                        preferred_element_type=jnp.float32)
            t = jnp.dot(s_ref[kh], y, preferred_element_type=jnp.float32)
            acc = t if acc is None else acc + t
        return acc

    def bn_relu(x, k_ref, ga_ref, be_ref):
        # Training-mode BatchNorm over the full (B,H,W) extent of the
        # (B*H, W*C) slab.  Single-block kernel => stats are exact (do not
        # tile the row axis without switching to a two-pass BN).
        mu_b = jnp.dot(jnp.mean(x, axis=0, keepdims=True), k_ref[...],
                       preferred_element_type=jnp.float32)
        xc = x - mu_b
        var_b = jnp.dot(jnp.mean(xc * xc, axis=0, keepdims=True), k_ref[...],
                        preferred_element_type=jnp.float32)
        inv = jax.lax.rsqrt(var_b + _BN_EPS)
        return jnp.maximum(xc * inv * ga_ref[...] + be_ref[...], 0.0)

    x = conv_t(z_ref[...], g0, s0)                       # (B*4,  4*64)
    x = conv_t(bn_relu(x, k1, ga1, be1), g1, s1)         # (B*8,  8*32)
    x = conv_t(bn_relu(x, k2, ga2, be2), g2, s2)         # (B*16, 16*16)
    x = conv_t(bn_relu(x, k3, ga3, be3), g3, s3)         # (B*32, 32*4)
    out_ref[...] = jnp.tanh(x)                           # lane-dense epilogue


# ---------------------------------------------------------------------------
# Host-side weight preparation (once): fold the transposed-conv scatter into
# per-tap matrices so the kernel is matmuls + elementwise only.
# ---------------------------------------------------------------------------
def _build_convT_mats(w, batch, Hin, Win, stride, pad, cout_pad):
    """w: numpy (Cin, Cout, 4, 4) PyTorch-layout ConvTranspose2d weight.
    Returns G (4, Win*Cin, Wout*cout_pad), S (4, B*Hout, B*Hin), Hout, Wout
    such that  out[(b,oh),(ow,co)] = sum_kh (S_kh @ (X @ G_kh))  reproduces
    out[oh,ow] += x[ih,iw] * w[:, :, kh, kw]  with oh=ih*s-p+kh, ow=iw*s-p+kw.
    """
    Cin, Cout, K, _ = w.shape
    Hout = (Hin - 1) * stride - 2 * pad + K
    Wout = (Win - 1) * stride - 2 * pad + K
    G = np.zeros((K, Win * Cin, Wout * cout_pad), np.float32)
    for kh in range(K):
        for iw in range(Win):
            for kw in range(K):
                ow = iw * stride - pad + kw
                if 0 <= ow < Wout:
                    G[kh, iw * Cin:(iw + 1) * Cin,
                      ow * cout_pad:ow * cout_pad + Cout] = w[:, :, kh, kw]
    S = np.zeros((K, batch * Hout, batch * Hin), np.float32)
    for kh in range(K):
        for b in range(batch):
            for ih in range(Hin):
                oh = ih * stride - pad + kh
                if 0 <= oh < Hout:
                    S[kh, b * Hout + oh, b * Hin + ih] = 1.0
    return G, S, Hout, Wout


def make_generator_params(key, nz=32, ngf=16, nc=3, batch=2):
    """DCGAN generator (scaled down): nz -> 4x4 -> 8x8 -> 16x16 -> 32x32.
    Weight init: convT ~ N(0, 0.02^2); BN gamma ~ N(1, 0.02), beta = 0.
    NOTE: the S (row-placement) matrices bake in the batch size."""
    chans = (nz, ngf * 4, ngf * 2, ngf, nc)
    strides = (1, 2, 2, 2)
    pads = (0, 1, 1, 1)
    keys = jax.random.split(key, 8)
    params = {}
    Hin = Win = 1
    for li in range(4):
        cin, cout = chans[li], chans[li + 1]
        w = np.asarray(0.02 * jax.random.normal(
            keys[2 * li], (cin, cout, 4, 4), jnp.float32))
        cp = cout if li < 3 else 4        # pad 3 -> 4 output channels (lane-dense out)
        G, S, Hout, Wout = _build_convT_mats(w, batch, Hin, Win,
                                             strides[li], pads[li], cp)
        params[f"G{li}"] = jnp.asarray(G, jnp.bfloat16)
        params[f"S{li}"] = jnp.asarray(S, jnp.float32)
        if li >= 1:                       # BN of this layer's *input* (fused prologue)
            gamma = 1.0 + 0.02 * np.asarray(jax.random.normal(
                keys[2 * li + 1], (cin,), jnp.float32))
            beta = np.zeros((cin,), np.float32)
            params[f"gamma{li}"] = jnp.asarray(np.tile(gamma, Win)[None, :])
            params[f"beta{li}"] = jnp.asarray(np.tile(beta, Win)[None, :])
            params[f"Kbn{li}"] = jnp.asarray(
                np.kron(np.ones((Win, Win), np.float32) / Win,
                        np.eye(cin, dtype=np.float32)))
        Hin, Win = Hout, Wout
    return params


# ---------------------------------------------------------------------------
# Wrapper: one pallas_call for the whole generator
# ---------------------------------------------------------------------------
def generator_pallas(z, p):
    B = z.shape[0]
    M = p["S3"].shape[1]          # B * H_out
    N = p["G3"].shape[2]          # W_out * C_pad
    H = M // B
    Wsp = H                       # square images
    Cp = N // Wsp
    out = pl.pallas_call(
        _generator_kernel,
        out_shape=jax.ShapeDtypeStruct((M, N), jnp.float32),
        in_specs=[_vmem()] * 18,
        out_specs=_vmem(),
        compiler_params=pltpu.CompilerParams(vmem_limit_bytes=32 * 1024 * 1024),
    )(z,
      p["G0"], p["S0"],
      p["G1"], p["S1"], p["Kbn1"], p["gamma1"], p["beta1"],
      p["G2"], p["S2"], p["Kbn2"], p["gamma2"], p["beta2"],
      p["G3"], p["S3"], p["Kbn3"], p["gamma3"], p["beta3"])
    # Pure layout relabel (NHWC slab -> NCHW) + drop of the zero pad channel;
    # one tiny fused XLA op on 32 KiB.
    fake = out.reshape(B, H, Wsp, Cp).transpose(0, 3, 1, 2)[:, :3]
    return fake


@jax.jit
def dcgan_forward(real_image, z_random, params):
    """DCGAN.forward(): fake = gen(z); display = cat(real, fake, dim=2)."""
    fake_image = generator_pallas(z_random, params)
    image_display = jnp.concatenate([real_image, fake_image], axis=2)
    return fake_image, image_display


# TODO(synk): training path (Adam updates, BCEWithLogitsLoss backward, LR
# schedulers, checkpoint save/resume) and the discriminator (not defined in
# the provided module) have no Pallas forward-kernel equivalent here.

if __name__ == "__main__":
    nz, B = 32, 2
    key = jax.random.PRNGKey(0)
    kp, kz, ki = jax.random.split(key, 3)

    params = make_generator_params(kp, nz=nz, ngf=16, nc=3, batch=B)
    real_image = jax.random.normal(ki, (B, 3, 32, 32), jnp.float32)   # NCHW
    z_random = jax.random.normal(kz, (B, nz), jnp.float32)            # randn(B, nz)

    fake_image, image_display = dcgan_forward(real_image, z_random, params)
    jax.block_until_ready((fake_image, image_display))

    assert fake_image.shape == (B, 3, 32, 32)
    assert image_display.shape == (B, 3, 64, 32)
    assert bool(jnp.all(jnp.isfinite(fake_image)))
    print("KERNEL_OK")
</pallas_src>

<mosaic_0001>
module attributes {stable_mosaic.version = 11 : i64} {
  func.func @_generator_kernel(%arg0: memref<2x32xf32, #tpu.memory_space<vmem>>, %arg1: memref<4x32x256xbf16, #tpu.memory_space<vmem>>, %arg2: memref<4x8x2xf32, #tpu.memory_space<vmem>>, %arg3: memref<4x256x256xbf16, #tpu.memory_space<vmem>>, %arg4: memref<4x16x8xf32, #tpu.memory_space<vmem>>, %arg5: memref<256x256xf32, #tpu.memory_space<vmem>>, %arg6: memref<1x256xf32, #tpu.memory_space<vmem>>, %arg7: memref<1x256xf32, #tpu.memory_space<vmem>>, %arg8: memref<4x256x256xbf16, #tpu.memory_space<vmem>>, %arg9: memref<4x32x16xf32, #tpu.memory_space<vmem>>, %arg10: memref<256x256xf32, #tpu.memory_space<vmem>>, %arg11: memref<1x256xf32, #tpu.memory_space<vmem>>, %arg12: memref<1x256xf32, #tpu.memory_space<vmem>>, %arg13: memref<4x256x128xbf16, #tpu.memory_space<vmem>>, %arg14: memref<4x64x32xf32, #tpu.memory_space<vmem>>, %arg15: memref<256x256xf32, #tpu.memory_space<vmem>>, %arg16: memref<1x256xf32, #tpu.memory_space<vmem>>, %arg17: memref<1x256xf32, #tpu.memory_space<vmem>>, %arg18: memref<64x128xf32, #tpu.memory_space<vmem>>) attributes {dimension_semantics = [], scalar_prefetch = 0 : i64, scratch_operands = 0 : i64, tpu.core_type = #tpu.core_type<tc>} {
    %c0 = arith.constant 0 : index
    %c0_0 = arith.constant 0 : index
    %0 = vector.load %arg0[%c0, %c0_0] : memref<2x32xf32, #tpu.memory_space<vmem>>, vector<2x32xf32>
    %1 = arith.truncf %0 : vector<2x32xf32> to vector<2x32xbf16>
    %c0_1 = arith.constant 0 : index
    %c0_2 = arith.constant 0 : index
    %c0_3 = arith.constant 0 : index
    %2 = vector.load %arg1[%c0_1, %c0_2, %c0_3] : memref<4x32x256xbf16, #tpu.memory_space<vmem>>, vector<1x32x256xbf16>
    %3 = vector.shape_cast %2 : vector<1x32x256xbf16> to vector<32x256xbf16>
    %cst = arith.constant dense<0.000000e+00> : vector<2x256xf32>
    %4 = tpu.matmul %1, %3, %cst {dimension_numbers = #tpu.dot_dimension_numbers<[1], [0], [0], [1], [0, 0, 1, 1], [], []>} : vector<2x32xbf16>, vector<32x256xbf16>, vector<2x256xf32> -> vector<2x256xf32>
    %c0_4 = arith.constant 0 : index
    %c0_5 = arith.constant 0 : index
    %c0_6 = arith.constant 0 : index
    %5 = vector.load %arg2[%c0_4, %c0_5, %c0_6] : memref<4x8x2xf32, #tpu.memory_space<vmem>>, vector<1x8x2xf32>
    %6 = vector.shape_cast %5 : vector<1x8x2xf32> to vector<8x2xf32>
    %cst_7 = arith.constant dense<0.000000e+00> : vector<8x256xf32>
    %7 = tpu.matmul %6, %4, %cst_7 {dimension_numbers = #tpu.dot_dimension_numbers<[1], [0], [0], [1], [0, 0, 1, 1], [], []>} : vector<8x2xf32>, vector<2x256xf32>, vector<8x256xf32> -> vector<8x256xf32>
    %8 = arith.truncf %0 : vector<2x32xf32> to vector<2x32xbf16>
    %c1 = arith.constant 1 : index
    %c0_8 = arith.constant 0 : index
    %c0_9 = arith.constant 0 : index
    %9 = vector.load %arg1[%c1, %c0_8, %c0_9] : memref<4x32x256xbf16, #tpu.memory_space<vmem>>, vector<1x32x256xbf16>
    %10 = vector.shape_cast %9 : vector<1x32x256xbf16> to vector<32x256xbf16>
    %cst_10 = arith.constant dense<0.000000e+00> : vector<2x256xf32>
    %11 = tpu.matmul %8, %10, %cst_10 {dimension_numbers = #tpu.dot_dimension_numbers<[1], [0], [0], [1], [0, 0, 1, 1], [], []>} : vector<2x32xbf16>, vector<32x256xbf16>, vector<2x256xf32> -> vector<2x256xf32>
    %c1_11 = arith.constant 1 : index
    %c0_12 = arith.constant 0 : index
    %c0_13 = arith.constant 0 : index
    %12 = vector.load %arg2[%c1_11, %c0_12, %c0_13] : memref<4x8x2xf32, #tpu.memory_space<vmem>>, vector<1x8x2xf32>
    %13 = vector.shape_cast %12 : vector<1x8x2xf32> to vector<8x2xf32>
    %cst_14 = arith.constant dense<0.000000e+00> : vector<8x256xf32>
    %14 = tpu.matmul %13, %11, %cst_14 {dimension_numbers = #tpu.dot_dimension_numbers<[1], [0], [0], [1], [0, 0, 1, 1], [], []>} : vector<8x2xf32>, vector<2x256xf32>, vector<8x256xf32> -> vector<8x256xf32>
    %15 = arith.addf %7, %14 : vector<8x256xf32>
    %16 = arith.truncf %0 : vector<2x32xf32> to vector<2x32xbf16>
    %c2 = arith.constant 2 : index
    %c0_15 = arith.constant 0 : index
    %c0_16 = arith.constant 0 : index
    %17 = vector.load %arg1[%c2, %c0_15, %c0_16] : memref<4x32x256xbf16, #tpu.memory_space<vmem>>, vector<1x32x256xbf16>
    %18 = vector.shape_cast %17 : vector<1x32x256xbf16> to vector<32x256xbf16>
    %cst_17 = arith.constant dense<0.000000e+00> : vector<2x256xf32>
    %19 = tpu.matmul %16, %18, %cst_17 {dimension_numbers = #tpu.dot_dimension_numbers<[1], [0], [0], [1], [0, 0, 1, 1], [], []>} : vector<2x32xbf16>, vector<32x256xbf16>, vector<2x256xf32> -> vector<2x256xf32>
    %c2_18 = arith.constant 2 : index
    %c0_19 = arith.constant 0 : index
    %c0_20 = arith.constant 0 : index
    %20 = vector.load %arg2[%c2_18, %c0_19, %c0_20] : memref<4x8x2xf32, #tpu.memory_space<vmem>>, vector<1x8x2xf32>
    %21 = vector.shape_cast %20 : vector<1x8x2xf32> to vector<8x2xf32>
    %cst_21 = arith.constant dense<0.000000e+00> : vector<8x256xf32>
    %22 = tpu.matmul %21, %19, %cst_21 {dimension_numbers = #tpu.dot_dimension_numbers<[1], [0], [0], [1], [0, 0, 1, 1], [], []>} : vector<8x2xf32>, vector<2x256xf32>, vector<8x256xf32> -> vector<8x256xf32>
    %23 = arith.addf %15, %22 : vector<8x256xf32>
    %24 = arith.truncf %0 : vector<2x32xf32> to vector<2x32xbf16>
    %c3 = arith.constant 3 : index
    %c0_22 = arith.constant 0 : index
    %c0_23 = arith.constant 0 : index
    %25 = vector.load %arg1[%c3, %c0_22, %c0_23] : memref<4x32x256xbf16, #tpu.memory_space<vmem>>, vector<1x32x256xbf16>
    %26 = vector.shape_cast %25 : vector<1x32x256xbf16> to vector<32x256xbf16>
    %cst_24 = arith.constant dense<0.000000e+00> : vector<2x256xf32>
    %27 = tpu.matmul %24, %26, %cst_24 {dimension_numbers = #tpu.dot_dimension_numbers<[1], [0], [0], [1], [0, 0, 1, 1], [], []>} : vector<2x32xbf16>, vector<32x256xbf16>, vector<2x256xf32> -> vector<2x256xf32>
    %c3_25 = arith.constant 3 : index
    %c0_26 = arith.constant 0 : index
    %c0_27 = arith.constant 0 : index
    %28 = vector.load %arg2[%c3_25, %c0_26, %c0_27] : memref<4x8x2xf32, #tpu.memory_space<vmem>>, vector<1x8x2xf32>
    %29 = vector.shape_cast %28 : vector<1x8x2xf32> to vector<8x2xf32>
    %cst_28 = arith.constant dense<0.000000e+00> : vector<8x256xf32>
    %30 = tpu.matmul %29, %27, %cst_28 {dimension_numbers = #tpu.dot_dimension_numbers<[1], [0], [0], [1], [0, 0, 1, 1], [], []>} : vector<8x2xf32>, vector<2x256xf32>, vector<8x256xf32> -> vector<8x256xf32>
    %31 = arith.addf %23, %30 : vector<8x256xf32>
    %cst_29 = arith.constant dense<0.000000e+00> : vector<256xf32>
    %32 = vector.multi_reduction <add>, %31, %cst_29 [0] : vector<8x256xf32> to vector<256xf32>
    %33 = vector.shape_cast %32 : vector<256xf32> to vector<1x256xf32>
    %cst_30 = arith.constant 8.000000e+00 : f32
    %34 = vector.broadcast %cst_30 : f32 to vector<1x256xf32>
    %35 = arith.divf %33, %34 : vector<1x256xf32>
    %c0_31 = arith.constant 0 : index
    %c0_32 = arith.constant 0 : index
    %36 = vector.load %arg5[%c0_31, %c0_32] : memref<256x256xf32, #tpu.memory_space<vmem>>, vector<256x256xf32>
    %cst_33 = arith.constant dense<0.000000e+00> : vector<1x256xf32>
    %37 = tpu.matmul %35, %36, %cst_33 {dimension_numbers = #tpu.dot_dimension_numbers<[1], [0], [0], [1], [0, 0, 1, 1], [], []>} : vector<1x256xf32>, vector<256x256xf32>, vector<1x256xf32> -> vector<1x256xf32>
    %38 = vector.broadcast %37 : vector<1x256xf32> to vector<8x256xf32>
    %39 = arith.subf %31, %38 : vector<8x256xf32>
    %40 = arith.mulf %39, %39 : vector<8x256xf32>
    %cst_34 = arith.constant dense<0.000000e+00> : vector<256xf32>
    %41 = vector.multi_reduction <add>, %40, %cst_34 [0] : vector<8x256xf32> to vector<256xf32>
    %42 = vector.shape_cast %41 : vector<256xf32> to vector<1x256xf32>
    %cst_35 = arith.constant 8.000000e+00 : f32
    %43 = vector.broadcast %cst_35 : f32 to vector<1x256xf32>
    %44 = arith.divf %42, %43 : vector<1x256xf32>
    %c0_36 = arith.constant 0 : index
    %c0_37 = arith.constant 0 : index
    %45 = vector.load %arg5[%c0_36, %c0_37] : memref<256x256xf32, #tpu.memory_space<vmem>>, vector<256x256xf32>
    %cst_38 = arith.constant dense<0.000000e+00> : vector<1x256xf32>
    %46 = tpu.matmul %44, %45, %cst_38 {dimension_numbers = #tpu.dot_dimension_numbers<[1], [0], [0], [1], [0, 0, 1, 1], [], []>} : vector<1x256xf32>, vector<256x256xf32>, vector<1x256xf32> -> vector<1x256xf32>
    %cst_39 = arith.constant 9.99999974E-6 : f32
    %47 = vector.broadcast %cst_39 : f32 to vector<1x256xf32>
    %48 = arith.addf %46, %47 : vector<1x256xf32>
    %49 = math.rsqrt %48 : vector<1x256xf32>
    %50 = vector.broadcast %49 : vector<1x256xf32> to vector<8x256xf32>
    %51 = arith.mulf %39, %50 : vector<8x256xf32>
    %c0_40 = arith.constant 0 : index
    %c0_41 = arith.constant 0 : index
    %52 = vector.load %arg6[%c0_40, %c0_41] : memref<1x256xf32, #tpu.memory_space<vmem>>, vector<1x256xf32>
    %53 = vector.broadcast %52 : vector<1x256xf32> to vector<8x256xf32>
    %54 = arith.mulf %51, %53 : vector<8x256xf32>
    %c0_42 = arith.constant 0 : index
    %c0_43 = arith.constant 0 : index
    %55 = vector.load %arg7[%c0_42, %c0_43] : memref<1x256xf32, #tpu.memory_space<vmem>>, vector<1x256xf32>
    %56 = vector.broadcast %55 : vector<1x256xf32> to vector<8x256xf32>
    %57 = arith.addf %54, %56 : vector<8x256xf32>
    %cst_44 = arith.constant 0.000000e+00 : f32
    %58 = vector.broadcast %cst_44 : f32 to vector<8x256xf32>
    %59 = arith.maximumf %57, %58 : vector<8x256xf32>
    %60 = arith.truncf %59 : vector<8x256xf32> to vector<8x256xbf16>
    %c0_45 = arith.constant 0 : index
    %c0_46 = arith.constant 0 : index
    %c0_47 = arith.constant 0 : index
    %61 = vector.load %arg3[%c0_45, %c0_46, %c0_47] : memref<4x256x256xbf16, #tpu.memory_space<vmem>>, vector<1x256x256xbf16>
    %62 = vector.shape_cast %61 : vector<1x256x256xbf16> to vector<256x256xbf16>
    %cst_48 = arith.constant dense<0.000000e+00> : vector<8x256xf32>
    %63 = tpu.matmul %60, %62, %cst_48 {dimension_numbers = #tpu.dot_dimension_numbers<[1], [0], [0], [1], [0, 0, 1, 1], [], []>} : vector<8x256xbf16>, vector<256x256xbf16>, vector<8x256xf32> -> vector<8x256xf32>
    %c0_49 = arith.constant 0 : index
    %c0_50 = arith.constant 0 : index
    %c0_51 = arith.constant 0 : index
    %64 = vector.load %arg4[%c0_49, %c0_50, %c0_51] : memref<4x16x8xf32, #tpu.memory_space<vmem>>, vector<1x16x8xf32>
    %65 = vector.shape_cast %64 : vector<1x16x8xf32> to vector<16x8xf32>
    %cst_52 = arith.constant dense<0.000000e+00> : vector<16x256xf32>
    %66 = tpu.matmul %65, %63, %cst_52 {dimension_numbers = #tpu.dot_dimension_numbers<[1], [0], [0], [1], [0, 0, 1, 1], [], []>} : vector<16x8xf32>, vector<8x256xf32>, vector<16x256xf32> -> vector<16x256xf32>
    %67 = arith.truncf %59 : vector<8x256xf32> to vector<8x256xbf16>
    %c1_53 = arith.constant 1 : index
    %c0_54 = arith.constant 0 : index
    %c0_55 = arith.constant 0 : index
    %68 = vector.load %arg3[%c1_53, %c0_54, %c0_55] : memref<4x256x256xbf16, #tpu.memory_space<vmem>>, vector<1x256x256xbf16>
    %69 = vector.shape_cast %68 : vector<1x256x256xbf16> to vector<256x256xbf16>
    %cst_56 = arith.constant dense<0.000000e+00> : vector<8x256xf32>
    %70 = tpu.matmul %67, %69, %cst_56 {dimension_numbers = #tpu.dot_dimension_numbers<[1], [0], [0], [1], [0, 0, 1, 1], [], []>} : vector<8x256xbf16>, vector<256x256xbf16>, vector<8x256xf32> -> vector<8x256xf32>
    %c1_57 = arith.constant 1 : index
    %c0_58 = arith.constant 0 : index
    %c0_59 = arith.constant 0 : index
    %71 = vector.load %arg4[%c1_57, %c0_58, %c0_59] : memref<4x16x8xf32, #tpu.memory_space<vmem>>, vector<1x16x8xf32>
    %72 = vector.shape_cast %71 : vector<1x16x8xf32> to vector<16x8xf32>
    %cst_60 = arith.constant dense<0.000000e+00> : vector<16x256xf32>
    %73 = tpu.matmul %72, %70, %cst_60 {dimension_numbers = #tpu.dot_dimension_numbers<[1], [0], [0], [1], [0, 0, 1, 1], [], []>} : vector<16x8xf32>, vector<8x256xf32>, vector<16x256xf32> -> vector<16x256xf32>
    %74 = arith.addf %66, %73 : vector<16x256xf32>
    %75 = arith.truncf %59 : vector<8x256xf32> to vector<8x256xbf16>
    %c2_61 = arith.constant 2 : index
    %c0_62 = arith.constant 0 : index
    %c0_63 = arith.constant 0 : index
    %76 = vector.load %arg3[%c2_61, %c0_62, %c0_63] : memref<4x256x256xbf16, #tpu.memory_space<vmem>>, vector<1x256x256xbf16>
    %77 = vector.shape_cast %76 : vector<1x256x256xbf16> to vector<256x256xbf16>
    %cst_64 = arith.constant dense<0.000000e+00> : vector<8x256xf32>
    %78 = tpu.matmul %75, %77, %cst_64 {dimension_numbers = #tpu.dot_dimension_numbers<[1], [0], [0], [1], [0, 0, 1, 1], [], []>} : vector<8x256xbf16>, vector<256x256xbf16>, vector<8x256xf32> -> vector<8x256xf32>
    %c2_65 = arith.constant 2 : index
    %c0_66 = arith.constant 0 : index
    %c0_67 = arith.constant 0 : index
    %79 = vector.load %arg4[%c2_65, %c0_66, %c0_67] : memref<4x16x8xf32, #tpu.memory_space<vmem>>, vector<1x16x8xf32>
    %80 = vector.shape_cast %79 : vector<1x16x8xf32> to vector<16x8xf32>
    %cst_68 = arith.constant dense<0.000000e+00> : vector<16x256xf32>
    %81 = tpu.matmul %80, %78, %cst_68 {dimension_numbers = #tpu.dot_dimension_numbers<[1], [0], [0], [1], [0, 0, 1, 1], [], []>} : vector<16x8xf32>, vector<8x256xf32>, vector<16x256xf32> -> vector<16x256xf32>
    %82 = arith.addf %74, %81 : vector<16x256xf32>
    %83 = arith.truncf %59 : vector<8x256xf32> to vector<8x256xbf16>
    %c3_69 = arith.constant 3 : index
    %c0_70 = arith.constant 0 : index
    %c0_71 = arith.constant 0 : index
    %84 = vector.load %arg3[%c3_69, %c0_70, %c0_71] : memref<4x256x256xbf16, #tpu.memory_space<vmem>>, vector<1x256x256xbf16>
    %85 = vector.shape_cast %84 : vector<1x256x256xbf16> to vector<256x256xbf16>
    %cst_72 = arith.constant dense<0.000000e+00> : vector<8x256xf32>
    %86 = tpu.matmul %83, %85, %cst_72 {dimension_numbers = #tpu.dot_dimension_numbers<[1], [0], [0], [1], [0, 0, 1, 1], [], []>} : vector<8x256xbf16>, vector<256x256xbf16>, vector<8x256xf32> -> vector<8x256xf32>
    %c3_73 = arith.constant 3 : index
    %c0_74 = arith.constant 0 : index
    %c0_75 = arith.constant 0 : index
    %87 = vector.load %arg4[%c3_73, %c0_74, %c0_75] : memref<4x16x8xf32, #tpu.memory_space<vmem>>, vector<1x16x8xf32>
    %88 = vector.shape_cast %87 : vector<1x16x8xf32> to vector<16x8xf32>
    %cst_76 = arith.constant dense<0.000000e+00> : vector<16x256xf32>
    %89 = tpu.matmul %88, %86, %cst_76 {dimension_numbers = #tpu.dot_dimension_numbers<[1], [0], [0], [1], [0, 0, 1, 1], [], []>} : vector<16x8xf32>, vector<8x256xf32>, vector<16x256xf32> -> vector<16x256xf32>
    %90 = arith.addf %82, %89 : vector<16x256xf32>
    %cst_77 = arith.constant dense<0.000000e+00> : vector<256xf32>
    %91 = vector.multi_reduction <add>, %90, %cst_77 [0] : vector<16x256xf32> to vector<256xf32>
    %92 = vector.shape_cast %91 : vector<256xf32> to vector<1x256xf32>
    %cst_78 = arith.constant 1.600000e+01 : f32
    %93 = vector.broadcast %cst_78 : f32 to vector<1x256xf32>
    %94 = arith.divf %92, %93 : vector<1x256xf32>
    %c0_79 = arith.constant 0 : index
    %c0_80 = arith.constant 0 : index
    %95 = vector.load %arg10[%c0_79, %c0_80] : memref<256x256xf32, #tpu.memory_space<vmem>>, vector<256x256xf32>
    %cst_81 = arith.constant dense<0.000000e+00> : vector<1x256xf32>
    %96 = tpu.matmul %94, %95, %cst_81 {dimension_numbers = #tpu.dot_dimension_numbers<[1], [0], [0], [1], [0, 0, 1, 1], [], []>} : vector<1x256xf32>, vector<256x256xf32>, vector<1x256xf32> -> vector<1x256xf32>
    %97 = vector.broadcast %96 : vector<1x256xf32> to vector<16x256xf32>
    %98 = arith.subf %90, %97 : vector<16x256xf32>
    %99 = arith.mulf %98, %98 : vector<16x256xf32>
    %cst_82 = arith.constant dense<0.000000e+00> : vector<256xf32>
    %100 = vector.multi_reduction <add>, %99, %cst_82 [0] : vector<16x256xf32> to vector<256xf32>
    %101 = vector.shape_cast %100 : vector<256xf32> to vector<1x256xf32>
    %cst_83 = arith.constant 1.600000e+01 : f32
    %102 = vector.broadcast %cst_83 : f32 to vector<1x256xf32>
    %103 = arith.divf %101, %102 : vector<1x256xf32>
    %c0_84 = arith.constant 0 : index
    %c0_85 = arith.constant 0 : index
    %104 = vector.load %arg10[%c0_84, %c0_85] : memref<256x256xf32, #tpu.memory_space<vmem>>, vector<256x256xf32>
    %cst_86 = arith.constant dense<0.000000e+00> : vector<1x256xf32>
    %105 = tpu.matmul %103, %104, %cst_86 {dimension_numbers = #tpu.dot_dimension_numbers<[1], [0], [0], [1], [0, 0, 1, 1], [], []>} : vector<1x256xf32>, vector<256x256xf32>, vector<1x256xf32> -> vector<1x256xf32>
    %cst_87 = arith.constant 9.99999974E-6 : f32
    %106 = vector.broadcast %cst_87 : f32 to vector<1x256xf32>
    %107 = arith.addf %105, %106 : vector<1x256xf32>
    %108 = math.rsqrt %107 : vector<1x256xf32>
    %109 = vector.broadcast %108 : vector<1x256xf32> to vector<16x256xf32>
    %110 = arith.mulf %98, %109 : vector<16x256xf32>
    %c0_88 = arith.constant 0 : index
    %c0_89 = arith.constant 0 : index
    %111 = vector.load %arg11[%c0_88, %c0_89] : memref<1x256xf32, #tpu.memory_space<vmem>>, vector<1x256xf32>
    %112 = vector.broadcast %111 : vector<1x256xf32> to vector<16x256xf32>
    %113 = arith.mulf %110, %112 : vector<16x256xf32>
    %c0_90 = arith.constant 0 : index
    %c0_91 = arith.constant 0 : index
    %114 = vector.load %arg12[%c0_90, %c0_91] : memref<1x256xf32, #tpu.memory_space<vmem>>, vector<1x256xf32>
    %115 = vector.broadcast %114 : vector<1x256xf32> to vector<16x256xf32>
    %116 = arith.addf %113, %115 : vector<16x256xf32>
    %cst_92 = arith.constant 0.000000e+00 : f32
    %117 = vector.broadcast %cst_92 : f32 to vector<16x256xf32>
    %118 = arith.maximumf %116, %117 : vector<16x256xf32>
    %119 = arith.truncf %118 : vector<16x256xf32> to vector<16x256xbf16>
    %c0_93 = arith.constant 0 : index
    %c0_94 = arith.constant 0 : index
    %c0_95 = arith.constant 0 : index
    %120 = vector.load %arg8[%c0_93, %c0_94, %c0_95] : memref<4x256x256xbf16, #tpu.memory_space<vmem>>, vector<1x256x256xbf16>
    %121 = vector.shape_cast %120 : vector<1x256x256xbf16> to vector<256x256xbf16>
    %cst_96 = arith.constant dense<0.000000e+00> : vector<16x256xf32>
    %122 = tpu.matmul %119, %121, %cst_96 {dimension_numbers = #tpu.dot_dimension_numbers<[1], [0], [0], [1], [0, 0, 1, 1], [], []>} : vector<16x256xbf16>, vector<256x256xbf16>, vector<16x256xf32> -> vector<16x256xf32>
    %c0_97 = arith.constant 0 : index
    %c0_98 = arith.constant 0 : index
    %c0_99 = arith.constant 0 : index
    %123 = vector.load %arg9[%c0_97, %c0_98, %c0_99] : memref<4x32x16xf32, #tpu.memory_space<vmem>>, vector<1x32x16xf32>
    %124 = vector.shape_cast %123 : vector<1x32x16xf32> to vector<32x16xf32>
    %cst_100 = arith.constant dense<0.000000e+00> : vector<32x256xf32>
    %125 = tpu.matmul %124, %122, %cst_100 {dimension_numbers = #tpu.dot_dimension_numbers<[1], [0], [0], [1], [0, 0, 1, 1], [], []>} : vector<32x16xf32>, vector<16x256xf32>, vector<32x256xf32> -> vector<32x256xf32>
    %126 = arith.truncf %118 : vector<16x256xf32> to vector<16x256xbf16>
    %c1_101 = arith.constant 1 : index
    %c0_102 = arith.constant 0 : index
    %c0_103 = arith.constant 0 : index
    %127 = vector.load %arg8[%c1_101, %c0_102, %c0_103] : memref<4x256x256xbf16, #tpu.memory_space<vmem>>, vector<1x256x256xbf16>
    %128 = vector.shape_cast %127 : vector<1x256x256xbf16> to vector<256x256xbf16>
    %cst_104 = arith.constant dense<0.000000e+00> : vector<16x256xf32>
    %129 = tpu.matmul %126, %128, %cst_104 {dimension_numbers = #tpu.dot_dimension_numbers<[1], [0], [0], [1], [0, 0, 1, 1], [], []>} : vector<16x256xbf16>, vector<256x256xbf16>, vector<16x256xf32> -> vector<16x256xf32>
    %c1_105 = arith.constant 1 : index
    %c0_106 = arith.constant 0 : index
    %c0_107 = arith.constant 0 : index
    %130 = vector.load %arg9[%c1_105, %c0_106, %c0_107] : memref<4x32x16xf32, #tpu.memory_space<vmem>>, vector<1x32x16xf32>
    %131 = vector.shape_cast %130 : vector<1x32x16xf32> to vector<32x16xf32>
    %cst_108 = arith.constant dense<0.000000e+00> : vector<32x256xf32>
    %132 = tpu.matmul %131, %129, %cst_108 {dimension_numbers = #tpu.dot_dimension_numbers<[1], [0], [0], [1], [0, 0, 1, 1], [], []>} : vector<32x16xf32>, vector<16x256xf32>, vector<32x256xf32> -> vector<32x256xf32>
    %133 = arith.addf %125, %132 : vector<32x256xf32>
    %134 = arith.truncf %118 : vector<16x256xf32> to vector<16x256xbf16>
    %c2_109 = arith.constant 2 : index
    %c0_110 = arith.constant 0 : index
    %c0_111 = arith.constant 0 : index
    %135 = vector.load %arg8[%c2_109, %c0_110, %c0_111] : memref<4x256x256xbf16, #tpu.memory_space<vmem>>, vector<1x256x256xbf16>
    %136 = vector.shape_cast %135 : vector<1x256x256xbf16> to vector<256x256xbf16>
    %cst_112 = arith.constant dense<0.000000e+00> : vector<16x256xf32>
    %137 = tpu.matmul %134, %136, %cst_112 {dimension_numbers = #tpu.dot_dimension_numbers<[1], [0], [0], [1], [0, 0, 1, 1], [], []>} : vector<16x256xbf16>, vector<256x256xbf16>, vector<16x256xf32> -> vector<16x256xf32>
    %c2_113 = arith.constant 2 : index
    %c0_114 = arith.constant 0 : index
    %c0_115 = arith.constant 0 : index
    %138 = vector.load %arg9[%c2_113, %c0_114, %c0_115] : memref<4x32x16xf32, #tpu.memory_space<vmem>>, vector<1x32x16xf32>
    %139 = vector.shape_cast %138 : vector<1x32x16xf32> to vector<32x16xf32>
    %cst_116 = arith.constant dense<0.000000e+00> : vector<32x256xf32>
    %140 = tpu.matmul %139, %137, %cst_116 {dimension_numbers = #tpu.dot_dimension_numbers<[1], [0], [0], [1], [0, 0, 1, 1], [], []>} : vector<32x16xf32>, vector<16x256xf32>, vector<32x256xf32> -> vector<32x256xf32>
    %141 = arith.addf %133, %140 : vector<32x256xf32>
    %142 = arith.truncf %118 : vector<16x256xf32> to vector<16x256xbf16>
    %c3_117 = arith.constant 3 : index
    %c0_118 = arith.constant 0 : index
    %c0_119 = arith.constant 0 : index
    %143 = vector.load %arg8[%c3_117, %c0_118, %c0_119] : memref<4x256x256xbf16, #tpu.memory_space<vmem>>, vector<1x256x256xbf16>
    %144 = vector.shape_cast %143 : vector<1x256x256xbf16> to vector<256x256xbf16>
    %cst_120 = arith.constant dense<0.000000e+00> : vector<16x256xf32>
    %145 = tpu.matmul %142, %144, %cst_120 {dimension_numbers = #tpu.dot_dimension_numbers<[1], [0], [0], [1], [0, 0, 1, 1], [], []>} : vector<16x256xbf16>, vector<256x256xbf16>, vector<16x256xf32> -> vector<16x256xf32>
    %c3_121 = arith.constant 3 : index
    %c0_122 = arith.constant 0 : index
    %c0_123 = arith.constant 0 : index
    %146 = vector.load %arg9[%c3_121, %c0_122, %c0_123] : memref<4x32x16xf32, #tpu.memory_space<vmem>>, vector<1x32x16xf32>
    %147 = vector.shape_cast %146 : vector<1x32x16xf32> to vector<32x16xf32>
    %cst_124 = arith.constant dense<0.000000e+00> : vector<32x256xf32>
    %148 = tpu.matmul %147, %145, %cst_124 {dimension_numbers = #tpu.dot_dimension_numbers<[1], [0], [0], [1], [0, 0, 1, 1], [], []>} : vector<32x16xf32>, vector<16x256xf32>, vector<32x256xf32> -> vector<32x256xf32>
    %149 = arith.addf %141, %148 : vector<32x256xf32>
    %cst_125 = arith.constant dense<0.000000e+00> : vector<256xf32>
    %150 = vector.multi_reduction <add>, %149, %cst_125 [0] : vector<32x256xf32> to vector<256xf32>
    %151 = vector.shape_cast %150 : vector<256xf32> to vector<1x256xf32>
    %cst_126 = arith.constant 3.200000e+01 : f32
    %152 = vector.broadcast %cst_126 : f32 to vector<1x256xf32>
    %153 = arith.divf %151, %152 : vector<1x256xf32>
    %c0_127 = arith.constant 0 : index
    %c0_128 = arith.constant 0 : index
    %154 = vector.load %arg15[%c0_127, %c0_128] : memref<256x256xf32, #tpu.memory_space<vmem>>, vector<256x256xf32>
    %cst_129 = arith.constant dense<0.000000e+00> : vector<1x256xf32>
    %155 = tpu.matmul %153, %154, %cst_129 {dimension_numbers = #tpu.dot_dimension_numbers<[1], [0], [0], [1], [0, 0, 1, 1], [], []>} : vector<1x256xf32>, vector<256x256xf32>, vector<1x256xf32> -> vector<1x256xf32>
    %156 = vector.broadcast %155 : vector<1x256xf32> to vector<32x256xf32>
    %157 = arith.subf %149, %156 : vector<32x256xf32>
    %158 = arith.mulf %157, %157 : vector<32x256xf32>
    %cst_130 = arith.constant dense<0.000000e+00> : vector<256xf32>
    %159 = vector.multi_reduction <add>, %158, %cst_130 [0] : vector<32x256xf32> to vector<256xf32>
    %160 = vector.shape_cast %159 : vector<256xf32> to vector<1x256xf32>
    %cst_131 = arith.constant 3.200000e+01 : f32
    %161 = vector.broadcast %cst_131 : f32 to vector<1x256xf32>
    %162 = arith.divf %160, %161 : vector<1x256xf32>
    %c0_132 = arith.constant 0 : index
    %c0_133 = arith.constant 0 : index
    %163 = vector.load %arg15[%c0_132, %c0_133] : memref<256x256xf32, #tpu.memory_space<vmem>>, vector<256x256xf32>
    %cst_134 = arith.constant dense<0.000000e+00> : vector<1x256xf32>
    %164 = tpu.matmul %162, %163, %cst_134 {dimension_numbers = #tpu.dot_dimension_numbers<[1], [0], [0], [1], [0, 0, 1, 1], [], []>} : vector<1x256xf32>, vector<256x256xf32>, vector<1x256xf32> -> vector<1x256xf32>
    %cst_135 = arith.constant 9.99999974E-6 : f32
    %165 = vector.broadcast %cst_135 : f32 to vector<1x256xf32>
    %166 = arith.addf %164, %165 : vector<1x256xf32>
    %167 = math.rsqrt %166 : vector<1x256xf32>
    %168 = vector.broadcast %167 : vector<1x256xf32> to vector<32x256xf32>
    %169 = arith.mulf %157, %168 : vector<32x256xf32>
    %c0_136 = arith.constant 0 : index
    %c0_137 = arith.constant 0 : index
    %170 = vector.load %arg16[%c0_136, %c0_137] : memref<1x256xf32, #tpu.memory_space<vmem>>, vector<1x256xf32>
    %171 = vector.broadcast %170 : vector<1x256xf32> to vector<32x256xf32>
    %172 = arith.mulf %169, %171 : vector<32x256xf32>
    %c0_138 = arith.constant 0 : index
    %c0_139 = arith.constant 0 : index
    %173 = vector.load %arg17[%c0_138, %c0_139] : memref<1x256xf32, #tpu.memory_space<vmem>>, vector<1x256xf32>
    %174 = vector.broadcast %173 : vector<1x256xf32> to vector<32x256xf32>
    %175 = arith.addf %172, %174 : vector<32x256xf32>
    %cst_140 = arith.constant 0.000000e+00 : f32
    %176 = vector.broadcast %cst_140 : f32 to vector<32x256xf32>
    %177 = arith.maximumf %175, %176 : vector<32x256xf32>
    %178 = arith.truncf %177 : vector<32x256xf32> to vector<32x256xbf16>
    %c0_141 = arith.constant 0 : index
    %c0_142 = arith.constant 0 : index
    %c0_143 = arith.constant 0 : index
    %179 = vector.load %arg13[%c0_141, %c0_142, %c0_143] : memref<4x256x128xbf16, #tpu.memory_space<vmem>>, vector<1x256x128xbf16>
    %180 = vector.shape_cast %179 : vector<1x256x128xbf16> to vector<256x128xbf16>
    %cst_144 = arith.constant dense<0.000000e+00> : vector<32x128xf32>
    %181 = tpu.matmul %178, %180, %cst_144 {dimension_numbers = #tpu.dot_dimension_numbers<[1], [0], [0], [1], [0, 0, 1, 1], [], []>} : vector<32x256xbf16>, vector<256x128xbf16>, vector<32x128xf32> -> vector<32x128xf32>
    %c0_145 = arith.constant 0 : index
    %c0_146 = arith.constant 0 : index
    %c0_147 = arith.constant 0 : index
    %182 = vector.load %arg14[%c0_145, %c0_146, %c0_147] : memref<4x64x32xf32, #tpu.memory_space<vmem>>, vector<1x64x32xf32>
    %183 = vector.shape_cast %182 : vector<1x64x32xf32> to vector<64x32xf32>
    %cst_148 = arith.constant dense<0.000000e+00> : vector<64x128xf32>
    %184 = tpu.matmul %183, %181, %cst_148 {dimension_numbers = #tpu.dot_dimension_numbers<[1], [0], [0], [1], [0, 0, 1, 1], [], []>} : vector<64x32xf32>, vector<32x128xf32>, vector<64x128xf32> -> vector<64x128xf32>
    %185 = arith.truncf %177 : vector<32x256xf32> to vector<32x256xbf16>
    %c1_149 = arith.constant 1 : index
    %c0_150 = arith.constant 0 : index
    %c0_151 = arith.constant 0 : index
    %186 = vector.load %arg13[%c1_149, %c0_150, %c0_151] : memref<4x256x128xbf16, #tpu.memory_space<vmem>>, vector<1x256x128xbf16>
    %187 = vector.shape_cast %186 : vector<1x256x128xbf16> to vector<256x128xbf16>
    %cst_152 = arith.constant dense<0.000000e+00> : vector<32x128xf32>
    %188 = tpu.matmul %185, %187, %cst_152 {dimension_numbers = #tpu.dot_dimension_numbers<[1], [0], [0], [1], [0, 0, 1, 1], [], []>} : vector<32x256xbf16>, vector<256x128xbf16>, vector<32x128xf32> -> vector<32x128xf32>
    %c1_153 = arith.constant 1 : index
    %c0_154 = arith.constant 0 : index
    %c0_155 = arith.constant 0 : index
    %189 = vector.load %arg14[%c1_153, %c0_154, %c0_155] : memref<4x64x32xf32, #tpu.memory_space<vmem>>, vector<1x64x32xf32>
    %190 = vector.shape_cast %189 : vector<1x64x32xf32> to vector<64x32xf32>
    %cst_156 = arith.constant dense<0.000000e+00> : vector<64x128xf32>
    %191 = tpu.matmul %190, %188, %cst_156 {dimension_numbers = #tpu.dot_dimension_numbers<[1], [0], [0], [1], [0, 0, 1, 1], [], []>} : vector<64x32xf32>, vector<32x128xf32>, vector<64x128xf32> -> vector<64x128xf32>
    %192 = arith.addf %184, %191 : vector<64x128xf32>
    %193 = arith.truncf %177 : vector<32x256xf32> to vector<32x256xbf16>
    %c2_157 = arith.constant 2 : index
    %c0_158 = arith.constant 0 : index
    %c0_159 = arith.constant 0 : index
    %194 = vector.load %arg13[%c2_157, %c0_158, %c0_159] : memref<4x256x128xbf16, #tpu.memory_space<vmem>>, vector<1x256x128xbf16>
    %195 = vector.shape_cast %194 : vector<1x256x128xbf16> to vector<256x128xbf16>
    %cst_160 = arith.constant dense<0.000000e+00> : vector<32x128xf32>
    %196 = tpu.matmul %193, %195, %cst_160 {dimension_numbers = #tpu.dot_dimension_numbers<[1], [0], [0], [1], [0, 0, 1, 1], [], []>} : vector<32x256xbf16>, vector<256x128xbf16>, vector<32x128xf32> -> vector<32x128xf32>
    %c2_161 = arith.constant 2 : index
    %c0_162 = arith.constant 0 : index
    %c0_163 = arith.constant 0 : index
    %197 = vector.load %arg14[%c2_161, %c0_162, %c0_163] : memref<4x64x32xf32, #tpu.memory_space<vmem>>, vector<1x64x32xf32>
    %198 = vector.shape_cast %197 : vector<1x64x32xf32> to vector<64x32xf32>
    %cst_164 = arith.constant dense<0.000000e+00> : vector<64x128xf32>
    %199 = tpu.matmul %198, %196, %cst_164 {dimension_numbers = #tpu.dot_dimension_numbers<[1], [0], [0], [1], [0, 0, 1, 1], [], []>} : vector<64x32xf32>, vector<32x128xf32>, vector<64x128xf32> -> vector<64x128xf32>
    %200 = arith.addf %192, %199 : vector<64x128xf32>
    %201 = arith.truncf %177 : vector<32x256xf32> to vector<32x256xbf16>
    %c3_165 = arith.constant 3 : index
    %c0_166 = arith.constant 0 : index
    %c0_167 = arith.constant 0 : index
    %202 = vector.load %arg13[%c3_165, %c0_166, %c0_167] : memref<4x256x128xbf16, #tpu.memory_space<vmem>>, vector<1x256x128xbf16>
    %203 = vector.shape_cast %202 : vector<1x256x128xbf16> to vector<256x128xbf16>
    %cst_168 = arith.constant dense<0.000000e+00> : vector<32x128xf32>
    %204 = tpu.matmul %201, %203, %cst_168 {dimension_numbers = #tpu.dot_dimension_numbers<[1], [0], [0], [1], [0, 0, 1, 1], [], []>} : vector<32x256xbf16>, vector<256x128xbf16>, vector<32x128xf32> -> vector<32x128xf32>
    %c3_169 = arith.constant 3 : index
    %c0_170 = arith.constant 0 : index
    %c0_171 = arith.constant 0 : index
    %205 = vector.load %arg14[%c3_169, %c0_170, %c0_171] : memref<4x64x32xf32, #tpu.memory_space<vmem>>, vector<1x64x32xf32>
    %206 = vector.shape_cast %205 : vector<1x64x32xf32> to vector<64x32xf32>
    %cst_172 = arith.constant dense<0.000000e+00> : vector<64x128xf32>
    %207 = tpu.matmul %206, %204, %cst_172 {dimension_numbers = #tpu.dot_dimension_numbers<[1], [0], [0], [1], [0, 0, 1, 1], [], []>} : vector<64x32xf32>, vector<32x128xf32>, vector<64x128xf32> -> vector<64x128xf32>
    %208 = arith.addf %200, %207 : vector<64x128xf32>
    %209 = math.tanh %208 : vector<64x128xf32>
    %c0_173 = arith.constant 0 : index
    %c0_174 = arith.constant 0 : index
    %210 = vector.load %arg18[%c0_173, %c0_174] : memref<64x128xf32, #tpu.memory_space<vmem>>, vector<64x128xf32>
    tpu.vector_store %arg18[%c0_173, %c0_174], %209 {strides = array<i32>} : memref<64x128xf32, #tpu.memory_space<vmem>>, vector<64x128xf32>,
    return
  }
}

</mosaic_0001>

<llo_original>
// kernel: dcgan_forward.1
$region0: #{dcgan_forward.1}
  #allocation0 [shape = 'u32[]', space=smem, size = 0x4, offset = 0x4, fixed_abs, tag = 'smem constant byte address 0x4 - core index']
  #allocation1 [shape = 'u32[144,128]{1,0:T(1,128)}', space=vmem, size = 0x12000, scoped, tag = 'internal scratch']
  %s0 = inlined_call_operand.vmem [shape: f32[2,32], index: 0, kind: input, shape index: {}]
  %s1 = inlined_call_operand.vmem [shape: bf16[4,32,256], index: 1, kind: input, shape index: {}]
  %s2 = inlined_call_operand.vmem [shape: f32[4,8,2], index: 2, kind: input, shape index: {}]
  %s3 = inlined_call_operand.hbm [shape: bf16[4,256,256], index: 3, kind: input, shape index: {}]
  %s4 = inlined_call_operand.vmem [shape: f32[4,16,8], index: 4, kind: input, shape index: {}]
  %s5 = inlined_call_operand.vmem [shape: f32[256,256], index: 5, kind: input, shape index: {}]
  %s6 = inlined_call_operand.vmem [shape: f32[1,256], index: 6, kind: input, shape index: {}]
  %s7 = inlined_call_operand.hbm [shape: f32[1,256], index: 7, kind: input, shape index: {}]
  %s8 = inlined_call_operand.hbm [shape: bf16[4,256,256], index: 8, kind: input, shape index: {}]
  %s9 = inlined_call_operand.vmem [shape: f32[4,32,16], index: 9, kind: input, shape index: {}]
  %s10 = inlined_call_operand.hbm [shape: f32[256,256], index: 10, kind: input, shape index: {}]
  %s11 = inlined_call_operand.hbm [shape: f32[1,256], index: 11, kind: input, shape index: {}]
  %s12 = inlined_call_operand.hbm [shape: f32[1,256], index: 12, kind: input, shape index: {}]
  %s13 = inlined_call_operand.hbm [shape: bf16[4,256,128], index: 13, kind: input, shape index: {}]
  %s14 = inlined_call_operand.vmem [shape: f32[4,64,32], index: 14, kind: input, shape index: {}]
  %s15 = inlined_call_operand.hbm [shape: f32[256,256], index: 15, kind: input, shape index: {}]
  %s16 = inlined_call_operand.hbm [shape: f32[1,256], index: 16, kind: input, shape index: {}]
  %s17 = inlined_call_operand.hbm [shape: f32[1,256], index: 17, kind: input, shape index: {}]
  %s18 = inlined_call_operand.vmem [shape: f32[64,128], index: 18, kind: output, shape index: {}]
  %s19 = sld [smem:[#allocation0]]
  $region122: #{dcgan_forward.1} parent=0
    _
  %s21 = ssub.s32 1, %s19
  %s22 = scalar_select 0, %s21, %s19
  $region1: #{dcgan_forward.1} parent=0
    #allocation2 [shape = 'u8[524288]{0}', space=vmem, size = 0x80000, scoped, tag = 'input window, operand 3, single buffered']
    #allocation3 [shape = 's32[1]{0}', space=sflag, size = 0x4, scoped, tag = 'scoped memory for dcgan_forward.1']
    #allocation4 [shape = 'u8[1024]{0}', space=vmem, size = 0x400, scoped, tag = 'input window, operand 7, single buffered']
    #allocation5 [shape = 's32[1]{0}', space=sflag, size = 0x4, scoped, tag = 'scoped memory for dcgan_forward.1']
    #allocation6 [shape = 'u8[524288]{0}', space=vmem, size = 0x80000, scoped, tag = 'input window, operand 8, single buffered']
    #allocation7 [shape = 'u8[262144]{0}', space=vmem, size = 0x40000, scoped, tag = 'input window, operand 10, single buffered']
    #allocation8 [shape = 's32[1]{0}', space=sflag, size = 0x4, scoped, tag = 'scoped memory for dcgan_forward.1']
    #allocation9 [shape = 'u8[1024]{0}', space=vmem, size = 0x400, scoped, tag = 'input window, operand 11, single buffered']
    #allocation10 [shape = 'u8[1024]{0}', space=vmem, size = 0x400, scoped, tag = 'input window, operand 12, single buffered']
    #allocation11 [shape = 's32[1]{0}', space=sflag, size = 0x4, scoped, tag = 'scoped memory for dcgan_forward.1']
    #allocation12 [shape = 'u8[262144]{0}', space=vmem, size = 0x40000, scoped, tag = 'input window, operand 13, single buffered']
    #allocation13 [shape = 'u8[262144]{0}', space=vmem, size = 0x40000, scoped, tag = 'input window, operand 15, single buffered']
    #allocation14 [shape = 's32[1]{0}', space=sflag, size = 0x4, scoped, tag = 'scoped memory for dcgan_forward.1']
    #allocation15 [shape = 'u8[1024]{0}', space=vmem, size = 0x400, scoped, tag = 'input window, operand 16, single buffered']
    #allocation16 [shape = 'u8[1024]{0}', space=vmem, size = 0x400, scoped, tag = 'input window, operand 17, single buffered']
    #allocation17 [shape = 's32[1]{0}', space=sflag, size = 0x4, scoped, tag = 'scoped memory for dcgan_forward.1']
    %23 = vsyncpa [#allocation3], 0
    %24 = vsyncpa [#allocation5], 0
    %25 = vsyncpa [#allocation8], 0
    %26 = vsyncpa [#allocation11], 0
    %27 = vsyncpa [#allocation14], 0
    %28 = vsyncpa [#allocation17], 0
    // Predicated region
    $region2: #{dcgan_forward.1} parent=1 // pred_check
      _
    $region3: #{dcgan_forward.1} parent=1 // pred_check_branch
      %30 = sbr.rel (0) target = $region5
    $region4: #{dcgan_forward.1} parent=1 // pred_region
      _
    $region5: #{dcgan_forward.1} parent=1 // pred_fallthru
      _
    // Predicated region
    $region6: #{dcgan_forward.1} parent=1 // pred_check
      _
    $region7: #{dcgan_forward.1} parent=1 // pred_check_branch
      %32 = sbr.rel (0) target = $region9
    $region8: #{dcgan_forward.1} parent=1 // pred_region
      _
    $region9: #{dcgan_forward.1} parent=1 // pred_fallthru
      _
    // Predicated region
    $region10: #{dcgan_forward.1} parent=1 // pred_check
      _
    $region11: #{dcgan_forward.1} parent=1 // pred_check_branch
      %34 = sbr.rel (0) target = $region13
    $region12: #{dcgan_forward.1} parent=1 // pred_region
      _
    $region13: #{dcgan_forward.1} parent=1 // pred_fallthru
      _
    // Predicated region
    $region14: #{dcgan_forward.1} parent=1 // pred_check
      _
    $region15: #{dcgan_forward.1} parent=1 // pred_check_branch
      %36 = sbr.rel (0) target = $region17
    $region16: #{dcgan_forward.1} parent=1 // pred_region
      %s38 = ssub.s32 16384, 16384
      %39 = vsyncadd [#allocation3], %s38
      %s40 = sshll.u32 [#allocation2], 4
      %s41 = int_to_ptr.vmem [resolvable:$true] %s40
      %46 = dma.hbm_to_vmem [thread:$0]  %s3, 16384, %s41, [#allocation3], 128, 128, 8
    $region17: #{dcgan_forward.1} parent=1 // pred_fallthru
      _
    // Predicated region
    $region18: #{dcgan_forward.1} parent=1 // pred_check
      _
    $region19: #{dcgan_forward.1} parent=1 // pred_check_branch
      %48 = sbr.rel (0) target = $region21
    $region20: #{dcgan_forward.1} parent=1 // pred_region
      _
    $region21: #{dcgan_forward.1} parent=1 // pred_fallthru
      _
    // Predicated region
    $region22: #{dcgan_forward.1} parent=1 // pred_check
      _
    $region23: #{dcgan_forward.1} parent=1 // pred_check_branch
      %50 = sbr.rel (0) target = $region25
    $region24: #{dcgan_forward.1} parent=1 // pred_region
      _
    $region25: #{dcgan_forward.1} parent=1 // pred_fallthru
      _
    // Predicated region
    $region26: #{dcgan_forward.1} parent=1 // pred_check
      _
    $region27: #{dcgan_forward.1} parent=1 // pred_check_branch
      %52 = sbr.rel (0) target = $region29
    $region28: #{dcgan_forward.1} parent=1 // pred_region
      _
    $region29: #{dcgan_forward.1} parent=1 // pred_fallthru
      _
    // Predicated region
    $region30: #{dcgan_forward.1} parent=1 // pred_check
      _
    $region31: #{dcgan_forward.1} parent=1 // pred_check_branch
      %54 = sbr.rel (0) target = $region33
    $region32: #{dcgan_forward.1} parent=1 // pred_region
      %s56 = ssub.s32 32, 32
      %57 = vsyncadd [#allocation5], %s56
      %s59 = sshll.u32 [#allocation4], 4
      %s60 = int_to_ptr.vmem [resolvable:$true] %s59
      %62 = dma.hbm_to_vmem [thread:$0]  %s7, 32, %s60, [#allocation5]
    $region33: #{dcgan_forward.1} parent=1 // pred_fallthru
      _
    // Predicated region
    $region34: #{dcgan_forward.1} parent=1 // pred_check
      _
    $region35: #{dcgan_forward.1} parent=1 // pred_check_branch
      %64 = sbr.rel (0) target = $region37
    $region36: #{dcgan_forward.1} parent=1 // pred_region
      %s66 = ssub.s32 16384, 16384
      %67 = vsyncadd [#allocation5], %s66
      %s68 = sshll.u32 [#allocation6], 4
      %s69 = int_to_ptr.vmem [resolvable:$true] %s68
      %74 = dma.hbm_to_vmem [thread:$0]  %s8, 16384, %s69, [#allocation5], 128, 128, 8
    $region37: #{dcgan_forward.1} parent=1 // pred_fallthru
      _
    // Predicated region
    $region38: #{dcgan_forward.1} parent=1 // pred_check
      _
    $region39: #{dcgan_forward.1} parent=1 // pred_check_branch
      %76 = sbr.rel (0) target = $region41
    $region40: #{dcgan_forward.1} parent=1 // pred_region
      _
    $region41: #{dcgan_forward.1} parent=1 // pred_fallthru
      _
    // Predicated region
    $region42: #{dcgan_forward.1} parent=1 // pred_check
      _
    $region43: #{dcgan_forward.1} parent=1 // pred_check_branch
      %78 = sbr.rel (0) target = $region45
    $region44: #{dcgan_forward.1} parent=1 // pred_region
      %s80 = ssub.s32 8192, 8192
      %81 = vsyncadd [#allocation8], %s80
      %s82 = sshll.u32 [#allocation7], 4
      %s83 = int_to_ptr.vmem [resolvable:$true] %s82
      %88 = dma.hbm_to_vmem [thread:$0]  %s10, 8192, %s83, [#allocation8], 256, 256, 16
    $region45: #{dcgan_forward.1} parent=1 // pred_fallthru
      _
    // Predicated region
    $region46: #{dcgan_forward.1} parent=1 // pred_check
      _
    $region47: #{dcgan_forward.1} parent=1 // pred_check_branch
      %90 = sbr.rel (0) target = $region49
    $region48: #{dcgan_forward.1} parent=1 // pred_region
      %s92 = ssub.s32 32, 32
      %93 = vsyncadd [#allocation8], %s92
      %s95 = sshll.u32 [#allocation9], 4
      %s96 = int_to_ptr.vmem [resolvable:$true] %s95
      %98 = dma.hbm_to_vmem [thread:$0]  %s11, 32, %s96, [#allocation8]
    $region49: #{dcgan_forward.1} parent=1 // pred_fallthru
      _
    // Predicated region
    $region50: #{dcgan_forward.1} parent=1 // pred_check
      _
    $region51: #{dcgan_forward.1} parent=1 // pred_check_branch
      %100 = sbr.rel (0) target = $region53
    $region52: #{dcgan_forward.1} parent=1 // pred_region
      %s102 = ssub.s32 32, 32
      %103 = vsyncadd [#allocation11], %s102
      %s105 = sshll.u32 [#allocation10], 4
      %s106 = int_to_ptr.vmem [resolvable:$true] %s105
      %108 = dma.hbm_to_vmem [thread:$0]  %s12, 32, %s106, [#allocation11]
    $region53: #{dcgan_forward.1} parent=1 // pred_fallthru
      _
    // Predicated region
    $region54: #{dcgan_forward.1} parent=1 // pred_check
      _
    $region55: #{dcgan_forward.1} parent=1 // pred_check_branch
      %110 = sbr.rel (0) target = $region57
    $region56: #{dcgan_forward.1} parent=1 // pred_region
      %s112 = ssub.s32 8192, 8192
      %113 = vsyncadd [#allocation11], %s112
      %s114 = sshll.u32 [#allocation12], 4
      %s115 = int_to_ptr.vmem [resolvable:$true] %s114
      %120 = dma.hbm_to_vmem [thread:$0]  %s13, 8192, %s115, [#allocation11], 64, 64, 4
    $region57: #{dcgan_forward.1} parent=1 // pred_fallthru
      _
    // Predicated region
    $region58: #{dcgan_forward.1} parent=1 // pred_check
      _
    $region59: #{dcgan_forward.1} parent=1 // pred_check_branch
      %122 = sbr.rel (0) target = $region61
    $region60: #{dcgan_forward.1} parent=1 // pred_region
      _
    $region61: #{dcgan_forward.1} parent=1 // pred_fallthru
      _
    // Predicated region
    $region62: #{dcgan_forward.1} parent=1 // pred_check
      _
    $region63: #{dcgan_forward.1} parent=1 // pred_check_branch
      %124 = sbr.rel (0) target = $region65
    $region64: #{dcgan_forward.1} parent=1 // pred_region
      %s126 = ssub.s32 8192, 8192
      %127 = vsyncadd [#allocation14], %s126
      %s128 = sshll.u32 [#allocation13], 4
      %s129 = int_to_ptr.vmem [resolvable:$true] %s128
      %134 = dma.hbm_to_vmem [thread:$0]  %s15, 8192, %s129, [#allocation14], 256, 256, 16
    $region65: #{dcgan_forward.1} parent=1 // pred_fallthru
      _
    // Predicated region
    $region66: #{dcgan_forward.1} parent=1 // pred_check
      _
    $region67: #{dcgan_forward.1} parent=1 // pred_check_branch
      %136 = sbr.rel (0) target = $region69
    $region68: #{dcgan_forward.1} parent=1 // pred_region
      %s138 = ssub.s32 32, 32
      %139 = vsyncadd [#allocation14], %s138
      %s141 = sshll.u32 [#allocation15], 4
      %s142 = int_to_ptr.vmem [resolvable:$true] %s141
      %144 = dma.hbm_to_vmem [thread:$0]  %s16, 32, %s142, [#allocation14]
    $region69: #{dcgan_forward.1} parent=1 // pred_fallthru
      _
    // Predicated region
    $region70: #{dcgan_forward.1} parent=1 // pred_check
      _
    $region71: #{dcgan_forward.1} parent=1 // pred_check_branch
      %146 = sbr.rel (0) target = $region73
    $region72: #{dcgan_forward.1} parent=1 // pred_region
      %s148 = ssub.s32 32, 32
      %149 = vsyncadd [#allocation17], %s148
      %s151 = sshll.u32 [#allocation16], 4
      %s152 = int_to_ptr.vmem [resolvable:$true] %s151
      %154 = dma.hbm_to_vmem [thread:$0]  %s17, 32, %s152, [#allocation17]
    $region73: #{dcgan_forward.1} parent=1 // pred_fallthru
      _
    // Predicated region
    $region74: #{dcgan_forward.1} parent=1 // pred_check
      _
    $region75: #{dcgan_forward.1} parent=1 // pred_check_branch
      %156 = sbr.rel (0) target = $region77
    $region76: #{dcgan_forward.1} parent=1 // pred_region
      %157 = dma.done [#allocation3], 16384
    $region77: #{dcgan_forward.1} parent=1 // pred_fallthru
      _
    // Predicated region
    $region78: #{dcgan_forward.1} parent=1 // pred_check
      _
    $region79: #{dcgan_forward.1} parent=1 // pred_check_branch
      %159 = sbr.rel (0) target = $region81
    $region80: #{dcgan_forward.1} parent=1 // pred_region
      %160 = dma.done [#allocation5], 32
    $region81: #{dcgan_forward.1} parent=1 // pred_fallthru
      _
    // Predicated region
    $region82: #{dcgan_forward.1} parent=1 // pred_check
      _
    $region83: #{dcgan_forward.1} parent=1 // pred_check_branch
      %162 = sbr.rel (0) target = $region85
    $region84: #{dcgan_forward.1} parent=1 // pred_region
      %163 = dma.done [#allocation5], 16384
    $region85: #{dcgan_forward.1} parent=1 // pred_fallthru
      _
    // Predicated region
    $region86: #{dcgan_forward.1} parent=1 // pred_check
      _
    $region87: #{dcgan_forward.1} parent=1 // pred_check_branch
      %165 = sbr.rel (0) target = $region89
    $region88: #{dcgan_forward.1} parent=1 // pred_region
      %166 = dma.done [#allocation8], 8192
    $region89: #{dcgan_forward.1} parent=1 // pred_fallthru
      _
    // Predicated region
    $region90: #{dcgan_forward.1} parent=1 // pred_check
      _
    $region91: #{dcgan_forward.1} parent=1 // pred_check_branch
      %168 = sbr.rel (0) target = $region93
    $region92: #{dcgan_forward.1} parent=1 // pred_region
      %169 = dma.done [#allocation8], 32
    $region93: #{dcgan_forward.1} parent=1 // pred_fallthru
      _
    // Predicated region
    $region94: #{dcgan_forward.1} parent=1 // pred_check
      _
    $region95: #{dcgan_forward.1} parent=1 // pred_check_branch
      %171 = sbr.rel (0) target = $region97
    $region96: #{dcgan_forward.1} parent=1 // pred_region
      %172 = dma.done [#allocation11], 32
    $region97: #{dcgan_forward.1} parent=1 // pred_fallthru
      _
    // Predicated region
    $region98: #{dcgan_forward.1} parent=1 // pred_check
      _
    $region99: #{dcgan_forward.1} parent=1 // pred_check_branch
      %174 = sbr.rel (0) target = $region101
    $region100: #{dcgan_forward.1} parent=1 // pred_region
      %175 = dma.done [#allocation11], 8192
    $region101: #{dcgan_forward.1} parent=1 // pred_fallthru
      _
    // Predicated region
    $region102: #{dcgan_forward.1} parent=1 // pred_check
      _
    $region103: #{dcgan_forward.1} parent=1 // pred_check_branch
      %177 = sbr.rel (0) target = $region105
    $region104: #{dcgan_forward.1} parent=1 // pred_region
      %178 = dma.done [#allocation14], 8192
    $region105: #{dcgan_forward.1} parent=1 // pred_fallthru
      _
    // Predicated region
    $region106: #{dcgan_forward.1} parent=1 // pred_check
      _
    $region107: #{dcgan_forward.1} parent=1 // pred_check_branch
      %180 = sbr.rel (0) target = $region109
    $region108: #{dcgan_forward.1} parent=1 // pred_region
      %181 = dma.done [#allocation14], 32
    $region109: #{dcgan_forward.1} parent=1 // pred_fallthru
      _
    // Predicated region
    $region110: #{dcgan_forward.1} parent=1 // pred_check
      _
    $region111: #{dcgan_forward.1} parent=1 // pred_check_branch
      %183 = sbr.rel (0) target = $region113
    $region112: #{dcgan_forward.1} parent=1 // pred_region
      %184 = dma.done [#allocation17], 32
    $region113: #{dcgan_forward.1} parent=1 // pred_fallthru
      _
    %v186 = vld [vmem:[%s0] sm:$0x3]
    %v187 = vpack.c.bf16 %v186, %v186
    %v188 = vld [vmem:[%s1] sm:$0xff]
    %v189 = vld [vmem:[%s1 + $0x8] sm:$0xff]
    %v190 = vld [vmem:[%s1 + $0x10] sm:$0xff]
    %v191 = vld [vmem:[%s1 + $0x18] sm:$0xff]
    %v196 = vunpack.c.l.b16 %v188
    %v197 = vunpack.c.h.b16 %v188
    %v198 = vunpack.c.l.b16 %v189
    %v199 = vunpack.c.h.b16 %v189
    %v200 = vunpack.c.l.b16 %v190
    %v201 = vunpack.c.h.b16 %v190
    %v202 = vunpack.c.l.b16 %v191
    %v203 = vunpack.c.h.b16 %v191
    %v204 = vpack.c.b16 %v198, %v196
    %v205 = vpack.c.b16 %v199, %v197
    %v206 = vpack.c.b16 %v202, %v200
    %v207 = vpack.c.b16 %v203, %v201
    %vm212 = vcmask 261120
    %v214 = vsel %vm212, %v187, 0
    %216 = vmatprep.subr.bf16.mxu0 0
    %217 = vmatpush1.bf16.msra.mxu0 0
    %218 = vmatprep.subr.bf16.mxu0 0
    %219 = vmatpush1.bf16.msra.mxu0 0
    %220 = vmatprep.subr.bf16.mxu0 0
    %221 = vmatpush1.bf16.msra.mxu0 0
    %222 = vmatprep.subr.bf16.mxu0 0
    %223 = vmatpush1.bf16.msra.mxu0 0
    %224 = vmatprep.subr.bf16.mxu0 0
    %225 = vmatpush1.bf16.msra.mxu0 0
    %226 = vmatprep.subr.bf16.mxu0 0
    %227 = vmatpush1.bf16.msra.mxu0 0
    %228 = vmatprep.subr.bf16.mxu0 %v207
    %229 = vmatpush1.bf16.msra.mxu0 %v206
    %230 = vmatprep.subr.bf16.mxu0 %v205
    %231 = vmatpush1.bf16.msra.mxu0 %v204
    %232 = vmatprep.subr.bf16.mxu0 0
    %233 = vmatpush2.bf16.msra.mxu0 0
    %234 = vmatprep.subr.bf16.mxu0 0
    %235 = vmatpush2.bf16.msra.mxu0 0
    %236 = vmatprep.subr.bf16.mxu0 0
    %237 = vmatpush2.bf16.msra.mxu0 0
    %238 = vmatprep.subr.bf16.mxu0 0
    %239 = vmatpush2.bf16.msra.mxu0 0
    %240 = vmatprep.subr.bf16.mxu0 0
    %241 = vmatpush2.bf16.msra.mxu0 0
    %242 = vmatprep.subr.bf16.mxu0 0
    %243 = vmatpush2.bf16.msra.mxu0 0
    %244 = vmatprep.subr.bf16.mxu0 0
    %245 = vmatpush2.bf16.msra.mxu0 0
    %246 = vmatprep.subr.bf16.mxu0 0
    %247 = vmatpush2.bf16.msra.mxu0 0
    %248 = vmatprep.mubr.bf16.mxu0 0
    %249 = vmatmul.mubr.bf16.gmra.mxu0 %v214
    %v250 = vpop.f32.mrf.mxu0
    %v251 = vadd.f32 0.0, %v250
    %v252 = vpop.f32.mrf.mxu0
    %v253 = vadd.f32 0.0, %v252
    %v254 = vpop.f32.mrf.mxu0
    %v255 = vpop.f32.mrf.mxu0
    %256 = vdwg.mxu0
    %v257 = vld [vmem:[%s2] sm:$0xff]
    %s258 = scalar_lea.vmem %s1, 32
    %v259 = vld [vmem:[%s258] sm:$0xff]
    %v260 = vld [vmem:[%s258 + $0x8] sm:$0xff]
    %v261 = vld [vmem:[%s258 + $0x10] sm:$0xff]
    %v262 = vld [vmem:[%s258 + $0x18] sm:$0xff]
    %v267 = vunpack.c.l.b16 %v259
    %v268 = vunpack.c.h.b16 %v259
    %v269 = vunpack.c.l.b16 %v260
    %v270 = vunpack.c.h.b16 %v260
    %v271 = vunpack.c.l.b16 %v261
    %v272 = vunpack.c.h.b16 %v261
    %v273 = vunpack.c.l.b16 %v262
    %v274 = vunpack.c.h.b16 %v262
    %v275 = vpack.c.b16 %v269, %v267
    %v276 = vpack.c.b16 %v270, %v268
    %v277 = vpack.c.b16 %v273, %v271
    %v278 = vpack.c.b16 %v274, %v272
    %283 = vmatprep.subr.bf16.mxu0 0
    %284 = vmatpush1.bf16.msra.mxu0 0
    %285 = vmatprep.subr.bf16.mxu0 0
    %286 = vmatpush1.bf16.msra.mxu0 0
    %287 = vmatprep.subr.bf16.mxu0 0
    %288 = vmatpush1.bf16.msra.mxu0 0
    %289 = vmatprep.subr.bf16.mxu0 0
    %290 = vmatpush1.bf16.msra.mxu0 0
    %291 = vmatprep.subr.bf16.mxu0 0
    %292 = vmatpush1.bf16.msra.mxu0 0
    %293 = vmatprep.subr.bf16.mxu0 0
    %294 = vmatpush1.bf16.msra.mxu0 0
    %295 = vmatprep.subr.bf16.mxu0 %v278
    %296 = vmatpush1.bf16.msra.mxu0 %v277
    %297 = vmatprep.subr.bf16.mxu0 %v276
    %298 = vmatpush1.bf16.msra.mxu0 %v275
    %299 = vmatprep.subr.bf16.mxu0 0
    %300 = vmatpush2.bf16.msra.mxu0 0
    %301 = vmatprep.subr.bf16.mxu0 0
    %302 = vmatpush2.bf16.msra.mxu0 0
    %303 = vmatprep.subr.bf16.mxu0 0
    %304 = vmatpush2.bf16.msra.mxu0 0
    %305 = vmatprep.subr.bf16.mxu0 0
    %306 = vmatpush2.bf16.msra.mxu0 0
    %307 = vmatprep.subr.bf16.mxu0 0
    %308 = vmatpush2.bf16.msra.mxu0 0
    %309 = vmatprep.subr.bf16.mxu0 0
    %310 = vmatpush2.bf16.msra.mxu0 0
    %311 = vmatprep.subr.bf16.mxu0 0
    %312 = vmatpush2.bf16.msra.mxu0 0
    %313 = vmatprep.subr.bf16.mxu0 0
    %314 = vmatpush2.bf16.msra.mxu0 0
    %315 = vmatprep.mubr.bf16.mxu0 0
    %316 = vmatmul.mubr.bf16.gmra.mxu0 %v214
    %v317 = vpop.f32.mrf.mxu0
    %v318 = vadd.f32 0.0, %v317
    %v319 = vpop.f32.mrf.mxu0
    %v320 = vadd.f32 0.0, %v319
    %v321 = vpop.f32.mrf.mxu0
    %v322 = vpop.f32.mrf.mxu0
    %323 = vdwg.mxu0
    %s324 = scalar_lea.vmem %s2, 8
    %v325 = vld [vmem:[%s324] sm:$0xff]
    %vm326 = vcmask 15360
    %v328 = vsel %vm326, %v325, 0
    %vm330 = vcmask 1041408
    %v332 = vsel %vm330, %v318, 0
    %v335 = vsel %vm330, %v320, 0
    %337 = vmatprep.subr.mxu0 0.0
    %338 = vmatpush1.msra.mxu0 0.0
    %339 = vmatprep.subr.mxu0 0.0
    %340 = vmatpush1.msra.mxu0 0.0
    %341 = vmatprep.subr.mxu0 0.0
    %342 = vmatpush1.msra.mxu0 0.0
    %343 = vmatprep.subr.mxu0 0.0
    %344 = vmatpush1.msra.mxu0 0.0
    %345 = vmatprep.subr.mxu0 0.0
    %346 = vmatpush1.msra.mxu0 0.0
    %347 = vmatprep.subr.mxu0 0.0
    %348 = vmatpush1.msra.mxu0 0.0
    %349 = vmatprep.subr.mxu0 0.0
    %350 = vmatpush1.msra.mxu0 0.0
    %351 = vmatprep.subr.mxu0 0.0
    %352 = vmatpush1.msra.mxu0 0.0
    %353 = vmatprep.subr.mxu0 0.0
    %354 = vmatpush1.msra.mxu0 0.0
    %355 = vmatprep.subr.mxu0 0.0
    %356 = vmatpush1.msra.mxu0 0.0
    %357 = vmatprep.subr.mxu0 0.0
    %358 = vmatpush1.msra.mxu0 0.0
    %359 = vmatprep.subr.mxu0 0.0
    %360 = vmatpush1.msra.mxu0 0.0
    %361 = vmatprep.subr.mxu0 0.0
    %362 = vmatpush1.msra.mxu0 0.0
    %363 = vmatprep.subr.mxu0 0.0
    %364 = vmatpush1.msra.mxu0 0.0
    %365 = vmatprep.subr.mxu0 0.0
    %366 = vmatpush1.msra.mxu0 0.0
    %367 = vmatprep.subr.mxu0 %v335
    %368 = vmatpush1.msra.mxu0 %v332
    %369 = vmatprep.subr.mxu0 0.0
    %370 = vmatpush2.msra.mxu0 0.0
    %371 = vmatprep.subr.mxu0 0.0
    %372 = vmatpush2.msra.mxu0 0.0
    %373 = vmatprep.subr.mxu0 0.0
    %374 = vmatpush2.msra.mxu0 0.0
    %375 = vmatprep.subr.mxu0 0.0
    %376 = vmatpush2.msra.mxu0 0.0
    %377 = vmatprep.subr.mxu0 0.0
    %378 = vmatpush2.msra.mxu0 0.0
    %379 = vmatprep.subr.mxu0 0.0
    %380 = vmatpush2.msra.mxu0 0.0
    %381 = vmatprep.subr.mxu0 0.0
    %382 = vmatpush2.msra.mxu0 0.0
    %383 = vmatprep.subr.mxu0 0.0
    %384 = vmatpush2.msra.mxu0 0.0
    %385 = vmatprep.subr.mxu0 0.0
    %386 = vmatpush2.msra.mxu0 0.0
    %387 = vmatprep.subr.mxu0 0.0
    %388 = vmatpush2.msra.mxu0 0.0
    %389 = vmatprep.subr.mxu0 0.0
    %390 = vmatpush2.msra.mxu0 0.0
    %391 = vmatprep.subr.mxu0 0.0
    %392 = vmatpush2.msra.mxu0 0.0
    %393 = vmatprep.subr.mxu0 0.0
    %394 = vmatpush2.msra.mxu0 0.0
    %395 = vmatprep.subr.mxu0 0.0
    %396 = vmatpush2.msra.mxu0 0.0
    %397 = vmatprep.subr.mxu0 0.0
    %398 = vmatpush2.msra.mxu0 0.0
    %399 = vmatprep.subr.mxu0 0.0
    %400 = vmatpush2.msra.mxu0 0.0
    %401 = vmatprep.mubr.f32.mxu0 0.0
    %402 = vmatmul.mubr.f32.gmra.mxu0 %v328
    %v403 = vpop.f32.mrf.mxu0
    %v404 = vadd.f32 0.0, %v403
    %v405 = vpop.f32.mrf.mxu0
    %v406 = vadd.f32 0.0, %v405
    %407 = vdwg.mxu0
    %v409 = vsel %vm326, %v257, 0
    %v412 = vsel %vm330, %v251, 0
    %v415 = vsel %vm330, %v253, 0
    %417 = vmatprep.subr.mxu0 0.0
    %418 = vmatpush1.msra.mxu0 0.0
    %419 = vmatprep.subr.mxu0 0.0
    %420 = vmatpush1.msra.mxu0 0.0
    %421 = vmatprep.subr.mxu0 0.0
    %422 = vmatpush1.msra.mxu0 0.0
    %423 = vmatprep.subr.mxu0 0.0
    %424 = vmatpush1.msra.mxu0 0.0
    %425 = vmatprep.subr.mxu0 0.0
    %426 = vmatpush1.msra.mxu0 0.0
    %427 = vmatprep.subr.mxu0 0.0
    %428 = vmatpush1.msra.mxu0 0.0
    %429 = vmatprep.subr.mxu0 0.0
    %430 = vmatpush1.msra.mxu0 0.0
    %431 = vmatprep.subr.mxu0 0.0
    %432 = vmatpush1.msra.mxu0 0.0
    %433 = vmatprep.subr.mxu0 0.0
    %434 = vmatpush1.msra.mxu0 0.0
    %435 = vmatprep.subr.mxu0 0.0
    %436 = vmatpush1.msra.mxu0 0.0
    %437 = vmatprep.subr.mxu0 0.0
    %438 = vmatpush1.msra.mxu0 0.0
    %439 = vmatprep.subr.mxu0 0.0
    %440 = vmatpush1.msra.mxu0 0.0
    %441 = vmatprep.subr.mxu0 0.0
    %442 = vmatpush1.msra.mxu0 0.0
    %443 = vmatprep.subr.mxu0 0.0
    %444 = vmatpush1.msra.mxu0 0.0
    %445 = vmatprep.subr.mxu0 0.0
    %446 = vmatpush1.msra.mxu0 0.0
    %447 = vmatprep.subr.mxu0 %v415
    %448 = vmatpush1.msra.mxu0 %v412
    %449 = vmatprep.subr.mxu0 0.0
    %450 = vmatpush2.msra.mxu0 0.0
    %451 = vmatprep.subr.mxu0 0.0
    %452 = vmatpush2.msra.mxu0 0.0
    %453 = vmatprep.subr.mxu0 0.0
    %454 = vmatpush2.msra.mxu0 0.0
    %455 = vmatprep.subr.mxu0 0.0
    %456 = vmatpush2.msra.mxu0 0.0
    %457 = vmatprep.subr.mxu0 0.0
    %458 = vmatpush2.msra.mxu0 0.0
    %459 = vmatprep.subr.mxu0 0.0
    %460 = vmatpush2.msra.mxu0 0.0
    %461 = vmatprep.subr.mxu0 0.0
    %462 = vmatpush2.msra.mxu0 0.0
    %463 = vmatprep.subr.mxu0 0.0
    %464 = vmatpush2.msra.mxu0 0.0
    %465 = vmatprep.subr.mxu0 0.0
    %466 = vmatpush2.msra.mxu0 0.0
    %467 = vmatprep.subr.mxu0 0.0
    %468 = vmatpush2.msra.mxu0 0.0
    %469 = vmatprep.subr.mxu0 0.0
    %470 = vmatpush2.msra.mxu0 0.0
    %471 = vmatprep.subr.mxu0 0.0
    %472 = vmatpush2.msra.mxu0 0.0
    %473 = vmatprep.subr.mxu0 0.0
    %474 = vmatpush2.msra.mxu0 0.0
    %475 = vmatprep.subr.mxu0 0.0
    %476 = vmatpush2.msra.mxu0 0.0
    %477 = vmatprep.subr.mxu0 0.0
    %478 = vmatpush2.msra.mxu0 0.0
    %479 = vmatprep.subr.mxu0 0.0
    %480 = vmatpush2.msra.mxu0 0.0
    %481 = vmatprep.mubr.f32.mxu0 0.0
    %482 = vmatmul.mubr.f32.gmra.mxu0 %v409
    %v483 = vpop.f32.mrf.mxu0
    %v484 = vadd.f32 %v404, %v483
    %v485 = vpop.f32.mrf.mxu0
    %v486 = vadd.f32 %v406, %v485
    %487 = vdwg.mxu0
    %s488 = scalar_lea.vmem %s1, 64
    %v489 = vld [vmem:[%s488] sm:$0xff]
    %v490 = vld [vmem:[%s488 + $0x8] sm:$0xff]
    %v491 = vld [vmem:[%s488 + $0x10] sm:$0xff]
    %v492 = vld [vmem:[%s488 + $0x18] sm:$0xff]
    %v497 = vunpack.c.l.b16 %v489
    %v498 = vunpack.c.h.b16 %v489
    %v499 = vunpack.c.l.b16 %v490
    %v500 = vunpack.c.h.b16 %v490
    %v501 = vunpack.c.l.b16 %v491
    %v502 = vunpack.c.h.b16 %v491
    %v503 = vunpack.c.l.b16 %v492
    %v504 = vunpack.c.h.b16 %v492
    %v505 = vpack.c.b16 %v499, %v497
    %v506 = vpack.c.b16 %v500, %v498
    %v507 = vpack.c.b16 %v503, %v501
    %v508 = vpack.c.b16 %v504, %v502
    %513 = vmatprep.subr.bf16.mxu0 0
    %514 = vmatpush1.bf16.msra.mxu0 0
    %515 = vmatprep.subr.bf16.mxu0 0
    %516 = vmatpush1.bf16.msra.mxu0 0
    %517 = vmatprep.subr.bf16.mxu0 0
    %518 = vmatpush1.bf16.msra.mxu0 0
    %519 = vmatprep.subr.bf16.mxu0 0
    %520 = vmatpush1.bf16.msra.mxu0 0
    %521 = vmatprep.subr.bf16.mxu0 0
    %522 = vmatpush1.bf16.msra.mxu0 0
    %523 = vmatprep.subr.bf16.mxu0 0
    %524 = vmatpush1.bf16.msra.mxu0 0
    %525 = vmatprep.subr.bf16.mxu0 %v508
    %526 = vmatpush1.bf16.msra.mxu0 %v507
    %527 = vmatprep.subr.bf16.mxu0 %v506
    %528 = vmatpush1.bf16.msra.mxu0 %v505
    %529 = vmatprep.subr.bf16.mxu0 0
    %530 = vmatpush2.bf16.msra.mxu0 0
    %531 = vmatprep.subr.bf16.mxu0 0
    %532 = vmatpush2.bf16.msra.mxu0 0
    %533 = vmatprep.subr.bf16.mxu0 0
    %534 = vmatpush2.bf16.msra.mxu0 0
    %535 = vmatprep.subr.bf16.mxu0 0
    %536 = vmatpush2.bf16.msra.mxu0 0
    %537 = vmatprep.subr.bf16.mxu0 0
    %538 = vmatpush2.bf16.msra.mxu0 0
    %539 = vmatprep.subr.bf16.mxu0 0
    %540 = vmatpush2.bf16.msra.mxu0 0
    %541 = vmatprep.subr.bf16.mxu0 0
    %542 = vmatpush2.bf16.msra.mxu0 0
    %543 = vmatprep.subr.bf16.mxu0 0
    %544 = vmatpush2.bf16.msra.mxu0 0
    %545 = vmatprep.mubr.bf16.mxu0 0
    %546 = vmatmul.mubr.bf16.gmra.mxu0 %v214
    %v547 = vpop.f32.mrf.mxu0
    %v548 = vadd.f32 0.0, %v547
    %v549 = vpop.f32.mrf.mxu0
    %v550 = vadd.f32 0.0, %v549
    %v551 = vpop.f32.mrf.mxu0
    %v552 = vpop.f32.mrf.mxu0
    %553 = vdwg.mxu0
    %s554 = scalar_lea.vmem %s2, 16
    %v555 = vld [vmem:[%s554] sm:$0xff]
    %v557 = vsel %vm326, %v555, 0
    %v560 = vsel %vm330, %v548, 0
    %v563 = vsel %vm330, %v550, 0
    %565 = vmatprep.subr.mxu0 0.0
    %566 = vmatpush1.msra.mxu0 0.0
    %567 = vmatprep.subr.mxu0 0.0
    %568 = vmatpush1.msra.mxu0 0.0
    %569 = vmatprep.subr.mxu0 0.0
    %570 = vmatpush1.msra.mxu0 0.0
    %571 = vmatprep.subr.mxu0 0.0
    %572 = vmatpush1.msra.mxu0 0.0
    %573 = vmatprep.subr.mxu0 0.0
    %574 = vmatpush1.msra.mxu0 0.0
    %575 = vmatprep.subr.mxu0 0.0
    %576 = vmatpush1.msra.mxu0 0.0
    %577 = vmatprep.subr.mxu0 0.0
    %578 = vmatpush1.msra.mxu0 0.0
    %579 = vmatprep.subr.mxu0 0.0
    %580 = vmatpush1.msra.mxu0 0.0
    %581 = vmatprep.subr.mxu0 0.0
    %582 = vmatpush1.msra.mxu0 0.0
    %583 = vmatprep.subr.mxu0 0.0
    %584 = vmatpush1.msra.mxu0 0.0
    %585 = vmatprep.subr.mxu0 0.0
    %586 = vmatpush1.msra.mxu0 0.0
    %587 = vmatprep.subr.mxu0 0.0
    %588 = vmatpush1.msra.mxu0 0.0
    %589 = vmatprep.subr.mxu0 0.0
    %590 = vmatpush1.msra.mxu0 0.0
    %591 = vmatprep.subr.mxu0 0.0
    %592 = vmatpush1.msra.mxu0 0.0
    %593 = vmatprep.subr.mxu0 0.0
    %594 = vmatpush1.msra.mxu0 0.0
    %595 = vmatprep.subr.mxu0 %v563
    %596 = vmatpush1.msra.mxu0 %v560
    %597 = vmatprep.subr.mxu0 0.0
    %598 = vmatpush2.msra.mxu0 0.0
    %599 = vmatprep.subr.mxu0 0.0
    %600 = vmatpush2.msra.mxu0 0.0
    %601 = vmatprep.subr.mxu0 0.0
    %602 = vmatpush2.msra.mxu0 0.0
    %603 = vmatprep.subr.mxu0 0.0
    %604 = vmatpush2.msra.mxu0 0.0
    %605 = vmatprep.subr.mxu0 0.0
    %606 = vmatpush2.msra.mxu0 0.0
    %607 = vmatprep.subr.mxu0 0.0
    %608 = vmatpush2.msra.mxu0 0.0
    %609 = vmatprep.subr.mxu0 0.0
    %610 = vmatpush2.msra.mxu0 0.0
    %611 = vmatprep.subr.mxu0 0.0
    %612 = vmatpush2.msra.mxu0 0.0
    %613 = vmatprep.subr.mxu0 0.0
    %614 = vmatpush2.msra.mxu0 0.0
    %615 = vmatprep.subr.mxu0 0.0
    %616 = vmatpush2.msra.mxu0 0.0
    %617 = vmatprep.subr.mxu0 0.0
    %618 = vmatpush2.msra.mxu0 0.0
    %619 = vmatprep.subr.mxu0 0.0
    %620 = vmatpush2.msra.mxu0 0.0
    %621 = vmatprep.subr.mxu0 0.0
    %622 = vmatpush2.msra.mxu0 0.0
    %623 = vmatprep.subr.mxu0 0.0
    %624 = vmatpush2.msra.mxu0 0.0
    %625 = vmatprep.subr.mxu0 0.0
    %626 = vmatpush2.msra.mxu0 0.0
    %627 = vmatprep.subr.mxu0 0.0
    %628 = vmatpush2.msra.mxu0 0.0
    %629 = vmatprep.mubr.f32.mxu0 0.0
    %630 = vmatmul.mubr.f32.gmra.mxu0 %v557
    %v631 = vpop.f32.mrf.mxu0
    %v632 = vadd.f32 0.0, %v631
    %v633 = vpop.f32.mrf.mxu0
    %v634 = vadd.f32 0.0, %v633
    %635 = vdwg.mxu0
    %v636 = vadd.f32 %v484, %v632
    %v637 = vadd.f32 %v486, %v634
    %s638 = scalar_lea.vmem %s1, 96
    %v639 = vld [vmem:[%s638] sm:$0xff]
    %v640 = vld [vmem:[%s638 + $0x8] sm:$0xff]
    %v641 = vld [vmem:[%s638 + $0x10] sm:$0xff]
    %v642 = vld [vmem:[%s638 + $0x18] sm:$0xff]
    %v647 = vunpack.c.l.b16 %v639
    %v648 = vunpack.c.h.b16 %v639
    %v649 = vunpack.c.l.b16 %v640
    %v650 = vunpack.c.h.b16 %v640
    %v651 = vunpack.c.l.b16 %v641
    %v652 = vunpack.c.h.b16 %v641
    %v653 = vunpack.c.l.b16 %v642
    %v654 = vunpack.c.h.b16 %v642
    %v655 = vpack.c.b16 %v649, %v647
    %v656 = vpack.c.b16 %v650, %v648
    %v657 = vpack.c.b16 %v653, %v651
    %v658 = vpack.c.b16 %v654, %v652
    %663 = vmatprep.subr.bf16.mxu0 0
    %664 = vmatpush1.bf16.msra.mxu0 0
    %665 = vmatprep.subr.bf16.mxu0 0
    %666 = vmatpush1.bf16.msra.mxu0 0
    %667 = vmatprep.subr.bf16.mxu0 0
    %668 = vmatpush1.bf16.msra.mxu0 0
    %669 = vmatprep.subr.bf16.mxu0 0
    %670 = vmatpush1.bf16.msra.mxu0 0
    %671 = vmatprep.subr.bf16.mxu0 0
    %672 = vmatpush1.bf16.msra.mxu0 0
    %673 = vmatprep.subr.bf16.mxu0 0
    %674 = vmatpush1.bf16.msra.mxu0 0
    %675 = vmatprep.subr.bf16.mxu0 %v658
    %676 = vmatpush1.bf16.msra.mxu0 %v657
    %677 = vmatprep.subr.bf16.mxu0 %v656
    %678 = vmatpush1.bf16.msra.mxu0 %v655
    %679 = vmatprep.subr.bf16.mxu0 0
    %680 = vmatpush2.bf16.msra.mxu0 0
    %681 = vmatprep.subr.bf16.mxu0 0
    %682 = vmatpush2.bf16.msra.mxu0 0
    %683 = vmatprep.subr.bf16.mxu0 0
    %684 = vmatpush2.bf16.msra.mxu0 0
    %685 = vmatprep.subr.bf16.mxu0 0
    %686 = vmatpush2.bf16.msra.mxu0 0
    %687 = vmatprep.subr.bf16.mxu0 0
    %688 = vmatpush2.bf16.msra.mxu0 0
    %689 = vmatprep.subr.bf16.mxu0 0
    %690 = vmatpush2.bf16.msra.mxu0 0
    %691 = vmatprep.subr.bf16.mxu0 0
    %692 = vmatpush2.bf16.msra.mxu0 0
    %693 = vmatprep.subr.bf16.mxu0 0
    %694 = vmatpush2.bf16.msra.mxu0 0
    %695 = vmatprep.mubr.bf16.mxu0 0
    %696 = vmatmul.mubr.bf16.gmra.mxu0 %v214
    %v697 = vpop.f32.mrf.mxu0
    %v698 = vadd.f32 0.0, %v697
    %v699 = vpop.f32.mrf.mxu0
    %v700 = vadd.f32 0.0, %v699
    %v701 = vpop.f32.mrf.mxu0
    %v702 = vpop.f32.mrf.mxu0
    %703 = vdwg.mxu0
    %s704 = scalar_lea.vmem %s2, 24
    %v705 = vld [vmem:[%s704] sm:$0xff]
    %v707 = vsel %vm326, %v705, 0
    %v710 = vsel %vm330, %v698, 0
    %v713 = vsel %vm330, %v700, 0
    %715 = vmatprep.subr.mxu0 0.0
    %716 = vmatpush1.msra.mxu0 0.0
    %717 = vmatprep.subr.mxu0 0.0
    %718 = vmatpush1.msra.mxu0 0.0
    %719 = vmatprep.subr.mxu0 0.0
    %720 = vmatpush1.msra.mxu0 0.0
    %721 = vmatprep.subr.mxu0 0.0
    %722 = vmatpush1.msra.mxu0 0.0
    %723 = vmatprep.subr.mxu0 0.0
    %724 = vmatpush1.msra.mxu0 0.0
    %725 = vmatprep.subr.mxu0 0.0
    %726 = vmatpush1.msra.mxu0 0.0
    %727 = vmatprep.subr.mxu0 0.0
    %728 = vmatpush1.msra.mxu0 0.0
    %729 = vmatprep.subr.mxu0 0.0
    %730 = vmatpush1.msra.mxu0 0.0
    %731 = vmatprep.subr.mxu0 0.0
    %732 = vmatpush1.msra.mxu0 0.0
    %733 = vmatprep.subr.mxu0 0.0
    %734 = vmatpush1.msra.mxu0 0.0
    %735 = vmatprep.subr.mxu0 0.0
    %736 = vmatpush1.msra.mxu0 0.0
    %737 = vmatprep.subr.mxu0 0.0
    %738 = vmatpush1.msra.mxu0 0.0
    %739 = vmatprep.subr.mxu0 0.0
    %740 = vmatpush1.msra.mxu0 0.0
    %741 = vmatprep.subr.mxu0 0.0
    %742 = vmatpush1.msra.mxu0 0.0
    %743 = vmatprep.subr.mxu0 0.0
    %744 = vmatpush1.msra.mxu0 0.0
    %745 = vmatprep.subr.mxu0 %v713
    %746 = vmatpush1.msra.mxu0 %v710
    %747 = vmatprep.subr.mxu0 0.0
    %748 = vmatpush2.msra.mxu0 0.0
    %749 = vmatprep.subr.mxu0 0.0
    %750 = vmatpush2.msra.mxu0 0.0
    %751 = vmatprep.subr.mxu0 0.0
    %752 = vmatpush2.msra.mxu0 0.0
    %753 = vmatprep.subr.mxu0 0.0
    %754 = vmatpush2.msra.mxu0 0.0
    %755 = vmatprep.subr.mxu0 0.0
    %756 = vmatpush2.msra.mxu0 0.0
    %757 = vmatprep.subr.mxu0 0.0
    %758 = vmatpush2.msra.mxu0 0.0
    %759 = vmatprep.subr.mxu0 0.0
    %760 = vmatpush2.msra.mxu0 0.0
    %761 = vmatprep.subr.mxu0 0.0
    %762 = vmatpush2.msra.mxu0 0.0
    %763 = vmatprep.subr.mxu0 0.0
    %764 = vmatpush2.msra.mxu0 0.0
    %765 = vmatprep.subr.mxu0 0.0
    %766 = vmatpush2.msra.mxu0 0.0
    %767 = vmatprep.subr.mxu0 0.0
    %768 = vmatpush2.msra.mxu0 0.0
    %769 = vmatprep.subr.mxu0 0.0
    %770 = vmatpush2.msra.mxu0 0.0
    %771 = vmatprep.subr.mxu0 0.0
    %772 = vmatpush2.msra.mxu0 0.0
    %773 = vmatprep.subr.mxu0 0.0
    %774 = vmatpush2.msra.mxu0 0.0
    %775 = vmatprep.subr.mxu0 0.0
    %776 = vmatpush2.msra.mxu0 0.0
    %777 = vmatprep.subr.mxu0 0.0
    %778 = vmatpush2.msra.mxu0 0.0
    %779 = vmatprep.mubr.f32.mxu0 0.0
    %780 = vmatmul.mubr.f32.gmra.mxu0 %v707
    %v781 = vpop.f32.mrf.mxu0
    %v782 = vadd.f32 0.0, %v781
    %v783 = vpop.f32.mrf.mxu0
    %v784 = vadd.f32 0.0, %v783
    %785 = vdwg.mxu0
    %v786 = vadd.f32 %v636, %v782
    %v787 = vadd.f32 %v637, %v784
    %v788 = vrot.slane %v786, 4
    %v789 = vadd.f32 %v786, %v788
    %v790 = vrot.slane %v789, 2
    %v791 = vadd.f32 %v789, %v790
    %v792 = vrot.slane %v791, 1
    %v793 = vadd.f32 %v791, %v792
    %v794 = vrot.slane %v787, 4
    %v795 = vadd.f32 %v787, %v794
    %v796 = vrot.slane %v795, 2
    %v797 = vadd.f32 %v795, %v796
    %v798 = vrot.slane %v797, 1
    %v799 = vadd.f32 %v797, %v798
    %v800 = vrcp.pop 8.0
    %v801 = vmul.f32 %v793, %v800
    %v802 = vmul.f32 %v799, %v800
    %v803 = vld [vmem:[%s5] sm:$0xff]
    %v804 = vld [vmem:[%s5 + $0x8] sm:$0xff]
    %v805 = vld [vmem:[%s5 + $0x10] sm:$0xff]
    %v806 = vld [vmem:[%s5 + $0x18] sm:$0xff]
    %v807 = vld [vmem:[%s5 + $0x20] sm:$0xff]
    %v808 = vld [vmem:[%s5 + $0x28] sm:$0xff]
    %v809 = vld [vmem:[%s5 + $0x30] sm:$0xff]
    %v810 = vld [vmem:[%s5 + $0x38] sm:$0xff]
    %v811 = vld [vmem:[%s5 + $0x40] sm:$0xff]
    %v812 = vld [vmem:[%s5 + $0x48] sm:$0xff]
    %v813 = vld [vmem:[%s5 + $0x50] sm:$0xff]
    %v814 = vld [vmem:[%s5 + $0x58] sm:$0xff]
    %v815 = vld [vmem:[%s5 + $0x60] sm:$0xff]
    %v816 = vld [vmem:[%s5 + $0x68] sm:$0xff]
    %v817 = vld [vmem:[%s5 + $0x70] sm:$0xff]
    %v818 = vld [vmem:[%s5 + $0x78] sm:$0xff]
    %v819 = vld [vmem:[%s5 + $0x80] sm:$0xff]
    %v820 = vld [vmem:[%s5 + $0x88] sm:$0xff]
    %v821 = vld [vmem:[%s5 + $0x90] sm:$0xff]
    %v822 = vld [vmem:[%s5 + $0x98] sm:$0xff]
    %v823 = vld [vmem:[%s5 + $0xa0] sm:$0xff]
    %v824 = vld [vmem:[%s5 + $0xa8] sm:$0xff]
    %v825 = vld [vmem:[%s5 + $0xb0] sm:$0xff]
    %v826 = vld [vmem:[%s5 + $0xb8] sm:$0xff]
    %v827 = vld [vmem:[%s5 + $0xc0] sm:$0xff]
    %v828 = vld [vmem:[%s5 + $0xc8] sm:$0xff]
    %v829 = vld [vmem:[%s5 + $0xd0] sm:$0xff]
    %v830 = vld [vmem:[%s5 + $0xd8] sm:$0xff]
    %v831 = vld [vmem:[%s5 + $0xe0] sm:$0xff]
    %v832 = vld [vmem:[%s5 + $0xe8] sm:$0xff]
    %v833 = vld [vmem:[%s5 + $0xf0] sm:$0xff]
    %v834 = vld [vmem:[%s5 + $0xf8] sm:$0xff]
    %v835 = vld [vmem:[%s5 + $0x100] sm:$0xff]
    %v836 = vld [vmem:[%s5 + $0x108] sm:$0xff]
    %v837 = vld [vmem:[%s5 + $0x110] sm:$0xff]
    %v838 = vld [vmem:[%s5 + $0x118] sm:$0xff]
    %v839 = vld [vmem:[%s5 + $0x120] sm:$0xff]
    %v840 = vld [vmem:[%s5 + $0x128] sm:$0xff]
    %v841 = vld [vmem:[%s5 + $0x130] sm:$0xff]
    %v842 = vld [vmem:[%s5 + $0x138] sm:$0xff]
    %v843 = vld [vmem:[%s5 + $0x140] sm:$0xff]
    %v844 = vld [vmem:[%s5 + $0x148] sm:$0xff]
    %v845 = vld [vmem:[%s5 + $0x150] sm:$0xff]
    %v846 = vld [vmem:[%s5 + $0x158] sm:$0xff]
    %v847 = vld [vmem:[%s5 + $0x160] sm:$0xff]
    %v848 = vld [vmem:[%s5 + $0x168] sm:$0xff]
    %v849 = vld [vmem:[%s5 + $0x170] sm:$0xff]
    %v850 = vld [vmem:[%s5 + $0x178] sm:$0xff]
    %v851 = vld [vmem:[%s5 + $0x180] sm:$0xff]
    %v852 = vld [vmem:[%s5 + $0x188] sm:$0xff]
    %v853 = vld [vmem:[%s5 + $0x190] sm:$0xff]
    %v854 = vld [vmem:[%s5 + $0x198] sm:$0xff]
    %v855 = vld [vmem:[%s5 + $0x1a0] sm:$0xff]
    %v856 = vld [vmem:[%s5 + $0x1a8] sm:$0xff]
    %v857 = vld [vmem:[%s5 + $0x1b0] sm:$0xff]
    %v858 = vld [vmem:[%s5 + $0x1b8] sm:$0xff]
    %v859 = vld [vmem:[%s5 + $0x1c0] sm:$0xff]
    %v860 = vld [vmem:[%s5 + $0x1c8] sm:$0xff]
    %v861 = vld [vmem:[%s5 + $0x1d0] sm:$0xff]
    %v862 = vld [vmem:[%s5 + $0x1d8] sm:$0xff]
    %v863 = vld [vmem:[%s5 + $0x1e0] sm:$0xff]
    %v864 = vld [vmem:[%s5 + $0x1e8] sm:$0xff]
    %v865 = vld [vmem:[%s5 + $0x1f0] sm:$0xff]
    %v866 = vld [vmem:[%s5 + $0x1f8] sm:$0xff]
    %867 = vmatprep.subr.mxu0 %v834
    %868 = vmatpush1.msra.mxu0 %v833
    %869 = vmatprep.subr.mxu0 %v832
    %870 = vmatpush1.msra.mxu0 %v831
    %871 = vmatprep.subr.mxu0 %v830
    %872 = vmatpush1.msra.mxu0 %v829
    %873 = vmatprep.subr.mxu0 %v828
    %874 = vmatpush1.msra.mxu0 %v827
    %875 = vmatprep.subr.mxu0 %v826
    %876 = vmatpush1.msra.mxu0 %v825
    %877 = vmatprep.subr.mxu0 %v824
    %878 = vmatpush1.msra.mxu0 %v823
    %879 = vmatprep.subr.mxu0 %v822
    %880 = vmatpush1.msra.mxu0 %v821
    %881 = vmatprep.subr.mxu0 %v820
    %882 = vmatpush1.msra.mxu0 %v819
    %883 = vmatprep.subr.mxu0 %v818
    %884 = vmatpush1.msra.mxu0 %v817
    %885 = vmatprep.subr.mxu0 %v816
    %886 = vmatpush1.msra.mxu0 %v815
    %887 = vmatprep.subr.mxu0 %v814
    %888 = vmatpush1.msra.mxu0 %v813
    %889 = vmatprep.subr.mxu0 %v812
    %890 = vmatpush1.msra.mxu0 %v811
    %891 = vmatprep.subr.mxu0 %v810
    %892 = vmatpush1.msra.mxu0 %v809
    %893 = vmatprep.subr.mxu0 %v808
    %894 = vmatpush1.msra.mxu0 %v807
    %895 = vmatprep.subr.mxu0 %v806
    %896 = vmatpush1.msra.mxu0 %v805
    %897 = vmatprep.subr.mxu0 %v804
    %898 = vmatpush1.msra.mxu0 %v803
    %899 = vmatprep.subr.mxu0 %v866
    %900 = vmatpush2.msra.mxu0 %v865
    %901 = vmatprep.subr.mxu0 %v864
    %902 = vmatpush2.msra.mxu0 %v863
    %903 = vmatprep.subr.mxu0 %v862
    %904 = vmatpush2.msra.mxu0 %v861
    %905 = vmatprep.subr.mxu0 %v860
    %906 = vmatpush2.msra.mxu0 %v859
    %907 = vmatprep.subr.mxu0 %v858
    %908 = vmatpush2.msra.mxu0 %v857
    %909 = vmatprep.subr.mxu0 %v856
    %910 = vmatpush2.msra.mxu0 %v855
    %911 = vmatprep.subr.mxu0 %v854
    %912 = vmatpush2.msra.mxu0 %v853
    %913 = vmatprep.subr.mxu0 %v852
    %914 = vmatpush2.msra.mxu0 %v851
    %915 = vmatprep.subr.mxu0 %v850
    %916 = vmatpush2.msra.mxu0 %v849
    %917 = vmatprep.subr.mxu0 %v848
    %918 = vmatpush2.msra.mxu0 %v847
    %919 = vmatprep.subr.mxu0 %v846
    %920 = vmatpush2.msra.mxu0 %v845
    %921 = vmatprep.subr.mxu0 %v844
    %922 = vmatpush2.msra.mxu0 %v843
    %923 = vmatprep.subr.mxu0 %v842
    %924 = vmatpush2.msra.mxu0 %v841
    %925 = vmatprep.subr.mxu0 %v840
    %926 = vmatpush2.msra.mxu0 %v839
    %927 = vmatprep.subr.mxu0 %v838
    %928 = vmatpush2.msra.mxu0 %v837
    %929 = vmatprep.subr.mxu0 %v836
    %930 = vmatpush2.msra.mxu0 %v835
    %931 = vmatprep.mubr.f32.mxu0 %v802
    %932 = vmatmul.mubr.f32.gmra.mxu0 %v801
    %v933 = vpop.f32.mrf.mxu0
    %v934 = vadd.f32 0.0, %v933
    %v935 = vpop.f32.mrf.mxu0
    %v936 = vadd.f32 0.0, %v935
    %937 = vdwg.mxu0
    %v938 = vlaneseq
    %v939 = vshrl.u32 %v938, 7
    %v940 = vsub.s32 0, %v939
    %v941 = vrot.slane %v934, %v940
    %v942 = vlaneseq
    %v943 = vshrl.u32 %v942, 7
    %v944 = vsub.s32 0, %v943
    %v945 = vrot.slane %v936, %v944
    %v946 = vsub.f32 %v786, %v941
    %v947 = vsub.f32 %v787, %v945
    %v948 = vmul.f32 %v946, %v946
    %v949 = vmul.f32 %v947, %v947
    %v950 = vrot.slane %v948, 4
    %v951 = vadd.f32 %v948, %v950
    %v952 = vrot.slane %v951, 2
    %v953 = vadd.f32 %v951, %v952
    %v954 = vrot.slane %v953, 1
    %v955 = vadd.f32 %v953, %v954
    %v956 = vrot.slane %v949, 4
    %v957 = vadd.f32 %v949, %v956
    %v958 = vrot.slane %v957, 2
    %v959 = vadd.f32 %v957, %v958
    %v960 = vrot.slane %v959, 1
    %v961 = vadd.f32 %v959, %v960
    %v962 = vmul.f32 %v955, %v800
    %v963 = vmul.f32 %v961, %v800
    %964 = vmatprep.subr.mxu0 %v834
    %965 = vmatpush1.msra.mxu0 %v833
    %966 = vmatprep.subr.mxu0 %v832
    %967 = vmatpush1.msra.mxu0 %v831
    %968 = vmatprep.subr.mxu0 %v830
    %969 = vmatpush1.msra.mxu0 %v829
    %970 = vmatprep.subr.mxu0 %v828
    %971 = vmatpush1.msra.mxu0 %v827
    %972 = vmatprep.subr.mxu0 %v826
    %973 = vmatpush1.msra.mxu0 %v825
    %974 = vmatprep.subr.mxu0 %v824
    %975 = vmatpush1.msra.mxu0 %v823
    %976 = vmatprep.subr.mxu0 %v822
    %977 = vmatpush1.msra.mxu0 %v821
    %978 = vmatprep.subr.mxu0 %v820
    %979 = vmatpush1.msra.mxu0 %v819
    %980 = vmatprep.subr.mxu0 %v818
    %981 = vmatpush1.msra.mxu0 %v817
    %982 = vmatprep.subr.mxu0 %v816
    %983 = vmatpush1.msra.mxu0 %v815
    %984 = vmatprep.subr.mxu0 %v814
    %985 = vmatpush1.msra.mxu0 %v813
    %986 = vmatprep.subr.mxu0 %v812
    %987 = vmatpush1.msra.mxu0 %v811
    %988 = vmatprep.subr.mxu0 %v810
    %989 = vmatpush1.msra.mxu0 %v809
    %990 = vmatprep.subr.mxu0 %v808
    %991 = vmatpush1.msra.mxu0 %v807
    %992 = vmatprep.subr.mxu0 %v806
    %993 = vmatpush1.msra.mxu0 %v805
    %994 = vmatprep.subr.mxu0 %v804
    %995 = vmatpush1.msra.mxu0 %v803
    %996 = vmatprep.subr.mxu0 %v866
    %997 = vmatpush2.msra.mxu0 %v865
    %998 = vmatprep.subr.mxu0 %v864
    %999 = vmatpush2.msra.mxu0 %v863
    %1000 = vmatprep.subr.mxu0 %v862
    %1001 = vmatpush2.msra.mxu0 %v861
    %1002 = vmatprep.subr.mxu0 %v860
    %1003 = vmatpush2.msra.mxu0 %v859
    %1004 = vmatprep.subr.mxu0 %v858
    %1005 = vmatpush2.msra.mxu0 %v857
    %1006 = vmatprep.subr.mxu0 %v856
    %1007 = vmatpush2.msra.mxu0 %v855
    %1008 = vmatprep.subr.mxu0 %v854
    %1009 = vmatpush2.msra.mxu0 %v853
    %1010 = vmatprep.subr.mxu0 %v852
    %1011 = vmatpush2.msra.mxu0 %v851
    %1012 = vmatprep.subr.mxu0 %v850
    %1013 = vmatpush2.msra.mxu0 %v849
    %1014 = vmatprep.subr.mxu0 %v848
    %1015 = vmatpush2.msra.mxu0 %v847
    %1016 = vmatprep.subr.mxu0 %v846
    %1017 = vmatpush2.msra.mxu0 %v845
    %1018 = vmatprep.subr.mxu0 %v844
    %1019 = vmatpush2.msra.mxu0 %v843
    %1020 = vmatprep.subr.mxu0 %v842
    %1021 = vmatpush2.msra.mxu0 %v841
    %1022 = vmatprep.subr.mxu0 %v840
    %1023 = vmatpush2.msra.mxu0 %v839
    %1024 = vmatprep.subr.mxu0 %v838
    %1025 = vmatpush2.msra.mxu0 %v837
    %1026 = vmatprep.subr.mxu0 %v836
    %1027 = vmatpush2.msra.mxu0 %v835
    %1028 = vmatprep.mubr.f32.mxu0 %v963
    %1029 = vmatmul.mubr.f32.gmra.mxu0 %v962
    %v1030 = vpop.f32.mrf.mxu0
    %v1031 = vadd.f32 1e-05, %v1030
    %v1032 = vpop.f32.mrf.mxu0
    %v1033 = vadd.f32 1e-05, %v1032
    %1034 = vdwg.mxu0
    %v1035 = vrsqrt.pop %v1031
    %v1036 = vrsqrt.pop %v1033
    %v1037 = vlaneseq
    %v1038 = vshrl.u32 %v1037, 7
    %v1039 = vsub.s32 0, %v1038
    %v1040 = vrot.slane %v1035, %v1039
    %v1041 = vlaneseq
    %v1042 = vshrl.u32 %v1041, 7
    %v1043 = vsub.s32 0, %v1042
    %v1044 = vrot.slane %v1036, %v1043
    %v1045 = vmul.f32 %v946, %v1040
    %v1046 = vmul.f32 %v947, %v1044
    %v1047 = vld [vmem:[%s6] sm:$0x3]
    %v1049 = vlaneseq
    %v1050 = vshrl.u32 %v1049, 7
    %v1051 = vsub.s32 0, %v1050
    %v1052 = vrot.slane %v1047, %v1051
    %v1053 = vlaneseq
    %v1054 = vshrl.u32 %v1053, 7
    %v1055 = vsub.s32 1, %v1054
    %v1056 = vrot.slane %v1047, %v1055
    %v1059 = vmul.f32 %v1045, %v1052
    %v1060 = vmul.f32 %v1046, %v1056
    %v1061 = vld [vmem:[#allocation4] sm:$0x3]
    %v1063 = vlaneseq
    %v1064 = vshrl.u32 %v1063, 7
    %v1065 = vsub.s32 0, %v1064
    %v1066 = vrot.slane %v1061, %v1065
    %v1067 = vlaneseq
    %v1068 = vshrl.u32 %v1067, 7
    %v1069 = vsub.s32 1, %v1068
    %v1070 = vrot.slane %v1061, %v1069
    %v1073 = vadd.f32 %v1059, %v1066
    %v1074 = vadd.f32 %v1060, %v1070
    %v1075 = vmax.f32 %v1073, 0.0
    %v1076 = vmax.f32 %v1074, 0.0
    %v1077 = vpack.c.bf16 %v1075, %v1075
    %v1078 = vpack.c.bf16 %v1076, %v1076
    %v1079 = vld [vmem:[#allocation2] sm:$0xff]
    %v1080 = vld [vmem:[#allocation2 + $0x8] sm:$0xff]
    %v1081 = vld [vmem:[#allocation2 + $0x10] sm:$0xff]
    %v1082 = vld [vmem:[#allocation2 + $0x18] sm:$0xff]
    %v1083 = vld [vmem:[#allocation2 + $0x20] sm:$0xff]
    %v1084 = vld [vmem:[#allocation2 + $0x28] sm:$0xff]
    %v1085 = vld [vmem:[#allocation2 + $0x30] sm:$0xff]
    %v1086 = vld [vmem:[#allocation2 + $0x38] sm:$0xff]
    %v1087 = vld [vmem:[#allocation2 + $0x40] sm:$0xff]
    %v1088 = vld [vmem:[#allocation2 + $0x48] sm:$0xff]
    %v1089 = vld [vmem:[#allocation2 + $0x50] sm:$0xff]
    %v1090 = vld [vmem:[#allocation2 + $0x58] sm:$0xff]
    %v1091 = vld [vmem:[#allocation2 + $0x60] sm:$0xff]
    %v1092 = vld [vmem:[#allocation2 + $0x68] sm:$0xff]
    %v1093 = vld [vmem:[#allocation2 + $0x70] sm:$0xff]
    %v1094 = vld [vmem:[#allocation2 + $0x78] sm:$0xff]
    %v1095 = vld [vmem:[#allocation2 + $0x80] sm:$0xff]
    %v1096 = vld [vmem:[#allocation2 + $0x88] sm:$0xff]
    %v1097 = vld [vmem:[#allocation2 + $0x90] sm:$0xff]
    %v1098 = vld [vmem:[#allocation2 + $0x98] sm:$0xff]
    %v1099 = vld [vmem:[#allocation2 + $0xa0] sm:$0xff]
    %v1100 = vld [vmem:[#allocation2 + $0xa8] sm:$0xff]
    %v1101 = vld [vmem:[#allocation2 + $0xb0] sm:$0xff]
    %v1102 = vld [vmem:[#allocation2 + $0xb8] sm:$0xff]
    %v1103 = vld [vmem:[#allocation2 + $0xc0] sm:$0xff]
    %v1104 = vld [vmem:[#allocation2 + $0xc8] sm:$0xff]
    %v1105 = vld [vmem:[#allocation2 + $0xd0] sm:$0xff]
    %v1106 = vld [vmem:[#allocation2 + $0xd8] sm:$0xff]
    %v1107 = vld [vmem:[#allocation2 + $0xe0] sm:$0xff]
    %v1108 = vld [vmem:[#allocation2 + $0xe8] sm:$0xff]
    %v1109 = vld [vmem:[#allocation2 + $0xf0] sm:$0xff]
    %v1110 = vld [vmem:[#allocation2 + $0xf8] sm:$0xff]
    %v1143 = vunpack.c.l.b16 %v1079
    %v1144 = vunpack.c.h.b16 %v1079
    %v1145 = vunpack.c.l.b16 %v1080
    %v1146 = vunpack.c.h.b16 %v1080
    %v1147 = vunpack.c.l.b16 %v1081
    %v1148 = vunpack.c.h.b16 %v1081
    %v1149 = vunpack.c.l.b16 %v1082
    %v1150 = vunpack.c.h.b16 %v1082
    %v1151 = vunpack.c.l.b16 %v1083
    %v1152 = vunpack.c.h.b16 %v1083
    %v1153 = vunpack.c.l.b16 %v1084
    %v1154 = vunpack.c.h.b16 %v1084
    %v1155 = vunpack.c.l.b16 %v1085
    %v1156 = vunpack.c.h.b16 %v1085
    %v1157 = vunpack.c.l.b16 %v1086
    %v1158 = vunpack.c.h.b16 %v1086
    %v1159 = vunpack.c.l.b16 %v1087
    %v1160 = vunpack.c.h.b16 %v1087
    %v1161 = vunpack.c.l.b16 %v1088
    %v1162 = vunpack.c.h.b16 %v1088
    %v1163 = vunpack.c.l.b16 %v1089
    %v1164 = vunpack.c.h.b16 %v1089
    %v1165 = vunpack.c.l.b16 %v1090
    %v1166 = vunpack.c.h.b16 %v1090
    %v1167 = vunpack.c.l.b16 %v1091
    %v1168 = vunpack.c.h.b16 %v1091
    %v1169 = vunpack.c.l.b16 %v1092
    %v1170 = vunpack.c.h.b16 %v1092
    %v1171 = vunpack.c.l.b16 %v1093
    %v1172 = vunpack.c.h.b16 %v1093
    %v1173 = vunpack.c.l.b16 %v1094
    %v1174 = vunpack.c.h.b16 %v1094
    %v1175 = vunpack.c.l.b16 %v1095
    %v1176 = vunpack.c.h.b16 %v1095
    %v1177 = vunpack.c.l.b16 %v1096
    %v1178 = vunpack.c.h.b16 %v1096
    %v1179 = vunpack.c.l.b16 %v1097
    %v1180 = vunpack.c.h.b16 %v1097
    %v1181 = vunpack.c.l.b16 %v1098
    %v1182 = vunpack.c.h.b16 %v1098
    %v1183 = vunpack.c.l.b16 %v1099
    %v1184 = vunpack.c.h.b16 %v1099
    %v1185 = vunpack.c.l.b16 %v1100
    %v1186 = vunpack.c.h.b16 %v1100
    %v1187 = vunpack.c.l.b16 %v1101
    %v1188 = vunpack.c.h.b16 %v1101
    %v1189 = vunpack.c.l.b16 %v1102
    %v1190 = vunpack.c.h.b16 %v1102
    %v1191 = vunpack.c.l.b16 %v1103
    %v1192 = vunpack.c.h.b16 %v1103
    %v1193 = vunpack.c.l.b16 %v1104
    %v1194 = vunpack.c.h.b16 %v1104
    %v1195 = vunpack.c.l.b16 %v1105
    %v1196 = vunpack.c.h.b16 %v1105
    %v1197 = vunpack.c.l.b16 %v1106
    %v1198 = vunpack.c.h.b16 %v1106
    %v1199 = vunpack.c.l.b16 %v1107
    %v1200 = vunpack.c.h.b16 %v1107
    %v1201 = vunpack.c.l.b16 %v1108
    %v1202 = vunpack.c.h.b16 %v1108
    %v1203 = vunpack.c.l.b16 %v1109
    %v1204 = vunpack.c.h.b16 %v1109
    %v1205 = vunpack.c.l.b16 %v1110
    %v1206 = vunpack.c.h.b16 %v1110
    %v1207 = vpack.c.b16 %v1145, %v1143
    %v1208 = vpack.c.b16 %v1146, %v1144
    %v1209 = vpack.c.b16 %v1149, %v1147
    %v1210 = vpack.c.b16 %v1150, %v1148
    %v1211 = vpack.c.b16 %v1153, %v1151
    %v1212 = vpack.c.b16 %v1154, %v1152
    %v1213 = vpack.c.b16 %v1157, %v1155
    %v1214 = vpack.c.b16 %v1158, %v1156
    %v1215 = vpack.c.b16 %v1161, %v1159
    %v1216 = vpack.c.b16 %v1162, %v1160
    %v1217 = vpack.c.b16 %v1165, %v1163
    %v1218 = vpack.c.b16 %v1166, %v1164
    %v1219 = vpack.c.b16 %v1169, %v1167
    %v1220 = vpack.c.b16 %v1170, %v1168
    %v1221 = vpack.c.b16 %v1173, %v1171
    %v1222 = vpack.c.b16 %v1174, %v1172
    %v1223 = vpack.c.b16 %v1177, %v1175
    %v1224 = vpack.c.b16 %v1178, %v1176
    %v1225 = vpack.c.b16 %v1181, %v1179
    %v1226 = vpack.c.b16 %v1182, %v1180
    %v1227 = vpack.c.b16 %v1185, %v1183
    %v1228 = vpack.c.b16 %v1186, %v1184
    %v1229 = vpack.c.b16 %v1189, %v1187
    %v1230 = vpack.c.b16 %v1190, %v1188
    %v1231 = vpack.c.b16 %v1193, %v1191
    %v1232 = vpack.c.b16 %v1194, %v1192
    %v1233 = vpack.c.b16 %v1197, %v1195
    %v1234 = vpack.c.b16 %v1198, %v1196
    %v1235 = vpack.c.b16 %v1201, %v1199
    %v1236 = vpack.c.b16 %v1202, %v1200
    %v1237 = vpack.c.b16 %v1205, %v1203
    %v1238 = vpack.c.b16 %v1206, %v1204
    %1271 = vmatprep.subr.bf16.mxu0 %v1222
    %1272 = vmatpush1.bf16.msra.mxu0 %v1221
    %1273 = vmatprep.subr.bf16.mxu0 %v1220
    %1274 = vmatpush1.bf16.msra.mxu0 %v1219
    %1275 = vmatprep.subr.bf16.mxu0 %v1218
    %1276 = vmatpush1.bf16.msra.mxu0 %v1217
    %1277 = vmatprep.subr.bf16.mxu0 %v1216
    %1278 = vmatpush1.bf16.msra.mxu0 %v1215
    %1279 = vmatprep.subr.bf16.mxu0 %v1214
    %1280 = vmatpush1.bf16.msra.mxu0 %v1213
    %1281 = vmatprep.subr.bf16.mxu0 %v1212
    %1282 = vmatpush1.bf16.msra.mxu0 %v1211
    %1283 = vmatprep.subr.bf16.mxu0 %v1210
    %1284 = vmatpush1.bf16.msra.mxu0 %v1209
    %1285 = vmatprep.subr.bf16.mxu0 %v1208
    %1286 = vmatpush1.bf16.msra.mxu0 %v1207
    %1287 = vmatprep.subr.bf16.mxu0 %v1238
    %1288 = vmatpush2.bf16.msra.mxu0 %v1237
    %1289 = vmatprep.subr.bf16.mxu0 %v1236
    %1290 = vmatpush2.bf16.msra.mxu0 %v1235
    %1291 = vmatprep.subr.bf16.mxu0 %v1234
    %1292 = vmatpush2.bf16.msra.mxu0 %v1233
    %1293 = vmatprep.subr.bf16.mxu0 %v1232
    %1294 = vmatpush2.bf16.msra.mxu0 %v1231
    %1295 = vmatprep.subr.bf16.mxu0 %v1230
    %1296 = vmatpush2.bf16.msra.mxu0 %v1229
    %1297 = vmatprep.subr.bf16.mxu0 %v1228
    %1298 = vmatpush2.bf16.msra.mxu0 %v1227
    %1299 = vmatprep.subr.bf16.mxu0 %v1226
    %1300 = vmatpush2.bf16.msra.mxu0 %v1225
    %1301 = vmatprep.subr.bf16.mxu0 %v1224
    %1302 = vmatpush2.bf16.msra.mxu0 %v1223
    %1303 = vmatprep.mubr.bf16.mxu0 %v1078
    %1304 = vmatmul.mubr.bf16.gmra.mxu0 %v1077
    %v1305 = vpop.f32.mrf.mxu0
    %v1306 = vadd.f32 0.0, %v1305
    %v1307 = vpop.f32.mrf.mxu0
    %v1308 = vadd.f32 0.0, %v1307
    %v1309 = vpop.f32.mrf.mxu0
    %v1310 = vpop.f32.mrf.mxu0
    %1311 = vdwg.mxu0
    %v1312 = vld [vmem:[%s4] sm:$0xff]
    %v1313 = vld [vmem:[%s4 + $0x8] sm:$0xff]
    %s1314 = scalar_lea.vmem [#allocation2], 256
    %v1315 = vld [vmem:[%s1314] sm:$0xff]
    %v1316 = vld [vmem:[%s1314 + $0x8] sm:$0xff]
    %v1317 = vld [vmem:[%s1314 + $0x10] sm:$0xff]
    %v1318 = vld [vmem:[%s1314 + $0x18] sm:$0xff]
    %v1319 = vld [vmem:[%s1314 + $0x20] sm:$0xff]
    %v1320 = vld [vmem:[%s1314 + $0x28] sm:$0xff]
    %v1321 = vld [vmem:[%s1314 + $0x30] sm:$0xff]
    %v1322 = vld [vmem:[%s1314 + $0x38] sm:$0xff]
    %v1323 = vld [vmem:[%s1314 + $0x40] sm:$0xff]
    %v1324 = vld [vmem:[%s1314 + $0x48] sm:$0xff]
    %v1325 = vld [vmem:[%s1314 + $0x50] sm:$0xff]
    %v1326 = vld [vmem:[%s1314 + $0x58] sm:$0xff]
    %v1327 = vld [vmem:[%s1314 + $0x60] sm:$0xff]
    %v1328 = vld [vmem:[%s1314 + $0x68] sm:$0xff]
    %v1329 = vld [vmem:[%s1314 + $0x70] sm:$0xff]
    %v1330 = vld [vmem:[%s1314 + $0x78] sm:$0xff]
    %v1331 = vld [vmem:[%s1314 + $0x80] sm:$0xff]
    %v1332 = vld [vmem:[%s1314 + $0x88] sm:$0xff]
    %v1333 = vld [vmem:[%s1314 + $0x90] sm:$0xff]
    %v1334 = vld [vmem:[%s1314 + $0x98] sm:$0xff]
    %v1335 = vld [vmem:[%s1314 + $0xa0] sm:$0xff]
    %v1336 = vld [vmem:[%s1314 + $0xa8] sm:$0xff]
    %v1337 = vld [vmem:[%s1314 + $0xb0] sm:$0xff]
    %v1338 = vld [vmem:[%s1314 + $0xb8] sm:$0xff]
    %v1339 = vld [vmem:[%s1314 + $0xc0] sm:$0xff]
    %v1340 = vld [vmem:[%s1314 + $0xc8] sm:$0xff]
    %v1341 = vld [vmem:[%s1314 + $0xd0] sm:$0xff]
    %v1342 = vld [vmem:[%s1314 + $0xd8] sm:$0xff]
    %v1343 = vld [vmem:[%s1314 + $0xe0] sm:$0xff]
    %v1344 = vld [vmem:[%s1314 + $0xe8] sm:$0xff]
    %v1345 = vld [vmem:[%s1314 + $0xf0] sm:$0xff]
    %v1346 = vld [vmem:[%s1314 + $0xf8] sm:$0xff]
    %v1379 = vunpack.c.l.b16 %v1315
    %v1380 = vunpack.c.h.b16 %v1315
    %v1381 = vunpack.c.l.b16 %v1316
    %v1382 = vunpack.c.h.b16 %v1316
    %v1383 = vunpack.c.l.b16 %v1317
    %v1384 = vunpack.c.h.b16 %v1317
    %v1385 = vunpack.c.l.b16 %v1318
    %v1386 = vunpack.c.h.b16 %v1318
    %v1387 = vunpack.c.l.b16 %v1319
    %v1388 = vunpack.c.h.b16 %v1319
    %v1389 = vunpack.c.l.b16 %v1320
    %v1390 = vunpack.c.h.b16 %v1320
    %v1391 = vunpack.c.l.b16 %v1321
    %v1392 = vunpack.c.h.b16 %v1321
    %v1393 = vunpack.c.l.b16 %v1322
    %v1394 = vunpack.c.h.b16 %v1322
    %v1395 = vunpack.c.l.b16 %v1323
    %v1396 = vunpack.c.h.b16 %v1323
    %v1397 = vunpack.c.l.b16 %v1324
    %v1398 = vunpack.c.h.b16 %v1324
    %v1399 = vunpack.c.l.b16 %v1325
    %v1400 = vunpack.c.h.b16 %v1325
    %v1401 = vunpack.c.l.b16 %v1326
    %v1402 = vunpack.c.h.b16 %v1326
    %v1403 = vunpack.c.l.b16 %v1327
    %v1404 = vunpack.c.h.b16 %v1327
    %v1405 = vunpack.c.l.b16 %v1328
    %v1406 = vunpack.c.h.b16 %v1328
    %v1407 = vunpack.c.l.b16 %v1329
    %v1408 = vunpack.c.h.b16 %v1329
    %v1409 = vunpack.c.l.b16 %v1330
    %v1410 = vunpack.c.h.b16 %v1330
    %v1411 = vunpack.c.l.b16 %v1331
    %v1412 = vunpack.c.h.b16 %v1331
    %v1413 = vunpack.c.l.b16 %v1332
    %v1414 = vunpack.c.h.b16 %v1332
    %v1415 = vunpack.c.l.b16 %v1333
    %v1416 = vunpack.c.h.b16 %v1333
    %v1417 = vunpack.c.l.b16 %v1334
    %v1418 = vunpack.c.h.b16 %v1334
    %v1419 = vunpack.c.l.b16 %v1335
    %v1420 = vunpack.c.h.b16 %v1335
    %v1421 = vunpack.c.l.b16 %v1336
    %v1422 = vunpack.c.h.b16 %v1336
    %v1423 = vunpack.c.l.b16 %v1337
    %v1424 = vunpack.c.h.b16 %v1337
    %v1425 = vunpack.c.l.b16 %v1338
    %v1426 = vunpack.c.h.b16 %v1338
    %v1427 = vunpack.c.l.b16 %v1339
    %v1428 = vunpack.c.h.b16 %v1339
    %v1429 = vunpack.c.l.b16 %v1340
    %v1430 = vunpack.c.h.b16 %v1340
    %v1431 = vunpack.c.l.b16 %v1341
    %v1432 = vunpack.c.h.b16 %v1341
    %v1433 = vunpack.c.l.b16 %v1342
    %v1434 = vunpack.c.h.b16 %v1342
    %v1435 = vunpack.c.l.b16 %v1343
    %v1436 = vunpack.c.h.b16 %v1343
    %v1437 = vunpack.c.l.b16 %v1344
    %v1438 = vunpack.c.h.b16 %v1344
    %v1439 = vunpack.c.l.b16 %v1345
    %v1440 = vunpack.c.h.b16 %v1345
    %v1441 = vunpack.c.l.b16 %v1346
    %v1442 = vunpack.c.h.b16 %v1346
    %v1443 = vpack.c.b16 %v1381, %v1379
    %v1444 = vpack.c.b16 %v1382, %v1380
    %v1445 = vpack.c.b16 %v1385, %v1383
    %v1446 = vpack.c.b16 %v1386, %v1384
    %v1447 = vpack.c.b16 %v1389, %v1387
    %v1448 = vpack.c.b16 %v1390, %v1388
    %v1449 = vpack.c.b16 %v1393, %v1391
    %v1450 = vpack.c.b16 %v1394, %v1392
    %v1451 = vpack.c.b16 %v1397, %v1395
    %v1452 = vpack.c.b16 %v1398, %v1396
    %v1453 = vpack.c.b16 %v1401, %v1399
    %v1454 = vpack.c.b16 %v1402, %v1400
    %v1455 = vpack.c.b16 %v1405, %v1403
    %v1456 = vpack.c.b16 %v1406, %v1404
    %v1457 = vpack.c.b16 %v1409, %v1407
    %v1458 = vpack.c.b16 %v1410, %v1408
    %v1459 = vpack.c.b16 %v1413, %v1411
    %v1460 = vpack.c.b16 %v1414, %v1412
    %v1461 = vpack.c.b16 %v1417, %v1415
    %v1462 = vpack.c.b16 %v1418, %v1416
    %v1463 = vpack.c.b16 %v1421, %v1419
    %v1464 = vpack.c.b16 %v1422, %v1420
    %v1465 = vpack.c.b16 %v1425, %v1423
    %v1466 = vpack.c.b16 %v1426, %v1424
    %v1467 = vpack.c.b16 %v1429, %v1427
    %v1468 = vpack.c.b16 %v1430, %v1428
    %v1469 = vpack.c.b16 %v1433, %v1431
    %v1470 = vpack.c.b16 %v1434, %v1432
    %v1471 = vpack.c.b16 %v1437, %v1435
    %v1472 = vpack.c.b16 %v1438, %v1436
    %v1473 = vpack.c.b16 %v1441, %v1439
    %v1474 = vpack.c.b16 %v1442, %v1440
    %1507 = vmatprep.subr.bf16.mxu0 %v1458
    %1508 = vmatpush1.bf16.msra.mxu0 %v1457
    %1509 = vmatprep.subr.bf16.mxu0 %v1456
    %1510 = vmatpush1.bf16.msra.mxu0 %v1455
    %1511 = vmatprep.subr.bf16.mxu0 %v1454
    %1512 = vmatpush1.bf16.msra.mxu0 %v1453
    %1513 = vmatprep.subr.bf16.mxu0 %v1452
    %1514 = vmatpush1.bf16.msra.mxu0 %v1451
    %1515 = vmatprep.subr.bf16.mxu0 %v1450
    %1516 = vmatpush1.bf16.msra.mxu0 %v1449
    %1517 = vmatprep.subr.bf16.mxu0 %v1448
    %1518 = vmatpush1.bf16.msra.mxu0 %v1447
    %1519 = vmatprep.subr.bf16.mxu0 %v1446
    %1520 = vmatpush1.bf16.msra.mxu0 %v1445
    %1521 = vmatprep.subr.bf16.mxu0 %v1444
    %1522 = vmatpush1.bf16.msra.mxu0 %v1443
    %1523 = vmatprep.subr.bf16.mxu0 %v1474
    %1524 = vmatpush2.bf16.msra.mxu0 %v1473
    %1525 = vmatprep.subr.bf16.mxu0 %v1472
    %1526 = vmatpush2.bf16.msra.mxu0 %v1471
    %1527 = vmatprep.subr.bf16.mxu0 %v1470
    %1528 = vmatpush2.bf16.msra.mxu0 %v1469
    %1529 = vmatprep.subr.bf16.mxu0 %v1468
    %1530 = vmatpush2.bf16.msra.mxu0 %v1467
    %1531 = vmatprep.subr.bf16.mxu0 %v1466
    %1532 = vmatpush2.bf16.msra.mxu0 %v1465
    %1533 = vmatprep.subr.bf16.mxu0 %v1464
    %1534 = vmatpush2.bf16.msra.mxu0 %v1463
    %1535 = vmatprep.subr.bf16.mxu0 %v1462
    %1536 = vmatpush2.bf16.msra.mxu0 %v1461
    %1537 = vmatprep.subr.bf16.mxu0 %v1460
    %1538 = vmatpush2.bf16.msra.mxu0 %v1459
    %1539 = vmatprep.mubr.bf16.mxu0 %v1078
    %1540 = vmatmul.mubr.bf16.gmra.mxu0 %v1077
    %v1541 = vpop.f32.mrf.mxu0
    %v1542 = vadd.f32 0.0, %v1541
    %v1543 = vpop.f32.mrf.mxu0
    %v1544 = vadd.f32 0.0, %v1543
    %v1545 = vpop.f32.mrf.mxu0
    %v1546 = vpop.f32.mrf.mxu0
    %1547 = vdwg.mxu0
    %s1548 = scalar_lea.vmem %s4, 16
    %v1549 = vld [vmem:[%s1548] sm:$0xff]
    %v1550 = vld [vmem:[%s1548 + $0x8] sm:$0xff]
    %vm1551 = vcmask 64512
    %v1553 = vsel %vm1551, %v1549, 0
    %v1556 = vsel %vm1551, %v1550, 0
    %1558 = vmatprep.subr.mxu0 0.0
    %1559 = vmatpush1.msra.mxu0 0.0
    %1560 = vmatprep.subr.mxu0 0.0
    %1561 = vmatpush1.msra.mxu0 0.0
    %1562 = vmatprep.subr.mxu0 0.0
    %1563 = vmatpush1.msra.mxu0 0.0
    %1564 = vmatprep.subr.mxu0 0.0
    %1565 = vmatpush1.msra.mxu0 0.0
    %1566 = vmatprep.subr.mxu0 0.0
    %1567 = vmatpush1.msra.mxu0 0.0
    %1568 = vmatprep.subr.mxu0 0.0
    %1569 = vmatpush1.msra.mxu0 0.0
    %1570 = vmatprep.subr.mxu0 0.0
    %1571 = vmatpush1.msra.mxu0 0.0
    %1572 = vmatprep.subr.mxu0 0.0
    %1573 = vmatpush1.msra.mxu0 0.0
    %1574 = vmatprep.subr.mxu0 0.0
    %1575 = vmatpush1.msra.mxu0 0.0
    %1576 = vmatprep.subr.mxu0 0.0
    %1577 = vmatpush1.msra.mxu0 0.0
    %1578 = vmatprep.subr.mxu0 0.0
    %1579 = vmatpush1.msra.mxu0 0.0
    %1580 = vmatprep.subr.mxu0 0.0
    %1581 = vmatpush1.msra.mxu0 0.0
    %1582 = vmatprep.subr.mxu0 0.0
    %1583 = vmatpush1.msra.mxu0 0.0
    %1584 = vmatprep.subr.mxu0 0.0
    %1585 = vmatpush1.msra.mxu0 0.0
    %1586 = vmatprep.subr.mxu0 0.0
    %1587 = vmatpush1.msra.mxu0 0.0
    %1588 = vmatprep.subr.mxu0 %v1544
    %1589 = vmatpush1.msra.mxu0 %v1542
    %1590 = vmatprep.subr.mxu0 0.0
    %1591 = vmatpush2.msra.mxu0 0.0
    %1592 = vmatprep.subr.mxu0 0.0
    %1593 = vmatpush2.msra.mxu0 0.0
    %1594 = vmatprep.subr.mxu0 0.0
    %1595 = vmatpush2.msra.mxu0 0.0
    %1596 = vmatprep.subr.mxu0 0.0
    %1597 = vmatpush2.msra.mxu0 0.0
    %1598 = vmatprep.subr.mxu0 0.0
    %1599 = vmatpush2.msra.mxu0 0.0
    %1600 = vmatprep.subr.mxu0 0.0
    %1601 = vmatpush2.msra.mxu0 0.0
    %1602 = vmatprep.subr.mxu0 0.0
    %1603 = vmatpush2.msra.mxu0 0.0
    %1604 = vmatprep.subr.mxu0 0.0
    %1605 = vmatpush2.msra.mxu0 0.0
    %1606 = vmatprep.subr.mxu0 0.0
    %1607 = vmatpush2.msra.mxu0 0.0
    %1608 = vmatprep.subr.mxu0 0.0
    %1609 = vmatpush2.msra.mxu0 0.0
    %1610 = vmatprep.subr.mxu0 0.0
    %1611 = vmatpush2.msra.mxu0 0.0
    %1612 = vmatprep.subr.mxu0 0.0
    %1613 = vmatpush2.msra.mxu0 0.0
    %1614 = vmatprep.subr.mxu0 0.0
    %1615 = vmatpush2.msra.mxu0 0.0
    %1616 = vmatprep.subr.mxu0 0.0
    %1617 = vmatpush2.msra.mxu0 0.0
    %1618 = vmatprep.subr.mxu0 0.0
    %1619 = vmatpush2.msra.mxu0 0.0
    %1620 = vmatprep.subr.mxu0 0.0
    %1621 = vmatpush2.msra.mxu0 0.0
    %1622 = vmatprep.mubr.f32.mxu0 0.0
    %1623 = vmatmul.mubr.f32.gmra.mxu0 %v1553
    %v1624 = vpop.f32.mrf.mxu0
    %v1625 = vadd.f32 0.0, %v1624
    %v1626 = vpop.f32.mrf.mxu0
    %v1627 = vadd.f32 0.0, %v1626
    %1628 = vmatprep.mubr.f32.mxu0 0.0
    %1629 = vmatmul.mubr.f32.gmra.mxu0 %v1556
    %v1630 = vpop.f32.mrf.mxu0
    %v1631 = vadd.f32 0.0, %v1630
    %v1632 = vpop.f32.mrf.mxu0
    %v1633 = vadd.f32 0.0, %v1632
    %1634 = vdwg.mxu0
    %v1636 = vsel %vm1551, %v1312, 0
    %v1639 = vsel %vm1551, %v1313, 0
    %1641 = vmatprep.subr.mxu0 0.0
    %1642 = vmatpush1.msra.mxu0 0.0
    %1643 = vmatprep.subr.mxu0 0.0
    %1644 = vmatpush1.msra.mxu0 0.0
    %1645 = vmatprep.subr.mxu0 0.0
    %1646 = vmatpush1.msra.mxu0 0.0
    %1647 = vmatprep.subr.mxu0 0.0
    %1648 = vmatpush1.msra.mxu0 0.0
    %1649 = vmatprep.subr.mxu0 0.0
    %1650 = vmatpush1.msra.mxu0 0.0
    %1651 = vmatprep.subr.mxu0 0.0
    %1652 = vmatpush1.msra.mxu0 0.0
    %1653 = vmatprep.subr.mxu0 0.0
    %1654 = vmatpush1.msra.mxu0 0.0
    %1655 = vmatprep.subr.mxu0 0.0
    %1656 = vmatpush1.msra.mxu0 0.0
    %1657 = vmatprep.subr.mxu0 0.0
    %1658 = vmatpush1.msra.mxu0 0.0
    %1659 = vmatprep.subr.mxu0 0.0
    %1660 = vmatpush1.msra.mxu0 0.0
    %1661 = vmatprep.subr.mxu0 0.0
    %1662 = vmatpush1.msra.mxu0 0.0
    %1663 = vmatprep.subr.mxu0 0.0
    %1664 = vmatpush1.msra.mxu0 0.0
    %1665 = vmatprep.subr.mxu0 0.0
    %1666 = vmatpush1.msra.mxu0 0.0
    %1667 = vmatprep.subr.mxu0 0.0
    %1668 = vmatpush1.msra.mxu0 0.0
    %1669 = vmatprep.subr.mxu0 0.0
    %1670 = vmatpush1.msra.mxu0 0.0
    %1671 = vmatprep.subr.mxu0 %v1308
    %1672 = vmatpush1.msra.mxu0 %v1306
    %1673 = vmatprep.subr.mxu0 0.0
    %1674 = vmatpush2.msra.mxu0 0.0
    %1675 = vmatprep.subr.mxu0 0.0
    %1676 = vmatpush2.msra.mxu0 0.0
    %1677 = vmatprep.subr.mxu0 0.0
    %1678 = vmatpush2.msra.mxu0 0.0
    %1679 = vmatprep.subr.mxu0 0.0
    %1680 = vmatpush2.msra.mxu0 0.0
    %1681 = vmatprep.subr.mxu0 0.0
    %1682 = vmatpush2.msra.mxu0 0.0
    %1683 = vmatprep.subr.mxu0 0.0
    %1684 = vmatpush2.msra.mxu0 0.0
    %1685 = vmatprep.subr.mxu0 0.0
    %1686 = vmatpush2.msra.mxu0 0.0
    %1687 = vmatprep.subr.mxu0 0.0
    %1688 = vmatpush2.msra.mxu0 0.0
    %1689 = vmatprep.subr.mxu0 0.0
    %1690 = vmatpush2.msra.mxu0 0.0
    %1691 = vmatprep.subr.mxu0 0.0
    %1692 = vmatpush2.msra.mxu0 0.0
    %1693 = vmatprep.subr.mxu0 0.0
    %1694 = vmatpush2.msra.mxu0 0.0
    %1695 = vmatprep.subr.mxu0 0.0
    %1696 = vmatpush2.msra.mxu0 0.0
    %1697 = vmatprep.subr.mxu0 0.0
    %1698 = vmatpush2.msra.mxu0 0.0
    %1699 = vmatprep.subr.mxu0 0.0
    %1700 = vmatpush2.msra.mxu0 0.0
    %1701 = vmatprep.subr.mxu0 0.0
    %1702 = vmatpush2.msra.mxu0 0.0
    %1703 = vmatprep.subr.mxu0 0.0
    %1704 = vmatpush2.msra.mxu0 0.0
    %1705 = vmatprep.mubr.f32.mxu0 0.0
    %1706 = vmatmul.mubr.f32.gmra.mxu0 %v1636
    %v1707 = vpop.f32.mrf.mxu0
    %v1708 = vadd.f32 %v1625, %v1707
    %v1709 = vpop.f32.mrf.mxu0
    %v1710 = vadd.f32 %v1627, %v1709
    %1711 = vmatprep.mubr.f32.mxu0 0.0
    %1712 = vmatmul.mubr.f32.gmra.mxu0 %v1639
    %v1713 = vpop.f32.mrf.mxu0
    %v1714 = vadd.f32 %v1631, %v1713
    %v1715 = vpop.f32.mrf.mxu0
    %v1716 = vadd.f32 %v1633, %v1715
    %1717 = vdwg.mxu0
    %s1718 = scalar_lea.vmem [#allocation2], 512
    %v1719 = vld [vmem:[%s1718] sm:$0xff]
    %v1720 = vld [vmem:[%s1718 + $0x8] sm:$0xff]
    %v1721 = vld [vmem:[%s1718 + $0x10] sm:$0xff]
    %v1722 = vld [vmem:[%s1718 + $0x18] sm:$0xff]
    %v1723 = vld [vmem:[%s1718 + $0x20] sm:$0xff]
    %v1724 = vld [vmem:[%s1718 + $0x28] sm:$0xff]
    %v1725 = vld [vmem:[%s1718 + $0x30] sm:$0xff]
    %v1726 = vld [vmem:[%s1718 + $0x38] sm:$0xff]
    %v1727 = vld [vmem:[%s1718 + $0x40] sm:$0xff]
    %v1728 = vld [vmem:[%s1718 + $0x48] sm:$0xff]
    %v1729 = vld [vmem:[%s1718 + $0x50] sm:$0xff]
    %v1730 = vld [vmem:[%s1718 + $0x58] sm:$0xff]
    %v1731 = vld [vmem:[%s1718 + $0x60] sm:$0xff]
    %v1732 = vld [vmem:[%s1718 + $0x68] sm:$0xff]
    %v1733 = vld [vmem:[%s1718 + $0x70] sm:$0xff]
    %v1734 = vld [vmem:[%s1718 + $0x78] sm:$0xff]
    %v1735 = vld [vmem:[%s1718 + $0x80] sm:$0xff]
    %v1736 = vld [vmem:[%s1718 + $0x88] sm:$0xff]
    %v1737 = vld [vmem:[%s1718 + $0x90] sm:$0xff]
    %v1738 = vld [vmem:[%s1718 + $0x98] sm:$0xff]
    %v1739 = vld [vmem:[%s1718 + $0xa0] sm:$0xff]
    %v1740 = vld [vmem:[%s1718 + $0xa8] sm:$0xff]
    %v1741 = vld [vmem:[%s1718 + $0xb0] sm:$0xff]
    %v1742 = vld [vmem:[%s1718 + $0xb8] sm:$0xff]
    %v1743 = vld [vmem:[%s1718 + $0xc0] sm:$0xff]
    %v1744 = vld [vmem:[%s1718 + $0xc8] sm:$0xff]
    %v1745 = vld [vmem:[%s1718 + $0xd0] sm:$0xff]
    %v1746 = vld [vmem:[%s1718 + $0xd8] sm:$0xff]
    %v1747 = vld [vmem:[%s1718 + $0xe0] sm:$0xff]
    %v1748 = vld [vmem:[%s1718 + $0xe8] sm:$0xff]
    %v1749 = vld [vmem:[%s1718 + $0xf0] sm:$0xff]
    %v1750 = vld [vmem:[%s1718 + $0xf8] sm:$0xff]
    %v1783 = vunpack.c.l.b16 %v1719
    %v1784 = vunpack.c.h.b16 %v1719
    %v1785 = vunpack.c.l.b16 %v1720
    %v1786 = vunpack.c.h.b16 %v1720
    %v1787 = vunpack.c.l.b16 %v1721
    %v1788 = vunpack.c.h.b16 %v1721
    %v1789 = vunpack.c.l.b16 %v1722
    %v1790 = vunpack.c.h.b16 %v1722
    %v1791 = vunpack.c.l.b16 %v1723
    %v1792 = vunpack.c.h.b16 %v1723
    %v1793 = vunpack.c.l.b16 %v1724
    %v1794 = vunpack.c.h.b16 %v1724
    %v1795 = vunpack.c.l.b16 %v1725
    %v1796 = vunpack.c.h.b16 %v1725
    %v1797 = vunpack.c.l.b16 %v1726
    %v1798 = vunpack.c.h.b16 %v1726
    %v1799 = vunpack.c.l.b16 %v1727
    %v1800 = vunpack.c.h.b16 %v1727
    %v1801 = vunpack.c.l.b16 %v1728
    %v1802 = vunpack.c.h.b16 %v1728
    %v1803 = vunpack.c.l.b16 %v1729
    %v1804 = vunpack.c.h.b16 %v1729
    %v1805 = vunpack.c.l.b16 %v1730
    %v1806 = vunpack.c.h.b16 %v1730
    %v1807 = vunpack.c.l.b16 %v1731
    %v1808 = vunpack.c.h.b16 %v1731
    %v1809 = vunpack.c.l.b16 %v1732
    %v1810 = vunpack.c.h.b16 %v1732
    %v1811 = vunpack.c.l.b16 %v1733
    %v1812 = vunpack.c.h.b16 %v1733
    %v1813 = vunpack.c.l.b16 %v1734
    %v1814 = vunpack.c.h.b16 %v1734
    %v1815 = vunpack.c.l.b16 %v1735
    %v1816 = vunpack.c.h.b16 %v1735
    %v1817 = vunpack.c.l.b16 %v1736
    %v1818 = vunpack.c.h.b16 %v1736
    %v1819 = vunpack.c.l.b16 %v1737
    %v1820 = vunpack.c.h.b16 %v1737
    %v1821 = vunpack.c.l.b16 %v1738
    %v1822 = vunpack.c.h.b16 %v1738
    %v1823 = vunpack.c.l.b16 %v1739
    %v1824 = vunpack.c.h.b16 %v1739
    %v1825 = vunpack.c.l.b16 %v1740
    %v1826 = vunpack.c.h.b16 %v1740
    %v1827 = vunpack.c.l.b16 %v1741
    %v1828 = vunpack.c.h.b16 %v1741
    %v1829 = vunpack.c.l.b16 %v1742
    %v1830 = vunpack.c.h.b16 %v1742
    %v1831 = vunpack.c.l.b16 %v1743
    %v1832 = vunpack.c.h.b16 %v1743
    %v1833 = vunpack.c.l.b16 %v1744
    %v1834 = vunpack.c.h.b16 %v1744
    %v1835 = vunpack.c.l.b16 %v1745
    %v1836 = vunpack.c.h.b16 %v1745
    %v1837 = vunpack.c.l.b16 %v1746
    %v1838 = vunpack.c.h.b16 %v1746
    %v1839 = vunpack.c.l.b16 %v1747
    %v1840 = vunpack.c.h.b16 %v1747
    %v1841 = vunpack.c.l.b16 %v1748
    %v1842 = vunpack.c.h.b16 %v1748
    %v1843 = vunpack.c.l.b16 %v1749
    %v1844 = vunpack.c.h.b16 %v1749
    %v1845 = vunpack.c.l.b16 %v1750
    %v1846 = vunpack.c.h.b16 %v1750
    %v1847 = vpack.c.b16 %v1785, %v1783
    %v1848 = vpack.c.b16 %v1786, %v1784
    %v1849 = vpack.c.b16 %v1789, %v1787
    %v1850 = vpack.c.b16 %v1790, %v1788
    %v1851 = vpack.c.b16 %v1793, %v1791
    %v1852 = vpack.c.b16 %v1794, %v1792
    %v1853 = vpack.c.b16 %v1797, %v1795
    %v1854 = vpack.c.b16 %v1798, %v1796
    %v1855 = vpack.c.b16 %v1801, %v1799
    %v1856 = vpack.c.b16 %v1802, %v1800
    %v1857 = vpack.c.b16 %v1805, %v1803
    %v1858 = vpack.c.b16 %v1806, %v1804
    %v1859 = vpack.c.b16 %v1809, %v1807
    %v1860 = vpack.c.b16 %v1810, %v1808
    %v1861 = vpack.c.b16 %v1813, %v1811
    %v1862 = vpack.c.b16 %v1814, %v1812
    %v1863 = vpack.c.b16 %v1817, %v1815
    %v1864 = vpack.c.b16 %v1818, %v1816
    %v1865 = vpack.c.b16 %v1821, %v1819
    %v1866 = vpack.c.b16 %v1822, %v1820
    %v1867 = vpack.c.b16 %v1825, %v1823
    %v1868 = vpack.c.b16 %v1826, %v1824
    %v1869 = vpack.c.b16 %v1829, %v1827
    %v1870 = vpack.c.b16 %v1830, %v1828
    %v1871 = vpack.c.b16 %v1833, %v1831
    %v1872 = vpack.c.b16 %v1834, %v1832
    %v1873 = vpack.c.b16 %v1837, %v1835
    %v1874 = vpack.c.b16 %v1838, %v1836
    %v1875 = vpack.c.b16 %v1841, %v1839
    %v1876 = vpack.c.b16 %v1842, %v1840
    %v1877 = vpack.c.b16 %v1845, %v1843
    %v1878 = vpack.c.b16 %v1846, %v1844
    %1911 = vmatprep.subr.bf16.mxu0 %v1862
    %1912 = vmatpush1.bf16.msra.mxu0 %v1861
    %1913 = vmatprep.subr.bf16.mxu0 %v1860
    %1914 = vmatpush1.bf16.msra.mxu0 %v1859
    %1915 = vmatprep.subr.bf16.mxu0 %v1858
    %1916 = vmatpush1.bf16.msra.mxu0 %v1857
    %1917 = vmatprep.subr.bf16.mxu0 %v1856
    %1918 = vmatpush1.bf16.msra.mxu0 %v1855
    %1919 = vmatprep.subr.bf16.mxu0 %v1854
    %1920 = vmatpush1.bf16.msra.mxu0 %v1853
    %1921 = vmatprep.subr.bf16.mxu0 %v1852
    %1922 = vmatpush1.bf16.msra.mxu0 %v1851
    %1923 = vmatprep.subr.bf16.mxu0 %v1850
    %1924 = vmatpush1.bf16.msra.mxu0 %v1849
    %1925 = vmatprep.subr.bf16.mxu0 %v1848
    %1926 = vmatpush1.bf16.msra.mxu0 %v1847
    %1927 = vmatprep.subr.bf16.mxu0 %v1878
    %1928 = vmatpush2.bf16.msra.mxu0 %v1877
    %1929 = vmatprep.subr.bf16.mxu0 %v1876
    %1930 = vmatpush2.bf16.msra.mxu0 %v1875
    %1931 = vmatprep.subr.bf16.mxu0 %v1874
    %1932 = vmatpush2.bf16.msra.mxu0 %v1873
    %1933 = vmatprep.subr.bf16.mxu0 %v1872
    %1934 = vmatpush2.bf16.msra.mxu0 %v1871
    %1935 = vmatprep.subr.bf16.mxu0 %v1870
    %1936 = vmatpush2.bf16.msra.mxu0 %v1869
    %1937 = vmatprep.subr.bf16.mxu0 %v1868
    %1938 = vmatpush2.bf16.msra.mxu0 %v1867
    %1939 = vmatprep.subr.bf16.mxu0 %v1866
    %1940 = vmatpush2.bf16.msra.mxu0 %v1865
    %1941 = vmatprep.subr.bf16.mxu0 %v1864
    %1942 = vmatpush2.bf16.msra.mxu0 %v1863
    %1943 = vmatprep.mubr.bf16.mxu0 %v1078
    %1944 = vmatmul.mubr.bf16.gmra.mxu0 %v1077
    %v1945 = vpop.f32.mrf.mxu0
    %v1946 = vadd.f32 0.0, %v1945
    %v1947 = vpop.f32.mrf.mxu0
    %v1948 = vadd.f32 0.0, %v1947
    %v1949 = vpop.f32.mrf.mxu0
    %v1950 = vpop.f32.mrf.mxu0
    %1951 = vdwg.mxu0
    %s1952 = scalar_lea.vmem %s4, 32
    %v1953 = vld [vmem:[%s1952] sm:$0xff]
    %v1954 = vld [vmem:[%s1952 + $0x8] sm:$0xff]
    %v1956 = vsel %vm1551, %v1953, 0
    %v1959 = vsel %vm1551, %v1954, 0
    %1961 = vmatprep.subr.mxu0 0.0
    %1962 = vmatpush1.msra.mxu0 0.0
    %1963 = vmatprep.subr.mxu0 0.0
    %1964 = vmatpush1.msra.mxu0 0.0
    %1965 = vmatprep.subr.mxu0 0.0
    %1966 = vmatpush1.msra.mxu0 0.0
    %1967 = vmatprep.subr.mxu0 0.0
    %1968 = vmatpush1.msra.mxu0 0.0
    %1969 = vmatprep.subr.mxu0 0.0
    %1970 = vmatpush1.msra.mxu0 0.0
    %1971 = vmatprep.subr.mxu0 0.0
    %1972 = vmatpush1.msra.mxu0 0.0
    %1973 = vmatprep.subr.mxu0 0.0
    %1974 = vmatpush1.msra.mxu0 0.0
    %1975 = vmatprep.subr.mxu0 0.0
    %1976 = vmatpush1.msra.mxu0 0.0
    %1977 = vmatprep.subr.mxu0 0.0
    %1978 = vmatpush1.msra.mxu0 0.0
    %1979 = vmatprep.subr.mxu0 0.0
    %1980 = vmatpush1.msra.mxu0 0.0
    %1981 = vmatprep.subr.mxu0 0.0
    %1982 = vmatpush1.msra.mxu0 0.0
    %1983 = vmatprep.subr.mxu0 0.0
    %1984 = vmatpush1.msra.mxu0 0.0
    %1985 = vmatprep.subr.mxu0 0.0
    %1986 = vmatpush1.msra.mxu0 0.0
    %1987 = vmatprep.subr.mxu0 0.0
    %1988 = vmatpush1.msra.mxu0 0.0
    %1989 = vmatprep.subr.mxu0 0.0
    %1990 = vmatpush1.msra.mxu0 0.0
    %1991 = vmatprep.subr.mxu0 %v1948
    %1992 = vmatpush1.msra.mxu0 %v1946
    %1993 = vmatprep.subr.mxu0 0.0
    %1994 = vmatpush2.msra.mxu0 0.0
    %1995 = vmatprep.subr.mxu0 0.0
    %1996 = vmatpush2.msra.mxu0 0.0
    %1997 = vmatprep.subr.mxu0 0.0
    %1998 = vmatpush2.msra.mxu0 0.0
    %1999 = vmatprep.subr.mxu0 0.0
    %2000 = vmatpush2.msra.mxu0 0.0
    %2001 = vmatprep.subr.mxu0 0.0
    %2002 = vmatpush2.msra.mxu0 0.0
    %2003 = vmatprep.subr.mxu0 0.0
    %2004 = vmatpush2.msra.mxu0 0.0
    %2005 = vmatprep.subr.mxu0 0.0
    %2006 = vmatpush2.msra.mxu0 0.0
    %2007 = vmatprep.subr.mxu0 0.0
    %2008 = vmatpush2.msra.mxu0 0.0
    %2009 = vmatprep.subr.mxu0 0.0
    %2010 = vmatpush2.msra.mxu0 0.0
    %2011 = vmatprep.subr.mxu0 0.0
    %2012 = vmatpush2.msra.mxu0 0.0
    %2013 = vmatprep.subr.mxu0 0.0
    %2014 = vmatpush2.msra.mxu0 0.0
    %2015 = vmatprep.subr.mxu0 0.0
    %2016 = vmatpush2.msra.mxu0 0.0
    %2017 = vmatprep.subr.mxu0 0.0
    %2018 = vmatpush2.msra.mxu0 0.0
    %2019 = vmatprep.subr.mxu0 0.0
    %2020 = vmatpush2.msra.mxu0 0.0
    %2021 = vmatprep.subr.mxu0 0.0
    %2022 = vmatpush2.msra.mxu0 0.0
    %2023 = vmatprep.subr.mxu0 0.0
    %2024 = vmatpush2.msra.mxu0 0.0
    %2025 = vmatprep.mubr.f32.mxu0 0.0
    %2026 = vmatmul.mubr.f32.gmra.mxu0 %v1956
    %v2027 = vpop.f32.mrf.mxu0
    %v2028 = vadd.f32 0.0, %v2027
    %v2029 = vpop.f32.mrf.mxu0
    %v2030 = vadd.f32 0.0, %v2029
    %2031 = vmatprep.mubr.f32.mxu0 0.0
    %2032 = vmatmul.mubr.f32.gmra.mxu0 %v1959
    %v2033 = vpop.f32.mrf.mxu0
    %v2034 = vadd.f32 0.0, %v2033
    %v2035 = vpop.f32.mrf.mxu0
    %v2036 = vadd.f32 0.0, %v2035
    %2037 = vdwg.mxu0
    %v2038 = vadd.f32 %v1708, %v2028
    %v2039 = vadd.f32 %v1710, %v2030
    %v2040 = vadd.f32 %v1714, %v2034
    %v2041 = vadd.f32 %v1716, %v2036
    %s2042 = scalar_lea.vmem [#allocation2], 768
    %v2043 = vld [vmem:[%s2042] sm:$0xff]
    %v2044 = vld [vmem:[%s2042 + $0x8] sm:$0xff]
    %v2045 = vld [vmem:[%s2042 + $0x10] sm:$0xff]
    %v2046 = vld [vmem:[%s2042 + $0x18] sm:$0xff]
    %v2047 = vld [vmem:[%s2042 + $0x20] sm:$0xff]
    %v2048 = vld [vmem:[%s2042 + $0x28] sm:$0xff]
    %v2049 = vld [vmem:[%s2042 + $0x30] sm:$0xff]
    %v2050 = vld [vmem:[%s2042 + $0x38] sm:$0xff]
    %v2051 = vld [vmem:[%s2042 + $0x40] sm:$0xff]
    %v2052 = vld [vmem:[%s2042 + $0x48] sm:$0xff]
    %v2053 = vld [vmem:[%s2042 + $0x50] sm:$0xff]
    %v2054 = vld [vmem:[%s2042 + $0x58] sm:$0xff]
    %v2055 = vld [vmem:[%s2042 + $0x60] sm:$0xff]
    %v2056 = vld [vmem:[%s2042 + $0x68] sm:$0xff]
    %v2057 = vld [vmem:[%s2042 + $0x70] sm:$0xff]
    %v2058 = vld [vmem:[%s2042 + $0x78] sm:$0xff]
    %v2059 = vld [vmem:[%s2042 + $0x80] sm:$0xff]
    %v2060 = vld [vmem:[%s2042 + $0x88] sm:$0xff]
    %v2061 = vld [vmem:[%s2042 + $0x90] sm:$0xff]
    %v2062 = vld [vmem:[%s2042 + $0x98] sm:$0xff]
    %v2063 = vld [vmem:[%s2042 + $0xa0] sm:$0xff]
    %v2064 = vld [vmem:[%s2042 + $0xa8] sm:$0xff]
    %v2065 = vld [vmem:[%s2042 + $0xb0] sm:$0xff]
    %v2066 = vld [vmem:[%s2042 + $0xb8] sm:$0xff]
    %v2067 = vld [vmem:[%s2042 + $0xc0] sm:$0xff]
    %v2068 = vld [vmem:[%s2042 + $0xc8] sm:$0xff]
    %v2069 = vld [vmem:[%s2042 + $0xd0] sm:$0xff]
    %v2070 = vld [vmem:[%s2042 + $0xd8] sm:$0xff]
    %v2071 = vld [vmem:[%s2042 + $0xe0] sm:$0xff]
    %v2072 = vld [vmem:[%s2042 + $0xe8] sm:$0xff]
    %v2073 = vld [vmem:[%s2042 + $0xf0] sm:$0xff]
    %v2074 = vld [vmem:[%s2042 + $0xf8] sm:$0xff]
    %v2107 = vunpack.c.l.b16 %v2043
    %v2108 = vunpack.c.h.b16 %v2043
    %v2109 = vunpack.c.l.b16 %v2044
    %v2110 = vunpack.c.h.b16 %v2044
    %v2111 = vunpack.c.l.b16 %v2045
    %v2112 = vunpack.c.h.b16 %v2045
    %v2113 = vunpack.c.l.b16 %v2046
    %v2114 = vunpack.c.h.b16 %v2046
    %v2115 = vunpack.c.l.b16 %v2047
    %v2116 = vunpack.c.h.b16 %v2047
    %v2117 = vunpack.c.l.b16 %v2048
    %v2118 = vunpack.c.h.b16 %v2048
    %v2119 = vunpack.c.l.b16 %v2049
    %v2120 = vunpack.c.h.b16 %v2049
    %v2121 = vunpack.c.l.b16 %v2050
    %v2122 = vunpack.c.h.b16 %v2050
    %v2123 = vunpack.c.l.b16 %v2051
    %v2124 = vunpack.c.h.b16 %v2051
    %v2125 = vunpack.c.l.b16 %v2052
    %v2126 = vunpack.c.h.b16 %v2052
    %v2127 = vunpack.c.l.b16 %v2053
    %v2128 = vunpack.c.h.b16 %v2053
    %v2129 = vunpack.c.l.b16 %v2054
    %v2130 = vunpack.c.h.b16 %v2054
    %v2131 = vunpack.c.l.b16 %v2055
    %v2132 = vunpack.c.h.b16 %v2055
    %v2133 = vunpack.c.l.b16 %v2056
    %v2134 = vunpack.c.h.b16 %v2056
    %v2135 = vunpack.c.l.b16 %v2057
    %v2136 = vunpack.c.h.b16 %v2057
    %v2137 = vunpack.c.l.b16 %v2058
    %v2138 = vunpack.c.h.b16 %v2058
    %v2139 = vunpack.c.l.b16 %v2059
    %v2140 = vunpack.c.h.b16 %v2059
    %v2141 = vunpack.c.l.b16 %v2060
    %v2142 = vunpack.c.h.b16 %v2060
    %v2143 = vunpack.c.l.b16 %v2061
    %v2144 = vunpack.c.h.b16 %v2061
    %v2145 = vunpack.c.l.b16 %v2062
    %v2146 = vunpack.c.h.b16 %v2062
    %v2147 = vunpack.c.l.b16 %v2063
    %v2148 = vunpack.c.h.b16 %v2063
    %v2149 = vunpack.c.l.b16 %v2064
    %v2150 = vunpack.c.h.b16 %v2064
    %v2151 = vunpack.c.l.b16 %v2065
    %v2152 = vunpack.c.h.b16 %v2065
    %v2153 = vunpack.c.l.b16 %v2066
    %v2154 = vunpack.c.h.b16 %v2066
    %v2155 = vunpack.c.l.b16 %v2067
    %v2156 = vunpack.c.h.b16 %v2067
    %v2157 = vunpack.c.l.b16 %v2068
    %v2158 = vunpack.c.h.b16 %v2068
    %v2159 = vunpack.c.l.b16 %v2069
    %v2160 = vunpack.c.h.b16 %v2069
    %v2161 = vunpack.c.l.b16 %v2070
    %v2162 = vunpack.c.h.b16 %v2070
    %v2163 = vunpack.c.l.b16 %v2071
    %v2164 = vunpack.c.h.b16 %v2071
    %v2165 = vunpack.c.l.b16 %v2072
    %v2166 = vunpack.c.h.b16 %v2072
    %v2167 = vunpack.c.l.b16 %v2073
    %v2168 = vunpack.c.h.b16 %v2073
    %v2169 = vunpack.c.l.b16 %v2074
    %v2170 = vunpack.c.h.b16 %v2074
    %v2171 = vpack.c.b16 %v2109, %v2107
    %v2172 = vpack.c.b16 %v2110, %v2108
    %v2173 = vpack.c.b16 %v2113, %v2111
    %v2174 = vpack.c.b16 %v2114, %v2112
    %v2175 = vpack.c.b16 %v2117, %v2115
    %v2176 = vpack.c.b16 %v2118, %v2116
    %v2177 = vpack.c.b16 %v2121, %v2119
    %v2178 = vpack.c.b16 %v2122, %v2120
    %v2179 = vpack.c.b16 %v2125, %v2123
    %v2180 = vpack.c.b16 %v2126, %v2124
    %v2181 = vpack.c.b16 %v2129, %v2127
    %v2182 = vpack.c.b16 %v2130, %v2128
    %v2183 = vpack.c.b16 %v2133, %v2131
    %v2184 = vpack.c.b16 %v2134, %v2132
    %v2185 = vpack.c.b16 %v2137, %v2135
    %v2186 = vpack.c.b16 %v2138, %v2136
    %v2187 = vpack.c.b16 %v2141, %v2139
    %v2188 = vpack.c.b16 %v2142, %v2140
    %v2189 = vpack.c.b16 %v2145, %v2143
    %v2190 = vpack.c.b16 %v2146, %v2144
    %v2191 = vpack.c.b16 %v2149, %v2147
    %v2192 = vpack.c.b16 %v2150, %v2148
    %v2193 = vpack.c.b16 %v2153, %v2151
    %v2194 = vpack.c.b16 %v2154, %v2152
    %v2195 = vpack.c.b16 %v2157, %v2155
    %v2196 = vpack.c.b16 %v2158, %v2156
    %v2197 = vpack.c.b16 %v2161, %v2159
    %v2198 = vpack.c.b16 %v2162, %v2160
    %v2199 = vpack.c.b16 %v2165, %v2163
    %v2200 = vpack.c.b16 %v2166, %v2164
    %v2201 = vpack.c.b16 %v2169, %v2167
    %v2202 = vpack.c.b16 %v2170, %v2168
    %2235 = vmatprep.subr.bf16.mxu0 %v2186
    %2236 = vmatpush1.bf16.msra.mxu0 %v2185
    %2237 = vmatprep.subr.bf16.mxu0 %v2184
    %2238 = vmatpush1.bf16.msra.mxu0 %v2183
    %2239 = vmatprep.subr.bf16.mxu0 %v2182
    %2240 = vmatpush1.bf16.msra.mxu0 %v2181
    %2241 = vmatprep.subr.bf16.mxu0 %v2180
    %2242 = vmatpush1.bf16.msra.mxu0 %v2179
    %2243 = vmatprep.subr.bf16.mxu0 %v2178
    %2244 = vmatpush1.bf16.msra.mxu0 %v2177
    %2245 = vmatprep.subr.bf16.mxu0 %v2176
    %2246 = vmatpush1.bf16.msra.mxu0 %v2175
    %2247 = vmatprep.subr.bf16.mxu0 %v2174
    %2248 = vmatpush1.bf16.msra.mxu0 %v2173
    %2249 = vmatprep.subr.bf16.mxu0 %v2172
    %2250 = vmatpush1.bf16.msra.mxu0 %v2171
    %2251 = vmatprep.subr.bf16.mxu0 %v2202
    %2252 = vmatpush2.bf16.msra.mxu0 %v2201
    %2253 = vmatprep.subr.bf16.mxu0 %v2200
    %2254 = vmatpush2.bf16.msra.mxu0 %v2199
    %2255 = vmatprep.subr.bf16.mxu0 %v2198
    %2256 = vmatpush2.bf16.msra.mxu0 %v2197
    %2257 = vmatprep.subr.bf16.mxu0 %v2196
    %2258 = vmatpush2.bf16.msra.mxu0 %v2195
    %2259 = vmatprep.subr.bf16.mxu0 %v2194
    %2260 = vmatpush2.bf16.msra.mxu0 %v2193
    %2261 = vmatprep.subr.bf16.mxu0 %v2192
    %2262 = vmatpush2.bf16.msra.mxu0 %v2191
    %2263 = vmatprep.subr.bf16.mxu0 %v2190
    %2264 = vmatpush2.bf16.msra.mxu0 %v2189
    %2265 = vmatprep.subr.bf16.mxu0 %v2188
    %2266 = vmatpush2.bf16.msra.mxu0 %v2187
    %2267 = vmatprep.mubr.bf16.mxu0 %v1078
    %2268 = vmatmul.mubr.bf16.gmra.mxu0 %v1077
    %v2269 = vpop.f32.mrf.mxu0
    %v2270 = vadd.f32 0.0, %v2269
    %v2271 = vpop.f32.mrf.mxu0
    %v2272 = vadd.f32 0.0, %v2271
    %v2273 = vpop.f32.mrf.mxu0
    %v2274 = vpop.f32.mrf.mxu0
    %2275 = vdwg.mxu0
    %s2276 = scalar_lea.vmem %s4, 48
    %v2277 = vld [vmem:[%s2276] sm:$0xff]
    %v2278 = vld [vmem:[%s2276 + $0x8] sm:$0xff]
    %v2280 = vsel %vm1551, %v2277, 0
    %v2283 = vsel %vm1551, %v2278, 0
    %2285 = vmatprep.subr.mxu0 0.0
    %2286 = vmatpush1.msra.mxu0 0.0
    %2287 = vmatprep.subr.mxu0 0.0
    %2288 = vmatpush1.msra.mxu0 0.0
    %2289 = vmatprep.subr.mxu0 0.0
    %2290 = vmatpush1.msra.mxu0 0.0
    %2291 = vmatprep.subr.mxu0 0.0
    %2292 = vmatpush1.msra.mxu0 0.0
    %2293 = vmatprep.subr.mxu0 0.0
    %2294 = vmatpush1.msra.mxu0 0.0
    %2295 = vmatprep.subr.mxu0 0.0
    %2296 = vmatpush1.msra.mxu0 0.0
    %2297 = vmatprep.subr.mxu0 0.0
    %2298 = vmatpush1.msra.mxu0 0.0
    %2299 = vmatprep.subr.mxu0 0.0
    %2300 = vmatpush1.msra.mxu0 0.0
    %2301 = vmatprep.subr.mxu0 0.0
    %2302 = vmatpush1.msra.mxu0 0.0
    %2303 = vmatprep.subr.mxu0 0.0
    %2304 = vmatpush1.msra.mxu0 0.0
    %2305 = vmatprep.subr.mxu0 0.0
    %2306 = vmatpush1.msra.mxu0 0.0
    %2307 = vmatprep.subr.mxu0 0.0
    %2308 = vmatpush1.msra.mxu0 0.0
    %2309 = vmatprep.subr.mxu0 0.0
    %2310 = vmatpush1.msra.mxu0 0.0
    %2311 = vmatprep.subr.mxu0 0.0
    %2312 = vmatpush1.msra.mxu0 0.0
    %2313 = vmatprep.subr.mxu0 0.0
    %2314 = vmatpush1.msra.mxu0 0.0
    %2315 = vmatprep.subr.mxu0 %v2272
    %2316 = vmatpush1.msra.mxu0 %v2270
    %2317 = vmatprep.subr.mxu0 0.0
    %2318 = vmatpush2.msra.mxu0 0.0
    %2319 = vmatprep.subr.mxu0 0.0
    %2320 = vmatpush2.msra.mxu0 0.0
    %2321 = vmatprep.subr.mxu0 0.0
    %2322 = vmatpush2.msra.mxu0 0.0
    %2323 = vmatprep.subr.mxu0 0.0
    %2324 = vmatpush2.msra.mxu0 0.0
    %2325 = vmatprep.subr.mxu0 0.0
    %2326 = vmatpush2.msra.mxu0 0.0
    %2327 = vmatprep.subr.mxu0 0.0
    %2328 = vmatpush2.msra.mxu0 0.0
    %2329 = vmatprep.subr.mxu0 0.0
    %2330 = vmatpush2.msra.mxu0 0.0
    %2331 = vmatprep.subr.mxu0 0.0
    %2332 = vmatpush2.msra.mxu0 0.0
    %2333 = vmatprep.subr.mxu0 0.0
    %2334 = vmatpush2.msra.mxu0 0.0
    %2335 = vmatprep.subr.mxu0 0.0
    %2336 = vmatpush2.msra.mxu0 0.0
    %2337 = vmatprep.subr.mxu0 0.0
    %2338 = vmatpush2.msra.mxu0 0.0
    %2339 = vmatprep.subr.mxu0 0.0
    %2340 = vmatpush2.msra.mxu0 0.0
    %2341 = vmatprep.subr.mxu0 0.0
    %2342 = vmatpush2.msra.mxu0 0.0
    %2343 = vmatprep.subr.mxu0 0.0
    %2344 = vmatpush2.msra.mxu0 0.0
    %2345 = vmatprep.subr.mxu0 0.0
    %2346 = vmatpush2.msra.mxu0 0.0
    %2347 = vmatprep.subr.mxu0 0.0
    %2348 = vmatpush2.msra.mxu0 0.0
    %2349 = vmatprep.mubr.f32.mxu0 0.0
    %2350 = vmatmul.mubr.f32.gmra.mxu0 %v2280
    %v2351 = vpop.f32.mrf.mxu0
    %v2352 = vadd.f32 0.0, %v2351
    %v2353 = vpop.f32.mrf.mxu0
    %v2354 = vadd.f32 0.0, %v2353
    %2355 = vmatprep.mubr.f32.mxu0 0.0
    %2356 = vmatmul.mubr.f32.gmra.mxu0 %v2283
    %v2357 = vpop.f32.mrf.mxu0
    %v2358 = vadd.f32 0.0, %v2357
    %v2359 = vpop.f32.mrf.mxu0
    %v2360 = vadd.f32 0.0, %v2359
    %2361 = vdwg.mxu0
    %v2362 = vadd.f32 %v2038, %v2352
    %v2363 = vadd.f32 %v2039, %v2354
    %v2364 = vadd.f32 %v2040, %v2358
    %v2365 = vadd.f32 %v2041, %v2360
    %v2366 = vadd.f32 %v2362, %v2364
    %v2367 = vrot.slane %v2366, 4
    %v2368 = vadd.f32 %v2366, %v2367
    %v2369 = vrot.slane %v2368, 2
    %v2370 = vadd.f32 %v2368, %v2369
    %v2371 = vrot.slane %v2370, 1
    %v2372 = vadd.f32 %v2370, %v2371
    %v2373 = vadd.f32 %v2363, %v2365
    %v2374 = vrot.slane %v2373, 4
    %v2375 = vadd.f32 %v2373, %v2374
    %v2376 = vrot.slane %v2375, 2
    %v2377 = vadd.f32 %v2375, %v2376
    %v2378 = vrot.slane %v2377, 1
    %v2379 = vadd.f32 %v2377, %v2378
    %v2380 = vrcp.pop 16.0
    %v2381 = vmul.f32 %v2372, %v2380
    %v2382 = vmul.f32 %v2379, %v2380
    %v2383 = vld [vmem:[#allocation7] sm:$0xff]
    %v2384 = vld [vmem:[#allocation7 + $0x8] sm:$0xff]
    %v2385 = vld [vmem:[#allocation7 + $0x10] sm:$0xff]
    %v2386 = vld [vmem:[#allocation7 + $0x18] sm:$0xff]
    %v2387 = vld [vmem:[#allocation7 + $0x20] sm:$0xff]
    %v2388 = vld [vmem:[#allocation7 + $0x28] sm:$0xff]
    %v2389 = vld [vmem:[#allocation7 + $0x30] sm:$0xff]
    %v2390 = vld [vmem:[#allocation7 + $0x38] sm:$0xff]
    %v2391 = vld [vmem:[#allocation7 + $0x40] sm:$0xff]
    %v2392 = vld [vmem:[#allocation7 + $0x48] sm:$0xff]
    %v2393 = vld [vmem:[#allocation7 + $0x50] sm:$0xff]
    %v2394 = vld [vmem:[#allocation7 + $0x58] sm:$0xff]
    %v2395 = vld [vmem:[#allocation7 + $0x60] sm:$0xff]
    %v2396 = vld [vmem:[#allocation7 + $0x68] sm:$0xff]
    %v2397 = vld [vmem:[#allocation7 + $0x70] sm:$0xff]
    %v2398 = vld [vmem:[#allocation7 + $0x78] sm:$0xff]
    %v2399 = vld [vmem:[#allocation7 + $0x80] sm:$0xff]
    %v2400 = vld [vmem:[#allocation7 + $0x88] sm:$0xff]
    %v2401 = vld [vmem:[#allocation7 + $0x90] sm:$0xff]
    %v2402 = vld [vmem:[#allocation7 + $0x98] sm:$0xff]
    %v2403 = vld [vmem:[#allocation7 + $0xa0] sm:$0xff]
    %v2404 = vld [vmem:[#allocation7 + $0xa8] sm:$0xff]
    %v2405 = vld [vmem:[#allocation7 + $0xb0] sm:$0xff]
    %v2406 = vld [vmem:[#allocation7 + $0xb8] sm:$0xff]
    %v2407 = vld [vmem:[#allocation7 + $0xc0] sm:$0xff]
    %v2408 = vld [vmem:[#allocation7 + $0xc8] sm:$0xff]
    %v2409 = vld [vmem:[#allocation7 + $0xd0] sm:$0xff]
    %v2410 = vld [vmem:[#allocation7 + $0xd8] sm:$0xff]
    %v2411 = vld [vmem:[#allocation7 + $0xe0] sm:$0xff]
    %v2412 = vld [vmem:[#allocation7 + $0xe8] sm:$0xff]
    %v2413 = vld [vmem:[#allocation7 + $0xf0] sm:$0xff]
    %v2414 = vld [vmem:[#allocation7 + $0xf8] sm:$0xff]
    %v2415 = vld [vmem:[#allocation7 + $0x100] sm:$0xff]
    %v2416 = vld [vmem:[#allocation7 + $0x108] sm:$0xff]
    %v2417 = vld [vmem:[#allocation7 + $0x110] sm:$0xff]
    %v2418 = vld [vmem:[#allocation7 + $0x118] sm:$0xff]
    %v2419 = vld [vmem:[#allocation7 + $0x120] sm:$0xff]
    %v2420 = vld [vmem:[#allocation7 + $0x128] sm:$0xff]
    %v2421 = vld [vmem:[#allocation7 + $0x130] sm:$0xff]
    %v2422 = vld [vmem:[#allocation7 + $0x138] sm:$0xff]
    %v2423 = vld [vmem:[#allocation7 + $0x140] sm:$0xff]
    %v2424 = vld [vmem:[#allocation7 + $0x148] sm:$0xff]
    %v2425 = vld [vmem:[#allocation7 + $0x150] sm:$0xff]
    %v2426 = vld [vmem:[#allocation7 + $0x158] sm:$0xff]
    %v2427 = vld [vmem:[#allocation7 + $0x160] sm:$0xff]
    %v2428 = vld [vmem:[#allocation7 + $0x168] sm:$0xff]
    %v2429 = vld [vmem:[#allocation7 + $0x170] sm:$0xff]
    %v2430 = vld [vmem:[#allocation7 + $0x178] sm:$0xff]
    %v2431 = vld [vmem:[#allocation7 + $0x180] sm:$0xff]
    %v2432 = vld [vmem:[#allocation7 + $0x188] sm:$0xff]
    %v2433 = vld [vmem:[#allocation7 + $0x190] sm:$0xff]
    %v2434 = vld [vmem:[#allocation7 + $0x198] sm:$0xff]
    %v2435 = vld [vmem:[#allocation7 + $0x1a0] sm:$0xff]
    %v2436 = vld [vmem:[#allocation7 + $0x1a8] sm:$0xff]
    %v2437 = vld [vmem:[#allocation7 + $0x1b0] sm:$0xff]
    %v2438 = vld [vmem:[#allocation7 + $0x1b8] sm:$0xff]
    %v2439 = vld [vmem:[#allocation7 + $0x1c0] sm:$0xff]
    %v2440 = vld [vmem:[#allocation7 + $0x1c8] sm:$0xff]
    %v2441 = vld [vmem:[#allocation7 + $0x1d0] sm:$0xff]
    %v2442 = vld [vmem:[#allocation7 + $0x1d8] sm:$0xff]
    %v2443 = vld [vmem:[#allocation7 + $0x1e0] sm:$0xff]
    %v2444 = vld [vmem:[#allocation7 + $0x1e8] sm:$0xff]
    %v2445 = vld [vmem:[#allocation7 + $0x1f0] sm:$0xff]
    %v2446 = vld [vmem:[#allocation7 + $0x1f8] sm:$0xff]
    %2447 = vmatprep.subr.mxu0 %v2414
    %2448 = vmatpush1.msra.mxu0 %v2413
    %2449 = vmatprep.subr.mxu0 %v2412
    %2450 = vmatpush1.msra.mxu0 %v2411
    %2451 = vmatprep.subr.mxu0 %v2410
    %2452 = vmatpush1.msra.mxu0 %v2409
    %2453 = vmatprep.subr.mxu0 %v2408
    %2454 = vmatpush1.msra.mxu0 %v2407
    %2455 = vmatprep.subr.mxu0 %v2406
    %2456 = vmatpush1.msra.mxu0 %v2405
    %2457 = vmatprep.subr.mxu0 %v2404
    %2458 = vmatpush1.msra.mxu0 %v2403
    %2459 = vmatprep.subr.mxu0 %v2402
    %2460 = vmatpush1.msra.mxu0 %v2401
    %2461 = vmatprep.subr.mxu0 %v2400
    %2462 = vmatpush1.msra.mxu0 %v2399
    %2463 = vmatprep.subr.mxu0 %v2398
    %2464 = vmatpush1.msra.mxu0 %v2397
    %2465 = vmatprep.subr.mxu0 %v2396
    %2466 = vmatpush1.msra.mxu0 %v2395
    %2467 = vmatprep.subr.mxu0 %v2394
    %2468 = vmatpush1.msra.mxu0 %v2393
    %2469 = vmatprep.subr.mxu0 %v2392
    %2470 = vmatpush1.msra.mxu0 %v2391
    %2471 = vmatprep.subr.mxu0 %v2390
    %2472 = vmatpush1.msra.mxu0 %v2389
    %2473 = vmatprep.subr.mxu0 %v2388
    %2474 = vmatpush1.msra.mxu0 %v2387
    %2475 = vmatprep.subr.mxu0 %v2386
    %2476 = vmatpush1.msra.mxu0 %v2385
    %2477 = vmatprep.subr.mxu0 %v2384
    %2478 = vmatpush1.msra.mxu0 %v2383
    %2479 = vmatprep.subr.mxu0 %v2446
    %2480 = vmatpush2.msra.mxu0 %v2445
    %2481 = vmatprep.subr.mxu0 %v2444
    %2482 = vmatpush2.msra.mxu0 %v2443
    %2483 = vmatprep.subr.mxu0 %v2442
    %2484 = vmatpush2.msra.mxu0 %v2441
    %2485 = vmatprep.subr.mxu0 %v2440
    %2486 = vmatpush2.msra.mxu0 %v2439
    %2487 = vmatprep.subr.mxu0 %v2438
    %2488 = vmatpush2.msra.mxu0 %v2437
    %2489 = vmatprep.subr.mxu0 %v2436
    %2490 = vmatpush2.msra.mxu0 %v2435
    %2491 = vmatprep.subr.mxu0 %v2434
    %2492 = vmatpush2.msra.mxu0 %v2433
    %2493 = vmatprep.subr.mxu0 %v2432
    %2494 = vmatpush2.msra.mxu0 %v2431
    %2495 = vmatprep.subr.mxu0 %v2430
    %2496 = vmatpush2.msra.mxu0 %v2429
    %2497 = vmatprep.subr.mxu0 %v2428
    %2498 = vmatpush2.msra.mxu0 %v2427
    %2499 = vmatprep.subr.mxu0 %v2426
    %2500 = vmatpush2.msra.mxu0 %v2425
    %2501 = vmatprep.subr.mxu0 %v2424
    %2502 = vmatpush2.msra.mxu0 %v2423
    %2503 = vmatprep.subr.mxu0 %v2422
    %2504 = vmatpush2.msra.mxu0 %v2421
    %2505 = vmatprep.subr.mxu0 %v2420
    %2506 = vmatpush2.msra.mxu0 %v2419
    %2507 = vmatprep.subr.mxu0 %v2418
    %2508 = vmatpush2.msra.mxu0 %v2417
    %2509 = vmatprep.subr.mxu0 %v2416
    %2510 = vmatpush2.msra.mxu0 %v2415
    %2511 = vmatprep.mubr.f32.mxu0 %v2382
    %2512 = vmatmul.mubr.f32.gmra.mxu0 %v2381
    %v2513 = vpop.f32.mrf.mxu0
    %v2514 = vadd.f32 0.0, %v2513
    %v2515 = vpop.f32.mrf.mxu0
    %v2516 = vadd.f32 0.0, %v2515
    %2517 = vdwg.mxu0
    %v2518 = vlaneseq
    %v2519 = vshrl.u32 %v2518, 7
    %v2520 = vsub.s32 0, %v2519
    %v2521 = vrot.slane %v2514, %v2520
    %v2522 = vlaneseq
    %v2523 = vshrl.u32 %v2522, 7
    %v2524 = vsub.s32 0, %v2523
    %v2525 = vrot.slane %v2516, %v2524
    %v2526 = vsub.f32 %v2362, %v2521
    %v2527 = vsub.f32 %v2363, %v2525
    %v2528 = vsub.f32 %v2364, %v2521
    %v2529 = vsub.f32 %v2365, %v2525
    %v2530 = vmul.f32 %v2526, %v2526
    %v2531 = vmul.f32 %v2527, %v2527
    %v2532 = vmul.f32 %v2528, %v2528
    %v2533 = vmul.f32 %v2529, %v2529
    %v2534 = vadd.f32 %v2530, %v2532
    %v2535 = vrot.slane %v2534, 4
    %v2536 = vadd.f32 %v2534, %v2535
    %v2537 = vrot.slane %v2536, 2
    %v2538 = vadd.f32 %v2536, %v2537
    %v2539 = vrot.slane %v2538, 1
    %v2540 = vadd.f32 %v2538, %v2539
    %v2541 = vadd.f32 %v2531, %v2533
    %v2542 = vrot.slane %v2541, 4
    %v2543 = vadd.f32 %v2541, %v2542
    %v2544 = vrot.slane %v2543, 2
    %v2545 = vadd.f32 %v2543, %v2544
    %v2546 = vrot.slane %v2545, 1
    %v2547 = vadd.f32 %v2545, %v2546
    %v2548 = vmul.f32 %v2540, %v2380
    %v2549 = vmul.f32 %v2547, %v2380
    %2550 = vmatprep.subr.mxu0 %v2414
    %2551 = vmatpush1.msra.mxu0 %v2413
    %2552 = vmatprep.subr.mxu0 %v2412
    %2553 = vmatpush1.msra.mxu0 %v2411
    %2554 = vmatprep.subr.mxu0 %v2410
    %2555 = vmatpush1.msra.mxu0 %v2409
    %2556 = vmatprep.subr.mxu0 %v2408
    %2557 = vmatpush1.msra.mxu0 %v2407
    %2558 = vmatprep.subr.mxu0 %v2406
    %2559 = vmatpush1.msra.mxu0 %v2405
    %2560 = vmatprep.subr.mxu0 %v2404
    %2561 = vmatpush1.msra.mxu0 %v2403
    %2562 = vmatprep.subr.mxu0 %v2402
    %2563 = vmatpush1.msra.mxu0 %v2401
    %2564 = vmatprep.subr.mxu0 %v2400
    %2565 = vmatpush1.msra.mxu0 %v2399
    %2566 = vmatprep.subr.mxu0 %v2398
    %2567 = vmatpush1.msra.mxu0 %v2397
    %2568 = vmatprep.subr.mxu0 %v2396
    %2569 = vmatpush1.msra.mxu0 %v2395
    %2570 = vmatprep.subr.mxu0 %v2394
    %2571 = vmatpush1.msra.mxu0 %v2393
    %2572 = vmatprep.subr.mxu0 %v2392
    %2573 = vmatpush1.msra.mxu0 %v2391
    %2574 = vmatprep.subr.mxu0 %v2390
    %2575 = vmatpush1.msra.mxu0 %v2389
    %2576 = vmatprep.subr.mxu0 %v2388
    %2577 = vmatpush1.msra.mxu0 %v2387
    %2578 = vmatprep.subr.mxu0 %v2386
    %2579 = vmatpush1.msra.mxu0 %v2385
    %2580 = vmatprep.subr.mxu0 %v2384
    %2581 = vmatpush1.msra.mxu0 %v2383
    %2582 = vmatprep.subr.mxu0 %v2446
    %2583 = vmatpush2.msra.mxu0 %v2445
    %2584 = vmatprep.subr.mxu0 %v2444
    %2585 = vmatpush2.msra.mxu0 %v2443
    %2586 = vmatprep.subr.mxu0 %v2442
    %2587 = vmatpush2.msra.mxu0 %v2441
    %2588 = vmatprep.subr.mxu0 %v2440
    %2589 = vmatpush2.msra.mxu0 %v2439
    %2590 = vmatprep.subr.mxu0 %v2438
    %2591 = vmatpush2.msra.mxu0 %v2437
    %2592 = vmatprep.subr.mxu0 %v2436
    %2593 = vmatpush2.msra.mxu0 %v2435
    %2594 = vmatprep.subr.mxu0 %v2434
    %2595 = vmatpush2.msra.mxu0 %v2433
    %2596 = vmatprep.subr.mxu0 %v2432
    %2597 = vmatpush2.msra.mxu0 %v2431
    %2598 = vmatprep.subr.mxu0 %v2430
    %2599 = vmatpush2.msra.mxu0 %v2429
    %2600 = vmatprep.subr.mxu0 %v2428
    %2601 = vmatpush2.msra.mxu0 %v2427
    %2602 = vmatprep.subr.mxu0 %v2426
    %2603 = vmatpush2.msra.mxu0 %v2425
    %2604 = vmatprep.subr.mxu0 %v2424
    %2605 = vmatpush2.msra.mxu0 %v2423
    %2606 = vmatprep.subr.mxu0 %v2422
    %2607 = vmatpush2.msra.mxu0 %v2421
    %2608 = vmatprep.subr.mxu0 %v2420
    %2609 = vmatpush2.msra.mxu0 %v2419
    %2610 = vmatprep.subr.mxu0 %v2418
    %2611 = vmatpush2.msra.mxu0 %v2417
    %2612 = vmatprep.subr.mxu0 %v2416
    %2613 = vmatpush2.msra.mxu0 %v2415
    %2614 = vmatprep.mubr.f32.mxu0 %v2549
    %2615 = vmatmul.mubr.f32.gmra.mxu0 %v2548
    %v2616 = vpop.f32.mrf.mxu0
    %v2617 = vadd.f32 1e-05, %v2616
    %v2618 = vpop.f32.mrf.mxu0
    %v2619 = vadd.f32 1e-05, %v2618
    %2620 = vdwg.mxu0
    %v2621 = vrsqrt.pop %v2617
    %v2622 = vrsqrt.pop %v2619
    %v2623 = vlaneseq
    %v2624 = vshrl.u32 %v2623, 7
    %v2625 = vsub.s32 0, %v2624
    %v2626 = vrot.slane %v2621, %v2625
    %v2627 = vlaneseq
    %v2628 = vshrl.u32 %v2627, 7
    %v2629 = vsub.s32 0, %v2628
    %v2630 = vrot.slane %v2622, %v2629
    %v2631 = vmul.f32 %v2526, %v2626
    %v2632 = vmul.f32 %v2527, %v2630
    %v2633 = vmul.f32 %v2528, %v2626
    %v2634 = vmul.f32 %v2529, %v2630
    %v2635 = vld [vmem:[#allocation9] sm:$0x3]
    %v2637 = vlaneseq
    %v2638 = vshrl.u32 %v2637, 7
    %v2639 = vsub.s32 0, %v2638
    %v2640 = vrot.slane %v2635, %v2639
    %v2641 = vlaneseq
    %v2642 = vshrl.u32 %v2641, 7
    %v2643 = vsub.s32 1, %v2642
    %v2644 = vrot.slane %v2635, %v2643
    %v2647 = vmul.f32 %v2631, %v2640
    %v2648 = vmul.f32 %v2632, %v2644
    %v2649 = vmul.f32 %v2633, %v2640
    %v2650 = vmul.f32 %v2634, %v2644
    %v2651 = vld [vmem:[#allocation10] sm:$0x3]
    %v2653 = vlaneseq
    %v2654 = vshrl.u32 %v2653, 7
    %v2655 = vsub.s32 0, %v2654
    %v2656 = vrot.slane %v2651, %v2655
    %v2657 = vlaneseq
    %v2658 = vshrl.u32 %v2657, 7
    %v2659 = vsub.s32 1, %v2658
    %v2660 = vrot.slane %v2651, %v2659
    %v2663 = vadd.f32 %v2647, %v2656
    %v2664 = vadd.f32 %v2648, %v2660
    %v2665 = vadd.f32 %v2649, %v2656
    %v2666 = vadd.f32 %v2650, %v2660
    %v2667 = vmax.f32 %v2663, 0.0
    %v2668 = vmax.f32 %v2664, 0.0
    %v2669 = vmax.f32 %v2665, 0.0
    %v2670 = vmax.f32 %v2666, 0.0
    %v2671 = vpack.c.bf16 %v2669, %v2667
    %v2672 = vpack.c.bf16 %v2670, %v2668
    %v2673 = vld [vmem:[#allocation6] sm:$0xff]
    %v2674 = vld [vmem:[#allocation6 + $0x8] sm:$0xff]
    %v2675 = vld [vmem:[#allocation6 + $0x10] sm:$0xff]
    %v2676 = vld [vmem:[#allocation6 + $0x18] sm:$0xff]
    %v2677 = vld [vmem:[#allocation6 + $0x20] sm:$0xff]
    %v2678 = vld [vmem:[#allocation6 + $0x28] sm:$0xff]
    %v2679 = vld [vmem:[#allocation6 + $0x30] sm:$0xff]
    %v2680 = vld [vmem:[#allocation6 + $0x38] sm:$0xff]
    %v2681 = vld [vmem:[#allocation6 + $0x40] sm:$0xff]
    %v2682 = vld [vmem:[#allocation6 + $0x48] sm:$0xff]
    %v2683 = vld [vmem:[#allocation6 + $0x50] sm:$0xff]
    %v2684 = vld [vmem:[#allocation6 + $0x58] sm:$0xff]
    %v2685 = vld [vmem:[#allocation6 + $0x60] sm:$0xff]
    %v2686 = vld [vmem:[#allocation6 + $0x68] sm:$0xff]
    %v2687 = vld [vmem:[#allocation6 + $0x70] sm:$0xff]
    %v2688 = vld [vmem:[#allocation6 + $0x78] sm:$0xff]
    %v2689 = vld [vmem:[#allocation6 + $0x80] sm:$0xff]
    %v2690 = vld [vmem:[#allocation6 + $0x88] sm:$0xff]
    %v2691 = vld [vmem:[#allocation6 + $0x90] sm:$0xff]
    %v2692 = vld [vmem:[#allocation6 + $0x98] sm:$0xff]
    %v2693 = vld [vmem:[#allocation6 + $0xa0] sm:$0xff]
    %v2694 = vld [vmem:[#allocation6 + $0xa8] sm:$0xff]
    %v2695 = vld [vmem:[#allocation6 + $0xb0] sm:$0xff]
    %v2696 = vld [vmem:[#allocation6 + $0xb8] sm:$0xff]
    %v2697 = vld [vmem:[#allocation6 + $0xc0] sm:$0xff]
    %v2698 = vld [vmem:[#allocation6 + $0xc8] sm:$0xff]
    %v2699 = vld [vmem:[#allocation6 + $0xd0] sm:$0xff]
    %v2700 = vld [vmem:[#allocation6 + $0xd8] sm:$0xff]
    %v2701 = vld [vmem:[#allocation6 + $0xe0] sm:$0xff]
    %v2702 = vld [vmem:[#allocation6 + $0xe8] sm:$0xff]
    %v2703 = vld [vmem:[#allocation6 + $0xf0] sm:$0xff]
    %v2704 = vld [vmem:[#allocation6 + $0xf8] sm:$0xff]
    %v2737 = vunpack.c.l.b16 %v2673
    %v2738 = vunpack.c.h.b16 %v2673
    %v2739 = vunpack.c.l.b16 %v2674
    %v2740 = vunpack.c.h.b16 %v2674
    %v2741 = vunpack.c.l.b16 %v2675
    %v2742 = vunpack.c.h.b16 %v2675
    %v2743 = vunpack.c.l.b16 %v2676
    %v2744 = vunpack.c.h.b16 %v2676
    %v2745 = vunpack.c.l.b16 %v2677
    %v2746 = vunpack.c.h.b16 %v2677
    %v2747 = vunpack.c.l.b16 %v2678
    %v2748 = vunpack.c.h.b16 %v2678
    %v2749 = vunpack.c.l.b16 %v2679
    %v2750 = vunpack.c.h.b16 %v2679
    %v2751 = vunpack.c.l.b16 %v2680
    %v2752 = vunpack.c.h.b16 %v2680
    %v2753 = vunpack.c.l.b16 %v2681
    %v2754 = vunpack.c.h.b16 %v2681
    %v2755 = vunpack.c.l.b16 %v2682
    %v2756 = vunpack.c.h.b16 %v2682
    %v2757 = vunpack.c.l.b16 %v2683
    %v2758 = vunpack.c.h.b16 %v2683
    %v2759 = vunpack.c.l.b16 %v2684
    %v2760 = vunpack.c.h.b16 %v2684
    %v2761 = vunpack.c.l.b16 %v2685
    %v2762 = vunpack.c.h.b16 %v2685
    %v2763 = vunpack.c.l.b16 %v2686
    %v2764 = vunpack.c.h.b16 %v2686
    %v2765 = vunpack.c.l.b16 %v2687
    %v2766 = vunpack.c.h.b16 %v2687
    %v2767 = vunpack.c.l.b16 %v2688
    %v2768 = vunpack.c.h.b16 %v2688
    %v2769 = vunpack.c.l.b16 %v2689
    %v2770 = vunpack.c.h.b16 %v2689
    %v2771 = vunpack.c.l.b16 %v2690
    %v2772 = vunpack.c.h.b16 %v2690
    %v2773 = vunpack.c.l.b16 %v2691
    %v2774 = vunpack.c.h.b16 %v2691
    %v2775 = vunpack.c.l.b16 %v2692
    %v2776 = vunpack.c.h.b16 %v2692
    %v2777 = vunpack.c.l.b16 %v2693
    %v2778 = vunpack.c.h.b16 %v2693
    %v2779 = vunpack.c.l.b16 %v2694
    %v2780 = vunpack.c.h.b16 %v2694
    %v2781 = vunpack.c.l.b16 %v2695
    %v2782 = vunpack.c.h.b16 %v2695
    %v2783 = vunpack.c.l.b16 %v2696
    %v2784 = vunpack.c.h.b16 %v2696
    %v2785 = vunpack.c.l.b16 %v2697
    %v2786 = vunpack.c.h.b16 %v2697
    %v2787 = vunpack.c.l.b16 %v2698
    %v2788 = vunpack.c.h.b16 %v2698
    %v2789 = vunpack.c.l.b16 %v2699
    %v2790 = vunpack.c.h.b16 %v2699
    %v2791 = vunpack.c.l.b16 %v2700
    %v2792 = vunpack.c.h.b16 %v2700
    %v2793 = vunpack.c.l.b16 %v2701
    %v2794 = vunpack.c.h.b16 %v2701
    %v2795 = vunpack.c.l.b16 %v2702
    %v2796 = vunpack.c.h.b16 %v2702
    %v2797 = vunpack.c.l.b16 %v2703
    %v2798 = vunpack.c.h.b16 %v2703
    %v2799 = vunpack.c.l.b16 %v2704
    %v2800 = vunpack.c.h.b16 %v2704
    %v2801 = vpack.c.b16 %v2739, %v2737
    %v2802 = vpack.c.b16 %v2740, %v2738
    %v2803 = vpack.c.b16 %v2743, %v2741
    %v2804 = vpack.c.b16 %v2744, %v2742
    %v2805 = vpack.c.b16 %v2747, %v2745
    %v2806 = vpack.c.b16 %v2748, %v2746
    %v2807 = vpack.c.b16 %v2751, %v2749
    %v2808 = vpack.c.b16 %v2752, %v2750
    %v2809 = vpack.c.b16 %v2755, %v2753
    %v2810 = vpack.c.b16 %v2756, %v2754
    %v2811 = vpack.c.b16 %v2759, %v2757
    %v2812 = vpack.c.b16 %v2760, %v2758
    %v2813 = vpack.c.b16 %v2763, %v2761
    %v2814 = vpack.c.b16 %v2764, %v2762
    %v2815 = vpack.c.b16 %v2767, %v2765
    %v2816 = vpack.c.b16 %v2768, %v2766
    %v2817 = vpack.c.b16 %v2771, %v2769
    %v2818 = vpack.c.b16 %v2772, %v2770
    %v2819 = vpack.c.b16 %v2775, %v2773
    %v2820 = vpack.c.b16 %v2776, %v2774
    %v2821 = vpack.c.b16 %v2779, %v2777
    %v2822 = vpack.c.b16 %v2780, %v2778
    %v2823 = vpack.c.b16 %v2783, %v2781
    %v2824 = vpack.c.b16 %v2784, %v2782
    %v2825 = vpack.c.b16 %v2787, %v2785
    %v2826 = vpack.c.b16 %v2788, %v2786
    %v2827 = vpack.c.b16 %v2791, %v2789
    %v2828 = vpack.c.b16 %v2792, %v2790
    %v2829 = vpack.c.b16 %v2795, %v2793
    %v2830 = vpack.c.b16 %v2796, %v2794
    %v2831 = vpack.c.b16 %v2799, %v2797
    %v2832 = vpack.c.b16 %v2800, %v2798
    %2865 = vmatprep.subr.bf16.mxu0 %v2816
    %2866 = vmatpush1.bf16.msra.mxu0 %v2815
    %2867 = vmatprep.subr.bf16.mxu0 %v2814
    %2868 = vmatpush1.bf16.msra.mxu0 %v2813
    %2869 = vmatprep.subr.bf16.mxu0 %v2812
    %2870 = vmatpush1.bf16.msra.mxu0 %v2811
    %2871 = vmatprep.subr.bf16.mxu0 %v2810
    %2872 = vmatpush1.bf16.msra.mxu0 %v2809
    %2873 = vmatprep.subr.bf16.mxu0 %v2808
    %2874 = vmatpush1.bf16.msra.mxu0 %v2807
    %2875 = vmatprep.subr.bf16.mxu0 %v2806
    %2876 = vmatpush1.bf16.msra.mxu0 %v2805
    %2877 = vmatprep.subr.bf16.mxu0 %v2804
    %2878 = vmatpush1.bf16.msra.mxu0 %v2803
    %2879 = vmatprep.subr.bf16.mxu0 %v2802
    %2880 = vmatpush1.bf16.msra.mxu0 %v2801
    %2881 = vmatprep.subr.bf16.mxu0 %v2832
    %2882 = vmatpush2.bf16.msra.mxu0 %v2831
    %2883 = vmatprep.subr.bf16.mxu0 %v2830
    %2884 = vmatpush2.bf16.msra.mxu0 %v2829
    %2885 = vmatprep.subr.bf16.mxu0 %v2828
    %2886 = vmatpush2.bf16.msra.mxu0 %v2827
    %2887 = vmatprep.subr.bf16.mxu0 %v2826
    %2888 = vmatpush2.bf16.msra.mxu0 %v2825
    %2889 = vmatprep.subr.bf16.mxu0 %v2824
    %2890 = vmatpush2.bf16.msra.mxu0 %v2823
    %2891 = vmatprep.subr.bf16.mxu0 %v2822
    %2892 = vmatpush2.bf16.msra.mxu0 %v2821
    %2893 = vmatprep.subr.bf16.mxu0 %v2820
    %2894 = vmatpush2.bf16.msra.mxu0 %v2819
    %2895 = vmatprep.subr.bf16.mxu0 %v2818
    %2896 = vmatpush2.bf16.msra.mxu0 %v2817
    %2897 = vmatprep.mubr.bf16.mxu0 %v2672
    %2898 = vmatmul.mubr.bf16.gmra.mxu0 %v2671
    %v2899 = vpop.f32.mrf.mxu0
    %v2900 = vadd.f32 0.0, %v2899
    %v2901 = vpop.f32.mrf.mxu0
    %v2902 = vadd.f32 0.0, %v2901
    %v2903 = vpop.f32.mrf.mxu0
    %v2904 = vadd.f32 0.0, %v2903
    %v2905 = vpop.f32.mrf.mxu0
    %v2906 = vadd.f32 0.0, %v2905
    %2907 = vdwg.mxu0
    %v2908 = vld [vmem:[%s9] sm:$0xff]
    %v2909 = vld [vmem:[%s9 + $0x8] sm:$0xff]
    %v2910 = vld [vmem:[%s9 + $0x10] sm:$0xff]
    %v2911 = vld [vmem:[%s9 + $0x18] sm:$0xff]
    %s2912 = scalar_lea.vmem [#allocation6], 256
    %v2913 = vld [vmem:[%s2912] sm:$0xff]
    %v2914 = vld [vmem:[%s2912 + $0x8] sm:$0xff]
    %v2915 = vld [vmem:[%s2912 + $0x10] sm:$0xff]
    %v2916 = vld [vmem:[%s2912 + $0x18] sm:$0xff]
    %v2917 = vld [vmem:[%s2912 + $0x20] sm:$0xff]
    %v2918 = vld [vmem:[%s2912 + $0x28] sm:$0xff]
    %v2919 = vld [vmem:[%s2912 + $0x30] sm:$0xff]
    %v2920 = vld [vmem:[%s2912 + $0x38] sm:$0xff]
    %v2921 = vld [vmem:[%s2912 + $0x40] sm:$0xff]
    %v2922 = vld [vmem:[%s2912 + $0x48] sm:$0xff]
    %v2923 = vld [vmem:[%s2912 + $0x50] sm:$0xff]
    %v2924 = vld [vmem:[%s2912 + $0x58] sm:$0xff]
    %v2925 = vld [vmem:[%s2912 + $0x60] sm:$0xff]
    %v2926 = vld [vmem:[%s2912 + $0x68] sm:$0xff]
    %v2927 = vld [vmem:[%s2912 + $0x70] sm:$0xff]
    %v2928 = vld [vmem:[%s2912 + $0x78] sm:$0xff]
    %v2929 = vld [vmem:[%s2912 + $0x80] sm:$0xff]
    %v2930 = vld [vmem:[%s2912 + $0x88] sm:$0xff]
    %v2931 = vld [vmem:[%s2912 + $0x90] sm:$0xff]
    %v2932 = vld [vmem:[%s2912 + $0x98] sm:$0xff]
    %v2933 = vld [vmem:[%s2912 + $0xa0] sm:$0xff]
    %v2934 = vld [vmem:[%s2912 + $0xa8] sm:$0xff]
    %v2935 = vld [vmem:[%s2912 + $0xb0] sm:$0xff]
    %v2936 = vld [vmem:[%s2912 + $0xb8] sm:$0xff]
    %v2937 = vld [vmem:[%s2912 + $0xc0] sm:$0xff]
    %v2938 = vld [vmem:[%s2912 + $0xc8] sm:$0xff]
    %v2939 = vld [vmem:[%s2912 + $0xd0] sm:$0xff]
    %v2940 = vld [vmem:[%s2912 + $0xd8] sm:$0xff]
    %v2941 = vld [vmem:[%s2912 + $0xe0] sm:$0xff]
    %v2942 = vld [vmem:[%s2912 + $0xe8] sm:$0xff]
    %v2943 = vld [vmem:[%s2912 + $0xf0] sm:$0xff]
    %v2944 = vld [vmem:[%s2912 + $0xf8] sm:$0xff]
    %v2977 = vunpack.c.l.b16 %v2913
    %v2978 = vunpack.c.h.b16 %v2913
    %v2979 = vunpack.c.l.b16 %v2914
    %v2980 = vunpack.c.h.b16 %v2914
    %v2981 = vunpack.c.l.b16 %v2915
    %v2982 = vunpack.c.h.b16 %v2915
    %v2983 = vunpack.c.l.b16 %v2916
    %v2984 = vunpack.c.h.b16 %v2916
    %v2985 = vunpack.c.l.b16 %v2917
    %v2986 = vunpack.c.h.b16 %v2917
    %v2987 = vunpack.c.l.b16 %v2918
    %v2988 = vunpack.c.h.b16 %v2918
    %v2989 = vunpack.c.l.b16 %v2919
    %v2990 = vunpack.c.h.b16 %v2919
    %v2991 = vunpack.c.l.b16 %v2920
    %v2992 = vunpack.c.h.b16 %v2920
    %v2993 = vunpack.c.l.b16 %v2921
    %v2994 = vunpack.c.h.b16 %v2921
    %v2995 = vunpack.c.l.b16 %v2922
    %v2996 = vunpack.c.h.b16 %v2922
    %v2997 = vunpack.c.l.b16 %v2923
    %v2998 = vunpack.c.h.b16 %v2923
    %v2999 = vunpack.c.l.b16 %v2924
    %v3000 = vunpack.c.h.b16 %v2924
    %v3001 = vunpack.c.l.b16 %v2925
    %v3002 = vunpack.c.h.b16 %v2925
    %v3003 = vunpack.c.l.b16 %v2926
    %v3004 = vunpack.c.h.b16 %v2926
    %v3005 = vunpack.c.l.b16 %v2927
    %v3006 = vunpack.c.h.b16 %v2927
    %v3007 = vunpack.c.l.b16 %v2928
    %v3008 = vunpack.c.h.b16 %v2928
    %v3009 = vunpack.c.l.b16 %v2929
    %v3010 = vunpack.c.h.b16 %v2929
    %v3011 = vunpack.c.l.b16 %v2930
    %v3012 = vunpack.c.h.b16 %v2930
    %v3013 = vunpack.c.l.b16 %v2931
    %v3014 = vunpack.c.h.b16 %v2931
    %v3015 = vunpack.c.l.b16 %v2932
    %v3016 = vunpack.c.h.b16 %v2932
    %v3017 = vunpack.c.l.b16 %v2933
    %v3018 = vunpack.c.h.b16 %v2933
    %v3019 = vunpack.c.l.b16 %v2934
    %v3020 = vunpack.c.h.b16 %v2934
    %v3021 = vunpack.c.l.b16 %v2935
    %v3022 = vunpack.c.h.b16 %v2935
    %v3023 = vunpack.c.l.b16 %v2936
    %v3024 = vunpack.c.h.b16 %v2936
    %v3025 = vunpack.c.l.b16 %v2937
    %v3026 = vunpack.c.h.b16 %v2937
    %v3027 = vunpack.c.l.b16 %v2938
    %v3028 = vunpack.c.h.b16 %v2938
    %v3029 = vunpack.c.l.b16 %v2939
    %v3030 = vunpack.c.h.b16 %v2939
    %v3031 = vunpack.c.l.b16 %v2940
    %v3032 = vunpack.c.h.b16 %v2940
    %v3033 = vunpack.c.l.b16 %v2941
    %v3034 = vunpack.c.h.b16 %v2941
    %v3035 = vunpack.c.l.b16 %v2942
    %v3036 = vunpack.c.h.b16 %v2942
    %v3037 = vunpack.c.l.b16 %v2943
    %v3038 = vunpack.c.h.b16 %v2943
    %v3039 = vunpack.c.l.b16 %v2944
    %v3040 = vunpack.c.h.b16 %v2944
    %v3041 = vpack.c.b16 %v2979, %v2977
    %v3042 = vpack.c.b16 %v2980, %v2978
    %v3043 = vpack.c.b16 %v2983, %v2981
    %v3044 = vpack.c.b16 %v2984, %v2982
    %v3045 = vpack.c.b16 %v2987, %v2985
    %v3046 = vpack.c.b16 %v2988, %v2986
    %v3047 = vpack.c.b16 %v2991, %v2989
    %v3048 = vpack.c.b16 %v2992, %v2990
    %v3049 = vpack.c.b16 %v2995, %v2993
    %v3050 = vpack.c.b16 %v2996, %v2994
    %v3051 = vpack.c.b16 %v2999, %v2997
    %v3052 = vpack.c.b16 %v3000, %v2998
    %v3053 = vpack.c.b16 %v3003, %v3001
    %v3054 = vpack.c.b16 %v3004, %v3002
    %v3055 = vpack.c.b16 %v3007, %v3005
    %v3056 = vpack.c.b16 %v3008, %v3006
    %v3057 = vpack.c.b16 %v3011, %v3009
    %v3058 = vpack.c.b16 %v3012, %v3010
    %v3059 = vpack.c.b16 %v3015, %v3013
    %v3060 = vpack.c.b16 %v3016, %v3014
    %v3061 = vpack.c.b16 %v3019, %v3017
    %v3062 = vpack.c.b16 %v3020, %v3018
    %v3063 = vpack.c.b16 %v3023, %v3021
    %v3064 = vpack.c.b16 %v3024, %v3022
    %v3065 = vpack.c.b16 %v3027, %v3025
    %v3066 = vpack.c.b16 %v3028, %v3026
    %v3067 = vpack.c.b16 %v3031, %v3029
    %v3068 = vpack.c.b16 %v3032, %v3030
    %v3069 = vpack.c.b16 %v3035, %v3033
    %v3070 = vpack.c.b16 %v3036, %v3034
    %v3071 = vpack.c.b16 %v3039, %v3037
    %v3072 = vpack.c.b16 %v3040, %v3038
    %3105 = vmatprep.subr.bf16.mxu0 %v3056
    %3106 = vmatpush1.bf16.msra.mxu0 %v3055
    %3107 = vmatprep.subr.bf16.mxu0 %v3054
    %3108 = vmatpush1.bf16.msra.mxu0 %v3053
    %3109 = vmatprep.subr.bf16.mxu0 %v3052
    %3110 = vmatpush1.bf16.msra.mxu0 %v3051
    %3111 = vmatprep.subr.bf16.mxu0 %v3050
    %3112 = vmatpush1.bf16.msra.mxu0 %v3049
    %3113 = vmatprep.subr.bf16.mxu0 %v3048
    %3114 = vmatpush1.bf16.msra.mxu0 %v3047
    %3115 = vmatprep.subr.bf16.mxu0 %v3046
    %3116 = vmatpush1.bf16.msra.mxu0 %v3045
    %3117 = vmatprep.subr.bf16.mxu0 %v3044
    %3118 = vmatpush1.bf16.msra.mxu0 %v3043
    %3119 = vmatprep.subr.bf16.mxu0 %v3042
    %3120 = vmatpush1.bf16.msra.mxu0 %v3041
    %3121 = vmatprep.subr.bf16.mxu0 %v3072
    %3122 = vmatpush2.bf16.msra.mxu0 %v3071
    %3123 = vmatprep.subr.bf16.mxu0 %v3070
    %3124 = vmatpush2.bf16.msra.mxu0 %v3069
    %3125 = vmatprep.subr.bf16.mxu0 %v3068
    %3126 = vmatpush2.bf16.msra.mxu0 %v3067
    %3127 = vmatprep.subr.bf16.mxu0 %v3066
    %3128 = vmatpush2.bf16.msra.mxu0 %v3065
    %3129 = vmatprep.subr.bf16.mxu0 %v3064
    %3130 = vmatpush2.bf16.msra.mxu0 %v3063
    %3131 = vmatprep.subr.bf16.mxu0 %v3062
    %3132 = vmatpush2.bf16.msra.mxu0 %v3061
    %3133 = vmatprep.subr.bf16.mxu0 %v3060
    %3134 = vmatpush2.bf16.msra.mxu0 %v3059
    %3135 = vmatprep.subr.bf16.mxu0 %v3058
    %3136 = vmatpush2.bf16.msra.mxu0 %v3057
    %3137 = vmatprep.mubr.bf16.mxu0 %v2672
    %3138 = vmatmul.mubr.bf16.gmra.mxu0 %v2671
    %v3139 = vpop.f32.mrf.mxu0
    %v3140 = vadd.f32 0.0, %v3139
    %v3141 = vpop.f32.mrf.mxu0
    %v3142 = vadd.f32 0.0, %v3141
    %v3143 = vpop.f32.mrf.mxu0
    %v3144 = vadd.f32 0.0, %v3143
    %v3145 = vpop.f32.mrf.mxu0
    %v3146 = vadd.f32 0.0, %v3145
    %3147 = vdwg.mxu0
    %s3148 = scalar_lea.vmem %s9, 32
    %v3149 = vld [vmem:[%s3148] sm:$0xff]
    %v3150 = vld [vmem:[%s3148 + $0x8] sm:$0xff]
    %v3151 = vld [vmem:[%s3148 + $0x10] sm:$0xff]
    %v3152 = vld [vmem:[%s3148 + $0x18] sm:$0xff]
    %vm3153 = vcmask 130048
    %v3155 = vsel %vm3153, %v3149, 0
    %v3158 = vsel %vm3153, %v3150, 0
    %v3161 = vsel %vm3153, %v3151, 0
    %v3164 = vsel %vm3153, %v3152, 0
    %3166 = vmatprep.subr.mxu0 0.0
    %3167 = vmatpush1.msra.mxu0 0.0
    %3168 = vmatprep.subr.mxu0 0.0
    %3169 = vmatpush1.msra.mxu0 0.0
    %3170 = vmatprep.subr.mxu0 0.0
    %3171 = vmatpush1.msra.mxu0 0.0
    %3172 = vmatprep.subr.mxu0 0.0
    %3173 = vmatpush1.msra.mxu0 0.0
    %3174 = vmatprep.subr.mxu0 0.0
    %3175 = vmatpush1.msra.mxu0 0.0
    %3176 = vmatprep.subr.mxu0 0.0
    %3177 = vmatpush1.msra.mxu0 0.0
    %3178 = vmatprep.subr.mxu0 0.0
    %3179 = vmatpush1.msra.mxu0 0.0
    %3180 = vmatprep.subr.mxu0 0.0
    %3181 = vmatpush1.msra.mxu0 0.0
    %3182 = vmatprep.subr.mxu0 0.0
    %3183 = vmatpush1.msra.mxu0 0.0
    %3184 = vmatprep.subr.mxu0 0.0
    %3185 = vmatpush1.msra.mxu0 0.0
    %3186 = vmatprep.subr.mxu0 0.0
    %3187 = vmatpush1.msra.mxu0 0.0
    %3188 = vmatprep.subr.mxu0 0.0
    %3189 = vmatpush1.msra.mxu0 0.0
    %3190 = vmatprep.subr.mxu0 0.0
    %3191 = vmatpush1.msra.mxu0 0.0
    %3192 = vmatprep.subr.mxu0 0.0
    %3193 = vmatpush1.msra.mxu0 0.0
    %3194 = vmatprep.subr.mxu0 %v3146
    %3195 = vmatpush1.msra.mxu0 %v3144
    %3196 = vmatprep.subr.mxu0 %v3142
    %3197 = vmatpush1.msra.mxu0 %v3140
    %3198 = vmatprep.subr.mxu0 0.0
    %3199 = vmatpush2.msra.mxu0 0.0
    %3200 = vmatprep.subr.mxu0 0.0
    %3201 = vmatpush2.msra.mxu0 0.0
    %3202 = vmatprep.subr.mxu0 0.0
    %3203 = vmatpush2.msra.mxu0 0.0
    %3204 = vmatprep.subr.mxu0 0.0
    %3205 = vmatpush2.msra.mxu0 0.0
    %3206 = vmatprep.subr.mxu0 0.0
    %3207 = vmatpush2.msra.mxu0 0.0
    %3208 = vmatprep.subr.mxu0 0.0
    %3209 = vmatpush2.msra.mxu0 0.0
    %3210 = vmatprep.subr.mxu0 0.0
    %3211 = vmatpush2.msra.mxu0 0.0
    %3212 = vmatprep.subr.mxu0 0.0
    %3213 = vmatpush2.msra.mxu0 0.0
    %3214 = vmatprep.subr.mxu0 0.0
    %3215 = vmatpush2.msra.mxu0 0.0
    %3216 = vmatprep.subr.mxu0 0.0
    %3217 = vmatpush2.msra.mxu0 0.0
    %3218 = vmatprep.subr.mxu0 0.0
    %3219 = vmatpush2.msra.mxu0 0.0
    %3220 = vmatprep.subr.mxu0 0.0
    %3221 = vmatpush2.msra.mxu0 0.0
    %3222 = vmatprep.subr.mxu0 0.0
    %3223 = vmatpush2.msra.mxu0 0.0
    %3224 = vmatprep.subr.mxu0 0.0
    %3225 = vmatpush2.msra.mxu0 0.0
    %3226 = vmatprep.subr.mxu0 0.0
    %3227 = vmatpush2.msra.mxu0 0.0
    %3228 = vmatprep.subr.mxu0 0.0
    %3229 = vmatpush2.msra.mxu0 0.0
    %3230 = vmatprep.mubr.f32.mxu0 0.0
    %3231 = vmatmul.mubr.f32.gmra.mxu0 %v3155
    %v3232 = vpop.f32.mrf.mxu0
    %v3233 = vadd.f32 0.0, %v3232
    %v3234 = vpop.f32.mrf.mxu0
    %v3235 = vadd.f32 0.0, %v3234
    %3236 = vmatprep.mubr.f32.mxu0 0.0
    %3237 = vmatmul.mubr.f32.gmra.mxu0 %v3158
    %v3238 = vpop.f32.mrf.mxu0
    %v3239 = vadd.f32 0.0, %v3238
    %v3240 = vpop.f32.mrf.mxu0
    %v3241 = vadd.f32 0.0, %v3240
    %3242 = vmatprep.mubr.f32.mxu0 0.0
    %3243 = vmatmul.mubr.f32.gmra.mxu0 %v3161
    %v3244 = vpop.f32.mrf.mxu0
    %v3245 = vadd.f32 0.0, %v3244
    %v3246 = vpop.f32.mrf.mxu0
    %v3247 = vadd.f32 0.0, %v3246
    %3248 = vmatprep.mubr.f32.mxu0 0.0
    %3249 = vmatmul.mubr.f32.gmra.mxu0 %v3164
    %v3250 = vpop.f32.mrf.mxu0
    %v3251 = vadd.f32 0.0, %v3250
    %v3252 = vpop.f32.mrf.mxu0
    %v3253 = vadd.f32 0.0, %v3252
    %3254 = vdwg.mxu0
    %v3256 = vsel %vm3153, %v2908, 0
    %v3259 = vsel %vm3153, %v2909, 0
    %v3262 = vsel %vm3153, %v2910, 0
    %v3265 = vsel %vm3153, %v2911, 0
    %3267 = vmatprep.subr.mxu0 0.0
    %3268 = vmatpush1.msra.mxu0 0.0
    %3269 = vmatprep.subr.mxu0 0.0
    %3270 = vmatpush1.msra.mxu0 0.0
    %3271 = vmatprep.subr.mxu0 0.0
    %3272 = vmatpush1.msra.mxu0 0.0
    %3273 = vmatprep.subr.mxu0 0.0
    %3274 = vmatpush1.msra.mxu0 0.0
    %3275 = vmatprep.subr.mxu0 0.0
    %3276 = vmatpush1.msra.mxu0 0.0
    %3277 = vmatprep.subr.mxu0 0.0
    %3278 = vmatpush1.msra.mxu0 0.0
    %3279 = vmatprep.subr.mxu0 0.0
    %3280 = vmatpush1.msra.mxu0 0.0
    %3281 = vmatprep.subr.mxu0 0.0
    %3282 = vmatpush1.msra.mxu0 0.0
    %3283 = vmatprep.subr.mxu0 0.0
    %3284 = vmatpush1.msra.mxu0 0.0
    %3285 = vmatprep.subr.mxu0 0.0
    %3286 = vmatpush1.msra.mxu0 0.0
    %3287 = vmatprep.subr.mxu0 0.0
    %3288 = vmatpush1.msra.mxu0 0.0
    %3289 = vmatprep.subr.mxu0 0.0
    %3290 = vmatpush1.msra.mxu0 0.0
    %3291 = vmatprep.subr.mxu0 0.0
    %3292 = vmatpush1.msra.mxu0 0.0
    %3293 = vmatprep.subr.mxu0 0.0
    %3294 = vmatpush1.msra.mxu0 0.0
    %3295 = vmatprep.subr.mxu0 %v2906
    %3296 = vmatpush1.msra.mxu0 %v2904
    %3297 = vmatprep.subr.mxu0 %v2902
    %3298 = vmatpush1.msra.mxu0 %v2900
    %3299 = vmatprep.subr.mxu0 0.0
    %3300 = vmatpush2.msra.mxu0 0.0
    %3301 = vmatprep.subr.mxu0 0.0
    %3302 = vmatpush2.msra.mxu0 0.0
    %3303 = vmatprep.subr.mxu0 0.0
    %3304 = vmatpush2.msra.mxu0 0.0
    %3305 = vmatprep.subr.mxu0 0.0
    %3306 = vmatpush2.msra.mxu0 0.0
    %3307 = vmatprep.subr.mxu0 0.0
    %3308 = vmatpush2.msra.mxu0 0.0
    %3309 = vmatprep.subr.mxu0 0.0
    %3310 = vmatpush2.msra.mxu0 0.0
    %3311 = vmatprep.subr.mxu0 0.0
    %3312 = vmatpush2.msra.mxu0 0.0
    %3313 = vmatprep.subr.mxu0 0.0
    %3314 = vmatpush2.msra.mxu0 0.0
    %3315 = vmatprep.subr.mxu0 0.0
    %3316 = vmatpush2.msra.mxu0 0.0
    %3317 = vmatprep.subr.mxu0 0.0
    %3318 = vmatpush2.msra.mxu0 0.0
    %3319 = vmatprep.subr.mxu0 0.0
    %3320 = vmatpush2.msra.mxu0 0.0
    %3321 = vmatprep.subr.mxu0 0.0
    %3322 = vmatpush2.msra.mxu0 0.0
    %3323 = vmatprep.subr.mxu0 0.0
    %3324 = vmatpush2.msra.mxu0 0.0
    %3325 = vmatprep.subr.mxu0 0.0
    %3326 = vmatpush2.msra.mxu0 0.0
    %3327 = vmatprep.subr.mxu0 0.0
    %3328 = vmatpush2.msra.mxu0 0.0
    %3329 = vmatprep.subr.mxu0 0.0
    %3330 = vmatpush2.msra.mxu0 0.0
    %3331 = vmatprep.mubr.f32.mxu0 0.0
    %3332 = vmatmul.mubr.f32.gmra.mxu0 %v3256
    %v3333 = vpop.f32.mrf.mxu0
    %v3334 = vadd.f32 %v3233, %v3333
    %v3335 = vpop.f32.mrf.mxu0
    %v3336 = vadd.f32 %v3235, %v3335
    %3337 = vmatprep.mubr.f32.mxu0 0.0
    %3338 = vmatmul.mubr.f32.gmra.mxu0 %v3259
    %v3339 = vpop.f32.mrf.mxu0
    %v3340 = vadd.f32 %v3239, %v3339
    %v3341 = vpop.f32.mrf.mxu0
    %v3342 = vadd.f32 %v3241, %v3341
    %3343 = vmatprep.mubr.f32.mxu0 0.0
    %3344 = vmatmul.mubr.f32.gmra.mxu0 %v3262
    %v3345 = vpop.f32.mrf.mxu0
    %v3346 = vadd.f32 %v3245, %v3345
    %v3347 = vpop.f32.mrf.mxu0
    %v3348 = vadd.f32 %v3247, %v3347
    %3349 = vmatprep.mubr.f32.mxu0 0.0
    %3350 = vmatmul.mubr.f32.gmra.mxu0 %v3265
    %v3351 = vpop.f32.mrf.mxu0
    %v3352 = vadd.f32 %v3251, %v3351
    %v3353 = vpop.f32.mrf.mxu0
    %v3354 = vadd.f32 %v3253, %v3353
    %3355 = vdwg.mxu0
    %s3356 = scalar_lea.vmem [#allocation6], 512
    %v3357 = vld [vmem:[%s3356] sm:$0xff]
    %v3358 = vld [vmem:[%s3356 + $0x8] sm:$0xff]
    %v3359 = vld [vmem:[%s3356 + $0x10] sm:$0xff]
    %v3360 = vld [vmem:[%s3356 + $0x18] sm:$0xff]
    %v3361 = vld [vmem:[%s3356 + $0x20] sm:$0xff]
    %v3362 = vld [vmem:[%s3356 + $0x28] sm:$0xff]
    %v3363 = vld [vmem:[%s3356 + $0x30] sm:$0xff]
    %v3364 = vld [vmem:[%s3356 + $0x38] sm:$0xff]
    %v3365 = vld [vmem:[%s3356 + $0x40] sm:$0xff]
    %v3366 = vld [vmem:[%s3356 + $0x48] sm:$0xff]
    %v3367 = vld [vmem:[%s3356 + $0x50] sm:$0xff]
    %v3368 = vld [vmem:[%s3356 + $0x58] sm:$0xff]
    %v3369 = vld [vmem:[%s3356 + $0x60] sm:$0xff]
    %v3370 = vld [vmem:[%s3356 + $0x68] sm:$0xff]
    %v3371 = vld [vmem:[%s3356 + $0x70] sm:$0xff]
    %v3372 = vld [vmem:[%s3356 + $0x78] sm:$0xff]
    %v3373 = vld [vmem:[%s3356 + $0x80] sm:$0xff]
    %v3374 = vld [vmem:[%s3356 + $0x88] sm:$0xff]
    %v3375 = vld [vmem:[%s3356 + $0x90] sm:$0xff]
    %v3376 = vld [vmem:[%s3356 + $0x98] sm:$0xff]
    %v3377 = vld [vmem:[%s3356 + $0xa0] sm:$0xff]
    %v3378 = vld [vmem:[%s3356 + $0xa8] sm:$0xff]
    %v3379 = vld [vmem:[%s3356 + $0xb0] sm:$0xff]
    %v3380 = vld [vmem:[%s3356 + $0xb8] sm:$0xff]
    %v3381 = vld [vmem:[%s3356 + $0xc0] sm:$0xff]
    %v3382 = vld [vmem:[%s3356 + $0xc8] sm:$0xff]
    %v3383 = vld [vmem:[%s3356 + $0xd0] sm:$0xff]
    %v3384 = vld [vmem:[%s3356 + $0xd8] sm:$0xff]
    %v3385 = vld [vmem:[%s3356 + $0xe0] sm:$0xff]
    %v3386 = vld [vmem:[%s3356 + $0xe8] sm:$0xff]
    %v3387 = vld [vmem:[%s3356 + $0xf0] sm:$0xff]
    %v3388 = vld [vmem:[%s3356 + $0xf8] sm:$0xff]
    %v3421 = vunpack.c.l.b16 %v3357
    %v3422 = vunpack.c.h.b16 %v3357
    %v3423 = vunpack.c.l.b16 %v3358
    %v3424 = vunpack.c.h.b16 %v3358
    %v3425 = vunpack.c.l.b16 %v3359
    %v3426 = vunpack.c.h.b16 %v3359
    %v3427 = vunpack.c.l.b16 %v3360
    %v3428 = vunpack.c.h.b16 %v3360
    %v3429 = vunpack.c.l.b16 %v3361
    %v3430 = vunpack.c.h.b16 %v3361
    %v3431 = vunpack.c.l.b16 %v3362
    %v3432 = vunpack.c.h.b16 %v3362
    %v3433 = vunpack.c.l.b16 %v3363
    %v3434 = vunpack.c.h.b16 %v3363
    %v3435 = vunpack.c.l.b16 %v3364
    %v3436 = vunpack.c.h.b16 %v3364
    %v3437 = vunpack.c.l.b16 %v3365
    %v3438 = vunpack.c.h.b16 %v3365
    %v3439 = vunpack.c.l.b16 %v3366
    %v3440 = vunpack.c.h.b16 %v3366
    %v3441 = vunpack.c.l.b16 %v3367
    %v3442 = vunpack.c.h.b16 %v3367
    %v3443 = vunpack.c.l.b16 %v3368
    %v3444 = vunpack.c.h.b16 %v3368
    %v3445 = vunpack.c.l.b16 %v3369
    %v3446 = vunpack.c.h.b16 %v3369
    %v3447 = vunpack.c.l.b16 %v3370
    %v3448 = vunpack.c.h.b16 %v3370
    %v3449 = vunpack.c.l.b16 %v3371
    %v3450 = vunpack.c.h.b16 %v3371
    %v3451 = vunpack.c.l.b16 %v3372
    %v3452 = vunpack.c.h.b16 %v3372
    %v3453 = vunpack.c.l.b16 %v3373
    %v3454 = vunpack.c.h.b16 %v3373
    %v3455 = vunpack.c.l.b16 %v3374
    %v3456 = vunpack.c.h.b16 %v3374
    %v3457 = vunpack.c.l.b16 %v3375
    %v3458 = vunpack.c.h.b16 %v3375
    %v3459 = vunpack.c.l.b16 %v3376
    %v3460 = vunpack.c.h.b16 %v3376
    %v3461 = vunpack.c.l.b16 %v3377
    %v3462 = vunpack.c.h.b16 %v3377
    %v3463 = vunpack.c.l.b16 %v3378
    %v3464 = vunpack.c.h.b16 %v3378
    %v3465 = vunpack.c.l.b16 %v3379
    %v3466 = vunpack.c.h.b16 %v3379
    %v3467 = vunpack.c.l.b16 %v3380
    %v3468 = vunpack.c.h.b16 %v3380
    %v3469 = vunpack.c.l.b16 %v3381
    %v3470 = vunpack.c.h.b16 %v3381
    %v3471 = vunpack.c.l.b16 %v3382
    %v3472 = vunpack.c.h.b16 %v3382
    %v3473 = vunpack.c.l.b16 %v3383
    %v3474 = vunpack.c.h.b16 %v3383
    %v3475 = vunpack.c.l.b16 %v3384
    %v3476 = vunpack.c.h.b16 %v3384
    %v3477 = vunpack.c.l.b16 %v3385
    %v3478 = vunpack.c.h.b16 %v3385
    %v3479 = vunpack.c.l.b16 %v3386
    %v3480 = vunpack.c.h.b16 %v3386
    %v3481 = vunpack.c.l.b16 %v3387
    %v3482 = vunpack.c.h.b16 %v3387
    %v3483 = vunpack.c.l.b16 %v3388
    %v3484 = vunpack.c.h.b16 %v3388
    %v3485 = vpack.c.b16 %v3423, %v3421
    %v3486 = vpack.c.b16 %v3424, %v3422
    %v3487 = vpack.c.b16 %v3427, %v3425
    %v3488 = vpack.c.b16 %v3428, %v3426
    %v3489 = vpack.c.b16 %v3431, %v3429
    %v3490 = vpack.c.b16 %v3432, %v3430
    %v3491 = vpack.c.b16 %v3435, %v3433
    %v3492 = vpack.c.b16 %v3436, %v3434
    %v3493 = vpack.c.b16 %v3439, %v3437
    %v3494 = vpack.c.b16 %v3440, %v3438
    %v3495 = vpack.c.b16 %v3443, %v3441
    %v3496 = vpack.c.b16 %v3444, %v3442
    %v3497 = vpack.c.b16 %v3447, %v3445
    %v3498 = vpack.c.b16 %v3448, %v3446
    %v3499 = vpack.c.b16 %v3451, %v3449
    %v3500 = vpack.c.b16 %v3452, %v3450
    %v3501 = vpack.c.b16 %v3455, %v3453
    %v3502 = vpack.c.b16 %v3456, %v3454
    %v3503 = vpack.c.b16 %v3459, %v3457
    %v3504 = vpack.c.b16 %v3460, %v3458
    %v3505 = vpack.c.b16 %v3463, %v3461
    %v3506 = vpack.c.b16 %v3464, %v3462
    %v3507 = vpack.c.b16 %v3467, %v3465
    %v3508 = vpack.c.b16 %v3468, %v3466
    %v3509 = vpack.c.b16 %v3471, %v3469
    %v3510 = vpack.c.b16 %v3472, %v3470
    %v3511 = vpack.c.b16 %v3475, %v3473
    %v3512 = vpack.c.b16 %v3476, %v3474
    %v3513 = vpack.c.b16 %v3479, %v3477
    %v3514 = vpack.c.b16 %v3480, %v3478
    %v3515 = vpack.c.b16 %v3483, %v3481
    %v3516 = vpack.c.b16 %v3484, %v3482
    %3549 = vmatprep.subr.bf16.mxu0 %v3500
    %3550 = vmatpush1.bf16.msra.mxu0 %v3499
    %3551 = vmatprep.subr.bf16.mxu0 %v3498
    %3552 = vmatpush1.bf16.msra.mxu0 %v3497
    %3553 = vmatprep.subr.bf16.mxu0 %v3496
    %3554 = vmatpush1.bf16.msra.mxu0 %v3495
    %3555 = vmatprep.subr.bf16.mxu0 %v3494
    %3556 = vmatpush1.bf16.msra.mxu0 %v3493
    %3557 = vmatprep.subr.bf16.mxu0 %v3492
    %3558 = vmatpush1.bf16.msra.mxu0 %v3491
    %3559 = vmatprep.subr.bf16.mxu0 %v3490
    %3560 = vmatpush1.bf16.msra.mxu0 %v3489
    %3561 = vmatprep.subr.bf16.mxu0 %v3488
    %3562 = vmatpush1.bf16.msra.mxu0 %v3487
    %3563 = vmatprep.subr.bf16.mxu0 %v3486
    %3564 = vmatpush1.bf16.msra.mxu0 %v3485
    %3565 = vmatprep.subr.bf16.mxu0 %v3516
    %3566 = vmatpush2.bf16.msra.mxu0 %v3515
    %3567 = vmatprep.subr.bf16.mxu0 %v3514
    %3568 = vmatpush2.bf16.msra.mxu0 %v3513
    %3569 = vmatprep.subr.bf16.mxu0 %v3512
    %3570 = vmatpush2.bf16.msra.mxu0 %v3511
    %3571 = vmatprep.subr.bf16.mxu0 %v3510
    %3572 = vmatpush2.bf16.msra.mxu0 %v3509
    %3573 = vmatprep.subr.bf16.mxu0 %v3508
    %3574 = vmatpush2.bf16.msra.mxu0 %v3507
    %3575 = vmatprep.subr.bf16.mxu0 %v3506
    %3576 = vmatpush2.bf16.msra.mxu0 %v3505
    %3577 = vmatprep.subr.bf16.mxu0 %v3504
    %3578 = vmatpush2.bf16.msra.mxu0 %v3503
    %3579 = vmatprep.subr.bf16.mxu0 %v3502
    %3580 = vmatpush2.bf16.msra.mxu0 %v3501
    %3581 = vmatprep.mubr.bf16.mxu0 %v2672
    %3582 = vmatmul.mubr.bf16.gmra.mxu0 %v2671
    %v3583 = vpop.f32.mrf.mxu0
    %v3584 = vadd.f32 0.0, %v3583
    %v3585 = vpop.f32.mrf.mxu0
    %v3586 = vadd.f32 0.0, %v3585
    %v3587 = vpop.f32.mrf.mxu0
    %v3588 = vadd.f32 0.0, %v3587
    %v3589 = vpop.f32.mrf.mxu0
    %v3590 = vadd.f32 0.0, %v3589
    %3591 = vdwg.mxu0
    %s3592 = scalar_lea.vmem %s9, 64
    %v3593 = vld [vmem:[%s3592] sm:$0xff]
    %v3594 = vld [vmem:[%s3592 + $0x8] sm:$0xff]
    %v3595 = vld [vmem:[%s3592 + $0x10] sm:$0xff]
    %v3596 = vld [vmem:[%s3592 + $0x18] sm:$0xff]
    %v3598 = vsel %vm3153, %v3593, 0
    %v3601 = vsel %vm3153, %v3594, 0
    %v3604 = vsel %vm3153, %v3595, 0
    %v3607 = vsel %vm3153, %v3596, 0
    %3609 = vmatprep.subr.mxu0 0.0
    %3610 = vmatpush1.msra.mxu0 0.0
    %3611 = vmatprep.subr.mxu0 0.0
    %3612 = vmatpush1.msra.mxu0 0.0
    %3613 = vmatprep.subr.mxu0 0.0
    %3614 = vmatpush1.msra.mxu0 0.0
    %3615 = vmatprep.subr.mxu0 0.0
    %3616 = vmatpush1.msra.mxu0 0.0
    %3617 = vmatprep.subr.mxu0 0.0
    %3618 = vmatpush1.msra.mxu0 0.0
    %3619 = vmatprep.subr.mxu0 0.0
    %3620 = vmatpush1.msra.mxu0 0.0
    %3621 = vmatprep.subr.mxu0 0.0
    %3622 = vmatpush1.msra.mxu0 0.0
    %3623 = vmatprep.subr.mxu0 0.0
    %3624 = vmatpush1.msra.mxu0 0.0
    %3625 = vmatprep.subr.mxu0 0.0
    %3626 = vmatpush1.msra.mxu0 0.0
    %3627 = vmatprep.subr.mxu0 0.0
    %3628 = vmatpush1.msra.mxu0 0.0
    %3629 = vmatprep.subr.mxu0 0.0
    %3630 = vmatpush1.msra.mxu0 0.0
    %3631 = vmatprep.subr.mxu0 0.0
    %3632 = vmatpush1.msra.mxu0 0.0
    %3633 = vmatprep.subr.mxu0 0.0
    %3634 = vmatpush1.msra.mxu0 0.0
    %3635 = vmatprep.subr.mxu0 0.0
    %3636 = vmatpush1.msra.mxu0 0.0
    %3637 = vmatprep.subr.mxu0 %v3590
    %3638 = vmatpush1.msra.mxu0 %v3588
    %3639 = vmatprep.subr.mxu0 %v3586
    %3640 = vmatpush1.msra.mxu0 %v3584
    %3641 = vmatprep.subr.mxu0 0.0
    %3642 = vmatpush2.msra.mxu0 0.0
    %3643 = vmatprep.subr.mxu0 0.0
    %3644 = vmatpush2.msra.mxu0 0.0
    %3645 = vmatprep.subr.mxu0 0.0
    %3646 = vmatpush2.msra.mxu0 0.0
    %3647 = vmatprep.subr.mxu0 0.0
    %3648 = vmatpush2.msra.mxu0 0.0
    %3649 = vmatprep.subr.mxu0 0.0
    %3650 = vmatpush2.msra.mxu0 0.0
    %3651 = vmatprep.subr.mxu0 0.0
    %3652 = vmatpush2.msra.mxu0 0.0
    %3653 = vmatprep.subr.mxu0 0.0
    %3654 = vmatpush2.msra.mxu0 0.0
    %3655 = vmatprep.subr.mxu0 0.0
    %3656 = vmatpush2.msra.mxu0 0.0
    %3657 = vmatprep.subr.mxu0 0.0
    %3658 = vmatpush2.msra.mxu0 0.0
    %3659 = vmatprep.subr.mxu0 0.0
    %3660 = vmatpush2.msra.mxu0 0.0
    %3661 = vmatprep.subr.mxu0 0.0
    %3662 = vmatpush2.msra.mxu0 0.0
    %3663 = vmatprep.subr.mxu0 0.0
    %3664 = vmatpush2.msra.mxu0 0.0
    %3665 = vmatprep.subr.mxu0 0.0
    %3666 = vmatpush2.msra.mxu0 0.0
    %3667 = vmatprep.subr.mxu0 0.0
    %3668 = vmatpush2.msra.mxu0 0.0
    %3669 = vmatprep.subr.mxu0 0.0
    %3670 = vmatpush2.msra.mxu0 0.0
    %3671 = vmatprep.subr.mxu0 0.0
    %3672 = vmatpush2.msra.mxu0 0.0
    %3673 = vmatprep.mubr.f32.mxu0 0.0
    %3674 = vmatmul.mubr.f32.gmra.mxu0 %v3598
    %v3675 = vpop.f32.mrf.mxu0
    %v3676 = vadd.f32 0.0, %v3675
    %v3677 = vpop.f32.mrf.mxu0
    %v3678 = vadd.f32 0.0, %v3677
    %3679 = vmatprep.mubr.f32.mxu0 0.0
    %3680 = vmatmul.mubr.f32.gmra.mxu0 %v3601
    %v3681 = vpop.f32.mrf.mxu0
    %v3682 = vadd.f32 0.0, %v3681
    %v3683 = vpop.f32.mrf.mxu0
    %v3684 = vadd.f32 0.0, %v3683
    %3685 = vmatprep.mubr.f32.mxu0 0.0
    %3686 = vmatmul.mubr.f32.gmra.mxu0 %v3604
    %v3687 = vpop.f32.mrf.mxu0
    %v3688 = vadd.f32 0.0, %v3687
    %v3689 = vpop.f32.mrf.mxu0
    %v3690 = vadd.f32 0.0, %v3689
    %3691 = vmatprep.mubr.f32.mxu0 0.0
    %3692 = vmatmul.mubr.f32.gmra.mxu0 %v3607
    %v3693 = vpop.f32.mrf.mxu0
    %v3694 = vadd.f32 0.0, %v3693
    %v3695 = vpop.f32.mrf.mxu0
    %v3696 = vadd.f32 0.0, %v3695
    %3697 = vdwg.mxu0
    %v3698 = vadd.f32 %v3334, %v3676
    %v3699 = vadd.f32 %v3336, %v3678
    %v3700 = vadd.f32 %v3340, %v3682
    %v3701 = vadd.f32 %v3342, %v3684
    %v3702 = vadd.f32 %v3346, %v3688
    %v3703 = vadd.f32 %v3348, %v3690
    %v3704 = vadd.f32 %v3352, %v3694
    %v3705 = vadd.f32 %v3354, %v3696
    %s3706 = scalar_lea.vmem [#allocation6], 768
    %v3707 = vld [vmem:[%s3706] sm:$0xff]
    %v3708 = vld [vmem:[%s3706 + $0x8] sm:$0xff]
    %v3709 = vld [vmem:[%s3706 + $0x10] sm:$0xff]
    %v3710 = vld [vmem:[%s3706 + $0x18] sm:$0xff]
    %v3711 = vld [vmem:[%s3706 + $0x20] sm:$0xff]
    %v3712 = vld [vmem:[%s3706 + $0x28] sm:$0xff]
    %v3713 = vld [vmem:[%s3706 + $0x30] sm:$0xff]
    %v3714 = vld [vmem:[%s3706 + $0x38] sm:$0xff]
    %v3715 = vld [vmem:[%s3706 + $0x40] sm:$0xff]
    %v3716 = vld [vmem:[%s3706 + $0x48] sm:$0xff]
    %v3717 = vld [vmem:[%s3706 + $0x50] sm:$0xff]
    %v3718 = vld [vmem:[%s3706 + $0x58] sm:$0xff]
    %v3719 = vld [vmem:[%s3706 + $0x60] sm:$0xff]
    %v3720 = vld [vmem:[%s3706 + $0x68] sm:$0xff]
    %v3721 = vld [vmem:[%s3706 + $0x70] sm:$0xff]
    %v3722 = vld [vmem:[%s3706 + $0x78] sm:$0xff]
    %v3723 = vld [vmem:[%s3706 + $0x80] sm:$0xff]
    %v3724 = vld [vmem:[%s3706 + $0x88] sm:$0xff]
    %v3725 = vld [vmem:[%s3706 + $0x90] sm:$0xff]
    %v3726 = vld [vmem:[%s3706 + $0x98] sm:$0xff]
    %v3727 = vld [vmem:[%s3706 + $0xa0] sm:$0xff]
    %v3728 = vld [vmem:[%s3706 + $0xa8] sm:$0xff]
    %v3729 = vld [vmem:[%s3706 + $0xb0] sm:$0xff]
    %v3730 = vld [vmem:[%s3706 + $0xb8] sm:$0xff]
    %v3731 = vld [vmem:[%s3706 + $0xc0] sm:$0xff]
    %v3732 = vld [vmem:[%s3706 + $0xc8] sm:$0xff]
    %v3733 = vld [vmem:[%s3706 + $0xd0] sm:$0xff]
    %v3734 = vld [vmem:[%s3706 + $0xd8] sm:$0xff]
    %v3735 = vld [vmem:[%s3706 + $0xe0] sm:$0xff]
    %v3736 = vld [vmem:[%s3706 + $0xe8] sm:$0xff]
    %v3737 = vld [vmem:[%s3706 + $0xf0] sm:$0xff]
    %v3738 = vld [vmem:[%s3706 + $0xf8] sm:$0xff]
    %v3771 = vunpack.c.l.b16 %v3707
    %v3772 = vunpack.c.h.b16 %v3707
    %v3773 = vunpack.c.l.b16 %v3708
    %v3774 = vunpack.c.h.b16 %v3708
    %v3775 = vunpack.c.l.b16 %v3709
    %v3776 = vunpack.c.h.b16 %v3709
    %v3777 = vunpack.c.l.b16 %v3710
    %v3778 = vunpack.c.h.b16 %v3710
    %v3779 = vunpack.c.l.b16 %v3711
    %v3780 = vunpack.c.h.b16 %v3711
    %v3781 = vunpack.c.l.b16 %v3712
    %v3782 = vunpack.c.h.b16 %v3712
    %v3783 = vunpack.c.l.b16 %v3713
    %v3784 = vunpack.c.h.b16 %v3713
    %v3785 = vunpack.c.l.b16 %v3714
    %v3786 = vunpack.c.h.b16 %v3714
    %v3787 = vunpack.c.l.b16 %v3715
    %v3788 = vunpack.c.h.b16 %v3715
    %v3789 = vunpack.c.l.b16 %v3716
    %v3790 = vunpack.c.h.b16 %v3716
    %v3791 = vunpack.c.l.b16 %v3717
    %v3792 = vunpack.c.h.b16 %v3717
    %v3793 = vunpack.c.l.b16 %v3718
    %v3794 = vunpack.c.h.b16 %v3718
    %v3795 = vunpack.c.l.b16 %v3719
    %v3796 = vunpack.c.h.b16 %v3719
    %v3797 = vunpack.c.l.b16 %v3720
    %v3798 = vunpack.c.h.b16 %v3720
    %v3799 = vunpack.c.l.b16 %v3721
    %v3800 = vunpack.c.h.b16 %v3721
    %v3801 = vunpack.c.l.b16 %v3722
    %v3802 = vunpack.c.h.b16 %v3722
    %v3803 = vunpack.c.l.b16 %v3723
    %v3804 = vunpack.c.h.b16 %v3723
    %v3805 = vunpack.c.l.b16 %v3724
    %v3806 = vunpack.c.h.b16 %v3724
    %v3807 = vunpack.c.l.b16 %v3725
    %v3808 = vunpack.c.h.b16 %v3725
    %v3809 = vunpack.c.l.b16 %v3726
    %v3810 = vunpack.c.h.b16 %v3726
    %v3811 = vunpack.c.l.b16 %v3727
    %v3812 = vunpack.c.h.b16 %v3727
    %v3813 = vunpack.c.l.b16 %v3728
    %v3814 = vunpack.c.h.b16 %v3728
    %v3815 = vunpack.c.l.b16 %v3729
    %v3816 = vunpack.c.h.b16 %v3729
    %v3817 = vunpack.c.l.b16 %v3730
    %v3818 = vunpack.c.h.b16 %v3730
    %v3819 = vunpack.c.l.b16 %v3731
    %v3820 = vunpack.c.h.b16 %v3731
    %v3821 = vunpack.c.l.b16 %v3732
    %v3822 = vunpack.c.h.b16 %v3732
    %v3823 = vunpack.c.l.b16 %v3733
    %v3824 = vunpack.c.h.b16 %v3733
    %v3825 = vunpack.c.l.b16 %v3734
    %v3826 = vunpack.c.h.b16 %v3734
    %v3827 = vunpack.c.l.b16 %v3735
    %v3828 = vunpack.c.h.b16 %v3735
    %v3829 = vunpack.c.l.b16 %v3736
    %v3830 = vunpack.c.h.b16 %v3736
    %v3831 = vunpack.c.l.b16 %v3737
    %v3832 = vunpack.c.h.b16 %v3737
    %v3833 = vunpack.c.l.b16 %v3738
    %v3834 = vunpack.c.h.b16 %v3738
    %v3835 = vpack.c.b16 %v3773, %v3771
    %v3836 = vpack.c.b16 %v3774, %v3772
    %v3837 = vpack.c.b16 %v3777, %v3775
    %v3838 = vpack.c.b16 %v3778, %v3776
    %v3839 = vpack.c.b16 %v3781, %v3779
    %v3840 = vpack.c.b16 %v3782, %v3780
    %v3841 = vpack.c.b16 %v3785, %v3783
    %v3842 = vpack.c.b16 %v3786, %v3784
    %v3843 = vpack.c.b16 %v3789, %v3787
    %v3844 = vpack.c.b16 %v3790, %v3788
    %v3845 = vpack.c.b16 %v3793, %v3791
    %v3846 = vpack.c.b16 %v3794, %v3792
    %v3847 = vpack.c.b16 %v3797, %v3795
    %v3848 = vpack.c.b16 %v3798, %v3796
    %v3849 = vpack.c.b16 %v3801, %v3799
    %v3850 = vpack.c.b16 %v3802, %v3800
    %v3851 = vpack.c.b16 %v3805, %v3803
    %v3852 = vpack.c.b16 %v3806, %v3804
    %v3853 = vpack.c.b16 %v3809, %v3807
    %v3854 = vpack.c.b16 %v3810, %v3808
    %v3855 = vpack.c.b16 %v3813, %v3811
    %v3856 = vpack.c.b16 %v3814, %v3812
    %v3857 = vpack.c.b16 %v3817, %v3815
    %v3858 = vpack.c.b16 %v3818, %v3816
    %v3859 = vpack.c.b16 %v3821, %v3819
    %v3860 = vpack.c.b16 %v3822, %v3820
    %v3861 = vpack.c.b16 %v3825, %v3823
    %v3862 = vpack.c.b16 %v3826, %v3824
    %v3863 = vpack.c.b16 %v3829, %v3827
    %v3864 = vpack.c.b16 %v3830, %v3828
    %v3865 = vpack.c.b16 %v3833, %v3831
    %v3866 = vpack.c.b16 %v3834, %v3832
    %3899 = vmatprep.subr.bf16.mxu0 %v3850
    %3900 = vmatpush1.bf16.msra.mxu0 %v3849
    %3901 = vmatprep.subr.bf16.mxu0 %v3848
    %3902 = vmatpush1.bf16.msra.mxu0 %v3847
    %3903 = vmatprep.subr.bf16.mxu0 %v3846
    %3904 = vmatpush1.bf16.msra.mxu0 %v3845
    %3905 = vmatprep.subr.bf16.mxu0 %v3844
    %3906 = vmatpush1.bf16.msra.mxu0 %v3843
    %3907 = vmatprep.subr.bf16.mxu0 %v3842
    %3908 = vmatpush1.bf16.msra.mxu0 %v3841
    %3909 = vmatprep.subr.bf16.mxu0 %v3840
    %3910 = vmatpush1.bf16.msra.mxu0 %v3839
    %3911 = vmatprep.subr.bf16.mxu0 %v3838
    %3912 = vmatpush1.bf16.msra.mxu0 %v3837
    %3913 = vmatprep.subr.bf16.mxu0 %v3836
    %3914 = vmatpush1.bf16.msra.mxu0 %v3835
    %3915 = vmatprep.subr.bf16.mxu0 %v3866
    %3916 = vmatpush2.bf16.msra.mxu0 %v3865
    %3917 = vmatprep.subr.bf16.mxu0 %v3864
    %3918 = vmatpush2.bf16.msra.mxu0 %v3863
    %3919 = vmatprep.subr.bf16.mxu0 %v3862
    %3920 = vmatpush2.bf16.msra.mxu0 %v3861
    %3921 = vmatprep.subr.bf16.mxu0 %v3860
    %3922 = vmatpush2.bf16.msra.mxu0 %v3859
    %3923 = vmatprep.subr.bf16.mxu0 %v3858
    %3924 = vmatpush2.bf16.msra.mxu0 %v3857
    %3925 = vmatprep.subr.bf16.mxu0 %v3856
    %3926 = vmatpush2.bf16.msra.mxu0 %v3855
    %3927 = vmatprep.subr.bf16.mxu0 %v3854
    %3928 = vmatpush2.bf16.msra.mxu0 %v3853
    %3929 = vmatprep.subr.bf16.mxu0 %v3852
    %3930 = vmatpush2.bf16.msra.mxu0 %v3851
    %3931 = vmatprep.mubr.bf16.mxu0 %v2672
    %3932 = vmatmul.mubr.bf16.gmra.mxu0 %v2671
    %v3933 = vpop.f32.mrf.mxu0
    %v3934 = vadd.f32 0.0, %v3933
    %v3935 = vpop.f32.mrf.mxu0
    %v3936 = vadd.f32 0.0, %v3935
    %v3937 = vpop.f32.mrf.mxu0
    %v3938 = vadd.f32 0.0, %v3937
    %v3939 = vpop.f32.mrf.mxu0
    %v3940 = vadd.f32 0.0, %v3939
    %3941 = vdwg.mxu0
    %s3942 = scalar_lea.vmem %s9, 96
    %v3943 = vld [vmem:[%s3942] sm:$0xff]
    %v3944 = vld [vmem:[%s3942 + $0x8] sm:$0xff]
    %v3945 = vld [vmem:[%s3942 + $0x10] sm:$0xff]
    %v3946 = vld [vmem:[%s3942 + $0x18] sm:$0xff]
    %v3948 = vsel %vm3153, %v3943, 0
    %v3951 = vsel %vm3153, %v3944, 0
    %v3954 = vsel %vm3153, %v3945, 0
    %v3957 = vsel %vm3153, %v3946, 0
    %3959 = vmatprep.subr.mxu0 0.0
    %3960 = vmatpush1.msra.mxu0 0.0
    %3961 = vmatprep.subr.mxu0 0.0
    %3962 = vmatpush1.msra.mxu0 0.0
    %3963 = vmatprep.subr.mxu0 0.0
    %3964 = vmatpush1.msra.mxu0 0.0
    %3965 = vmatprep.subr.mxu0 0.0
    %3966 = vmatpush1.msra.mxu0 0.0
    %3967 = vmatprep.subr.mxu0 0.0
    %3968 = vmatpush1.msra.mxu0 0.0
    %3969 = vmatprep.subr.mxu0 0.0
    %3970 = vmatpush1.msra.mxu0 0.0
    %3971 = vmatprep.subr.mxu0 0.0
    %3972 = vmatpush1.msra.mxu0 0.0
    %3973 = vmatprep.subr.mxu0 0.0
    %3974 = vmatpush1.msra.mxu0 0.0
    %3975 = vmatprep.subr.mxu0 0.0
    %3976 = vmatpush1.msra.mxu0 0.0
    %3977 = vmatprep.subr.mxu0 0.0
    %3978 = vmatpush1.msra.mxu0 0.0
    %3979 = vmatprep.subr.mxu0 0.0
    %3980 = vmatpush1.msra.mxu0 0.0
    %3981 = vmatprep.subr.mxu0 0.0
    %3982 = vmatpush1.msra.mxu0 0.0
    %3983 = vmatprep.subr.mxu0 0.0
    %3984 = vmatpush1.msra.mxu0 0.0
    %3985 = vmatprep.subr.mxu0 0.0
    %3986 = vmatpush1.msra.mxu0 0.0
    %3987 = vmatprep.subr.mxu0 %v3940
    %3988 = vmatpush1.msra.mxu0 %v3938
    %3989 = vmatprep.subr.mxu0 %v3936
    %3990 = vmatpush1.msra.mxu0 %v3934
    %3991 = vmatprep.subr.mxu0 0.0
    %3992 = vmatpush2.msra.mxu0 0.0
    %3993 = vmatprep.subr.mxu0 0.0
    %3994 = vmatpush2.msra.mxu0 0.0
    %3995 = vmatprep.subr.mxu0 0.0
    %3996 = vmatpush2.msra.mxu0 0.0
    %3997 = vmatprep.subr.mxu0 0.0
    %3998 = vmatpush2.msra.mxu0 0.0
    %3999 = vmatprep.subr.mxu0 0.0
    %4000 = vmatpush2.msra.mxu0 0.0
    %4001 = vmatprep.subr.mxu0 0.0
    %4002 = vmatpush2.msra.mxu0 0.0
    %4003 = vmatprep.subr.mxu0 0.0
    %4004 = vmatpush2.msra.mxu0 0.0
    %4005 = vmatprep.subr.mxu0 0.0
    %4006 = vmatpush2.msra.mxu0 0.0
    %4007 = vmatprep.subr.mxu0 0.0
    %4008 = vmatpush2.msra.mxu0 0.0
    %4009 = vmatprep.subr.mxu0 0.0
    %4010 = vmatpush2.msra.mxu0 0.0
    %4011 = vmatprep.subr.mxu0 0.0
    %4012 = vmatpush2.msra.mxu0 0.0
    %4013 = vmatprep.subr.mxu0 0.0
    %4014 = vmatpush2.msra.mxu0 0.0
    %4015 = vmatprep.subr.mxu0 0.0
    %4016 = vmatpush2.msra.mxu0 0.0
    %4017 = vmatprep.subr.mxu0 0.0
    %4018 = vmatpush2.msra.mxu0 0.0
    %4019 = vmatprep.subr.mxu0 0.0
    %4020 = vmatpush2.msra.mxu0 0.0
    %4021 = vmatprep.subr.mxu0 0.0
    %4022 = vmatpush2.msra.mxu0 0.0
    %4023 = vmatprep.mubr.f32.mxu0 0.0
    %4024 = vmatmul.mubr.f32.gmra.mxu0 %v3948
    %v4025 = vpop.f32.mrf.mxu0
    %v4026 = vadd.f32 0.0, %v4025
    %v4027 = vpop.f32.mrf.mxu0
    %v4028 = vadd.f32 0.0, %v4027
    %4029 = vmatprep.mubr.f32.mxu0 0.0
    %4030 = vmatmul.mubr.f32.gmra.mxu0 %v3951
    %v4031 = vpop.f32.mrf.mxu0
    %v4032 = vadd.f32 0.0, %v4031
    %v4033 = vpop.f32.mrf.mxu0
    %v4034 = vadd.f32 0.0, %v4033
    %4035 = vmatprep.mubr.f32.mxu0 0.0
    %4036 = vmatmul.mubr.f32.gmra.mxu0 %v3954
    %v4037 = vpop.f32.mrf.mxu0
    %v4038 = vadd.f32 0.0, %v4037
    %v4039 = vpop.f32.mrf.mxu0
    %v4040 = vadd.f32 0.0, %v4039
    %4041 = vmatprep.mubr.f32.mxu0 0.0
    %4042 = vmatmul.mubr.f32.gmra.mxu0 %v3957
    %v4043 = vpop.f32.mrf.mxu0
    %v4044 = vadd.f32 0.0, %v4043
    %v4045 = vpop.f32.mrf.mxu0
    %v4046 = vadd.f32 0.0, %v4045
    %4047 = vdwg.mxu0
    %v4048 = vadd.f32 %v3698, %v4026
    %v4049 = vadd.f32 %v3699, %v4028
    %v4050 = vadd.f32 %v3700, %v4032
    %v4051 = vadd.f32 %v3701, %v4034
    %v4052 = vadd.f32 %v3702, %v4038
    %v4053 = vadd.f32 %v3703, %v4040
    %v4054 = vadd.f32 %v3704, %v4044
    %v4055 = vadd.f32 %v3705, %v4046
    %v4056 = vadd.f32 %v4048, %v4050
    %v4057 = vadd.f32 %v4056, %v4052
    %v4058 = vadd.f32 %v4057, %v4054
    %v4059 = vrot.slane %v4058, 4
    %v4060 = vadd.f32 %v4058, %v4059
    %v4061 = vrot.slane %v4060, 2
    %v4062 = vadd.f32 %v4060, %v4061
    %v4063 = vrot.slane %v4062, 1
    %v4064 = vadd.f32 %v4062, %v4063
    %v4065 = vadd.f32 %v4049, %v4051
    %v4066 = vadd.f32 %v4065, %v4053
    %v4067 = vadd.f32 %v4066, %v4055
    %v4068 = vrot.slane %v4067, 4
    %v4069 = vadd.f32 %v4067, %v4068
    %v4070 = vrot.slane %v4069, 2
    %v4071 = vadd.f32 %v4069, %v4070
    %v4072 = vrot.slane %v4071, 1
    %v4073 = vadd.f32 %v4071, %v4072
    %v4074 = vrcp.pop 32.0
    %v4075 = vmul.f32 %v4064, %v4074
    %v4076 = vmul.f32 %v4073, %v4074
    %v4077 = vld [vmem:[#allocation13] sm:$0xff]
    %v4078 = vld [vmem:[#allocation13 + $0x8] sm:$0xff]
    %v4079 = vld [vmem:[#allocation13 + $0x10] sm:$0xff]
    %v4080 = vld [vmem:[#allocation13 + $0x18] sm:$0xff]
    %v4081 = vld [vmem:[#allocation13 + $0x20] sm:$0xff]
    %v4082 = vld [vmem:[#allocation13 + $0x28] sm:$0xff]
    %v4083 = vld [vmem:[#allocation13 + $0x30] sm:$0xff]
    %v4084 = vld [vmem:[#allocation13 + $0x38] sm:$0xff]
    %v4085 = vld [vmem:[#allocation13 + $0x40] sm:$0xff]
    %v4086 = vld [vmem:[#allocation13 + $0x48] sm:$0xff]
    %v4087 = vld [vmem:[#allocation13 + $0x50] sm:$0xff]
    %v4088 = vld [vmem:[#allocation13 + $0x58] sm:$0xff]
    %v4089 = vld [vmem:[#allocation13 + $0x60] sm:$0xff]
    %v4090 = vld [vmem:[#allocation13 + $0x68] sm:$0xff]
    %v4091 = vld [vmem:[#allocation13 + $0x70] sm:$0xff]
    %v4092 = vld [vmem:[#allocation13 + $0x78] sm:$0xff]
    %v4093 = vld [vmem:[#allocation13 + $0x80] sm:$0xff]
    %v4094 = vld [vmem:[#allocation13 + $0x88] sm:$0xff]
    %v4095 = vld [vmem:[#allocation13 + $0x90] sm:$0xff]
    %v4096 = vld [vmem:[#allocation13 + $0x98] sm:$0xff]
    %v4097 = vld [vmem:[#allocation13 + $0xa0] sm:$0xff]
    %v4098 = vld [vmem:[#allocation13 + $0xa8] sm:$0xff]
    %v4099 = vld [vmem:[#allocation13 + $0xb0] sm:$0xff]
    %v4100 = vld [vmem:[#allocation13 + $0xb8] sm:$0xff]
    %v4101 = vld [vmem:[#allocation13 + $0xc0] sm:$0xff]
    %v4102 = vld [vmem:[#allocation13 + $0xc8] sm:$0xff]
    %v4103 = vld [vmem:[#allocation13 + $0xd0] sm:$0xff]
    %v4104 = vld [vmem:[#allocation13 + $0xd8] sm:$0xff]
    %v4105 = vld [vmem:[#allocation13 + $0xe0] sm:$0xff]
    %v4106 = vld [vmem:[#allocation13 + $0xe8] sm:$0xff]
    %v4107 = vld [vmem:[#allocation13 + $0xf0] sm:$0xff]
    %v4108 = vld [vmem:[#allocation13 + $0xf8] sm:$0xff]
    %v4109 = vld [vmem:[#allocation13 + $0x100] sm:$0xff]
    %v4110 = vld [vmem:[#allocation13 + $0x108] sm:$0xff]
    %v4111 = vld [vmem:[#allocation13 + $0x110] sm:$0xff]
    %v4112 = vld [vmem:[#allocation13 + $0x118] sm:$0xff]
    %v4113 = vld [vmem:[#allocation13 + $0x120] sm:$0xff]
    %v4114 = vld [vmem:[#allocation13 + $0x128] sm:$0xff]
    %v4115 = vld [vmem:[#allocation13 + $0x130] sm:$0xff]
    %v4116 = vld [vmem:[#allocation13 + $0x138] sm:$0xff]
    %v4117 = vld [vmem:[#allocation13 + $0x140] sm:$0xff]
    %v4118 = vld [vmem:[#allocation13 + $0x148] sm:$0xff]
    %v4119 = vld [vmem:[#allocation13 + $0x150] sm:$0xff]
    %v4120 = vld [vmem:[#allocation13 + $0x158] sm:$0xff]
    %v4121 = vld [vmem:[#allocation13 + $0x160] sm:$0xff]
    %v4122 = vld [vmem:[#allocation13 + $0x168] sm:$0xff]
    %v4123 = vld [vmem:[#allocation13 + $0x170] sm:$0xff]
    %v4124 = vld [vmem:[#allocation13 + $0x178] sm:$0xff]
    %v4125 = vld [vmem:[#allocation13 + $0x180] sm:$0xff]
    %v4126 = vld [vmem:[#allocation13 + $0x188] sm:$0xff]
    %v4127 = vld [vmem:[#allocation13 + $0x190] sm:$0xff]
    %v4128 = vld [vmem:[#allocation13 + $0x198] sm:$0xff]
    %v4129 = vld [vmem:[#allocation13 + $0x1a0] sm:$0xff]
    %v4130 = vld [vmem:[#allocation13 + $0x1a8] sm:$0xff]
    %v4131 = vld [vmem:[#allocation13 + $0x1b0] sm:$0xff]
    %v4132 = vld [vmem:[#allocation13 + $0x1b8] sm:$0xff]
    %v4133 = vld [vmem:[#allocation13 + $0x1c0] sm:$0xff]
    %v4134 = vld [vmem:[#allocation13 + $0x1c8] sm:$0xff]
    %v4135 = vld [vmem:[#allocation13 + $0x1d0] sm:$0xff]
    %v4136 = vld [vmem:[#allocation13 + $0x1d8] sm:$0xff]
    %v4137 = vld [vmem:[#allocation13 + $0x1e0] sm:$0xff]
    %v4138 = vld [vmem:[#allocation13 + $0x1e8] sm:$0xff]
    %v4139 = vld [vmem:[#allocation13 + $0x1f0] sm:$0xff]
    %v4140 = vld [vmem:[#allocation13 + $0x1f8] sm:$0xff]
    %4141 = vmatprep.subr.mxu0 %v4108
    %4142 = vmatpush1.msra.mxu0 %v4107
    %4143 = vmatprep.subr.mxu0 %v4106
    %4144 = vmatpush1.msra.mxu0 %v4105
    %4145 = vmatprep.subr.mxu0 %v4104
    %4146 = vmatpush1.msra.mxu0 %v4103
    %4147 = vmatprep.subr.mxu0 %v4102
    %4148 = vmatpush1.msra.mxu0 %v4101
    %4149 = vmatprep.subr.mxu0 %v4100
    %4150 = vmatpush1.msra.mxu0 %v4099
    %4151 = vmatprep.subr.mxu0 %v4098
    %4152 = vmatpush1.msra.mxu0 %v4097
    %4153 = vmatprep.subr.mxu0 %v4096
    %4154 = vmatpush1.msra.mxu0 %v4095
    %4155 = vmatprep.subr.mxu0 %v4094
    %4156 = vmatpush1.msra.mxu0 %v4093
    %4157 = vmatprep.subr.mxu0 %v4092
    %4158 = vmatpush1.msra.mxu0 %v4091
    %4159 = vmatprep.subr.mxu0 %v4090
    %4160 = vmatpush1.msra.mxu0 %v4089
    %4161 = vmatprep.subr.mxu0 %v4088
    %4162 = vmatpush1.msra.mxu0 %v4087
    %4163 = vmatprep.subr.mxu0 %v4086
    %4164 = vmatpush1.msra.mxu0 %v4085
    %4165 = vmatprep.subr.mxu0 %v4084
    %4166 = vmatpush1.msra.mxu0 %v4083
    %4167 = vmatprep.subr.mxu0 %v4082
    %4168 = vmatpush1.msra.mxu0 %v4081
    %4169 = vmatprep.subr.mxu0 %v4080
    %4170 = vmatpush1.msra.mxu0 %v4079
    %4171 = vmatprep.subr.mxu0 %v4078
    %4172 = vmatpush1.msra.mxu0 %v4077
    %4173 = vmatprep.subr.mxu0 %v4140
    %4174 = vmatpush2.msra.mxu0 %v4139
    %4175 = vmatprep.subr.mxu0 %v4138
    %4176 = vmatpush2.msra.mxu0 %v4137
    %4177 = vmatprep.subr.mxu0 %v4136
    %4178 = vmatpush2.msra.mxu0 %v4135
    %4179 = vmatprep.subr.mxu0 %v4134
    %4180 = vmatpush2.msra.mxu0 %v4133
    %4181 = vmatprep.subr.mxu0 %v4132
    %4182 = vmatpush2.msra.mxu0 %v4131
    %4183 = vmatprep.subr.mxu0 %v4130
    %4184 = vmatpush2.msra.mxu0 %v4129
    %4185 = vmatprep.subr.mxu0 %v4128
    %4186 = vmatpush2.msra.mxu0 %v4127
    %4187 = vmatprep.subr.mxu0 %v4126
    %4188 = vmatpush2.msra.mxu0 %v4125
    %4189 = vmatprep.subr.mxu0 %v4124
    %4190 = vmatpush2.msra.mxu0 %v4123
    %4191 = vmatprep.subr.mxu0 %v4122
    %4192 = vmatpush2.msra.mxu0 %v4121
    %4193 = vmatprep.subr.mxu0 %v4120
    %4194 = vmatpush2.msra.mxu0 %v4119
    %4195 = vmatprep.subr.mxu0 %v4118
    %4196 = vmatpush2.msra.mxu0 %v4117
    %4197 = vmatprep.subr.mxu0 %v4116
    %4198 = vmatpush2.msra.mxu0 %v4115
    %4199 = vmatprep.subr.mxu0 %v4114
    %4200 = vmatpush2.msra.mxu0 %v4113
    %4201 = vmatprep.subr.mxu0 %v4112
    %4202 = vmatpush2.msra.mxu0 %v4111
    %4203 = vmatprep.subr.mxu0 %v4110
    %4204 = vmatpush2.msra.mxu0 %v4109
    %4205 = vmatprep.mubr.f32.mxu0 %v4076
    %4206 = vmatmul.mubr.f32.gmra.mxu0 %v4075
    %v4207 = vpop.f32.mrf.mxu0
    %v4208 = vadd.f32 0.0, %v4207
    %v4209 = vpop.f32.mrf.mxu0
    %v4210 = vadd.f32 0.0, %v4209
    %4211 = vdwg.mxu0
    %v4212 = vlaneseq
    %v4213 = vshrl.u32 %v4212, 7
    %v4214 = vsub.s32 0, %v4213
    %v4215 = vrot.slane %v4208, %v4214
    %v4216 = vlaneseq
    %v4217 = vshrl.u32 %v4216, 7
    %v4218 = vsub.s32 0, %v4217
    %v4219 = vrot.slane %v4210, %v4218
    %v4220 = vsub.f32 %v4048, %v4215
    %v4221 = vsub.f32 %v4049, %v4219
    %v4222 = vsub.f32 %v4050, %v4215
    %v4223 = vsub.f32 %v4051, %v4219
    %v4224 = vsub.f32 %v4052, %v4215
    %v4225 = vsub.f32 %v4053, %v4219
    %v4226 = vsub.f32 %v4054, %v4215
    %v4227 = vsub.f32 %v4055, %v4219
    %v4228 = vmul.f32 %v4220, %v4220
    %v4229 = vmul.f32 %v4221, %v4221
    %v4230 = vmul.f32 %v4222, %v4222
    %v4231 = vmul.f32 %v4223, %v4223
    %v4232 = vmul.f32 %v4224, %v4224
    %v4233 = vmul.f32 %v4225, %v4225
    %v4234 = vmul.f32 %v4226, %v4226
    %v4235 = vmul.f32 %v4227, %v4227
    %v4236 = vadd.f32 %v4228, %v4230
    %v4237 = vadd.f32 %v4236, %v4232
    %v4238 = vadd.f32 %v4237, %v4234
    %v4239 = vrot.slane %v4238, 4
    %v4240 = vadd.f32 %v4238, %v4239
    %v4241 = vrot.slane %v4240, 2
    %v4242 = vadd.f32 %v4240, %v4241
    %v4243 = vrot.slane %v4242, 1
    %v4244 = vadd.f32 %v4242, %v4243
    %v4245 = vadd.f32 %v4229, %v4231
    %v4246 = vadd.f32 %v4245, %v4233
    %v4247 = vadd.f32 %v4246, %v4235
    %v4248 = vrot.slane %v4247, 4
    %v4249 = vadd.f32 %v4247, %v4248
    %v4250 = vrot.slane %v4249, 2
    %v4251 = vadd.f32 %v4249, %v4250
    %v4252 = vrot.slane %v4251, 1
    %v4253 = vadd.f32 %v4251, %v4252
    %v4254 = vmul.f32 %v4244, %v4074
    %v4255 = vmul.f32 %v4253, %v4074
    %4256 = vmatprep.subr.mxu0 %v4108
    %4257 = vmatpush1.msra.mxu0 %v4107
    %4258 = vmatprep.subr.mxu0 %v4106
    %4259 = vmatpush1.msra.mxu0 %v4105
    %4260 = vmatprep.subr.mxu0 %v4104
    %4261 = vmatpush1.msra.mxu0 %v4103
    %4262 = vmatprep.subr.mxu0 %v4102
    %4263 = vmatpush1.msra.mxu0 %v4101
    %4264 = vmatprep.subr.mxu0 %v4100
    %4265 = vmatpush1.msra.mxu0 %v4099
    %4266 = vmatprep.subr.mxu0 %v4098
    %4267 = vmatpush1.msra.mxu0 %v4097
    %4268 = vmatprep.subr.mxu0 %v4096
    %4269 = vmatpush1.msra.mxu0 %v4095
    %4270 = vmatprep.subr.mxu0 %v4094
    %4271 = vmatpush1.msra.mxu0 %v4093
    %4272 = vmatprep.subr.mxu0 %v4092
    %4273 = vmatpush1.msra.mxu0 %v4091
    %4274 = vmatprep.subr.mxu0 %v4090
    %4275 = vmatpush1.msra.mxu0 %v4089
    %4276 = vmatprep.subr.mxu0 %v4088
    %4277 = vmatpush1.msra.mxu0 %v4087
    %4278 = vmatprep.subr.mxu0 %v4086
    %4279 = vmatpush1.msra.mxu0 %v4085
    %4280 = vmatprep.subr.mxu0 %v4084
    %4281 = vmatpush1.msra.mxu0 %v4083
    %4282 = vmatprep.subr.mxu0 %v4082
    %4283 = vmatpush1.msra.mxu0 %v4081
    %4284 = vmatprep.subr.mxu0 %v4080
    %4285 = vmatpush1.msra.mxu0 %v4079
    %4286 = vmatprep.subr.mxu0 %v4078
    %4287 = vmatpush1.msra.mxu0 %v4077
    %4288 = vmatprep.subr.mxu0 %v4140
    %4289 = vmatpush2.msra.mxu0 %v4139
    %4290 = vmatprep.subr.mxu0 %v4138
    %4291 = vmatpush2.msra.mxu0 %v4137
    %4292 = vmatprep.subr.mxu0 %v4136
    %4293 = vmatpush2.msra.mxu0 %v4135
    %4294 = vmatprep.subr.mxu0 %v4134
    %4295 = vmatpush2.msra.mxu0 %v4133
    %4296 = vmatprep.subr.mxu0 %v4132
    %4297 = vmatpush2.msra.mxu0 %v4131
    %4298 = vmatprep.subr.mxu0 %v4130
    %4299 = vmatpush2.msra.mxu0 %v4129
    %4300 = vmatprep.subr.mxu0 %v4128
    %4301 = vmatpush2.msra.mxu0 %v4127
    %4302 = vmatprep.subr.mxu0 %v4126
    %4303 = vmatpush2.msra.mxu0 %v4125
    %4304 = vmatprep.subr.mxu0 %v4124
    %4305 = vmatpush2.msra.mxu0 %v4123
    %4306 = vmatprep.subr.mxu0 %v4122
    %4307 = vmatpush2.msra.mxu0 %v4121
    %4308 = vmatprep.subr.mxu0 %v4120
    %4309 = vmatpush2.msra.mxu0 %v4119
    %4310 = vmatprep.subr.mxu0 %v4118
    %4311 = vmatpush2.msra.mxu0 %v4117
    %4312 = vmatprep.subr.mxu0 %v4116
    %4313 = vmatpush2.msra.mxu0 %v4115
    %4314 = vmatprep.subr.mxu0 %v4114
    %4315 = vmatpush2.msra.mxu0 %v4113
    %4316 = vmatprep.subr.mxu0 %v4112
    %4317 = vmatpush2.msra.mxu0 %v4111
    %4318 = vmatprep.subr.mxu0 %v4110
    %4319 = vmatpush2.msra.mxu0 %v4109
    %4320 = vmatprep.mubr.f32.mxu0 %v4255
    %4321 = vmatmul.mubr.f32.gmra.mxu0 %v4254
    %v4322 = vpop.f32.mrf.mxu0
    %v4323 = vadd.f32 1e-05, %v4322
    %v4324 = vpop.f32.mrf.mxu0
    %v4325 = vadd.f32 1e-05, %v4324
    %4326 = vdwg.mxu0
    %v4327 = vrsqrt.pop %v4323
    %v4328 = vrsqrt.pop %v4325
    %v4329 = vlaneseq
    %v4330 = vshrl.u32 %v4329, 7
    %v4331 = vsub.s32 0, %v4330
    %v4332 = vrot.slane %v4327, %v4331
    %v4333 = vlaneseq
    %v4334 = vshrl.u32 %v4333, 7
    %v4335 = vsub.s32 0, %v4334
    %v4336 = vrot.slane %v4328, %v4335
    %v4337 = vmul.f32 %v4220, %v4332
    %v4338 = vmul.f32 %v4221, %v4336
    %v4339 = vmul.f32 %v4222, %v4332
    %v4340 = vmul.f32 %v4223, %v4336
    %v4341 = vmul.f32 %v4224, %v4332
    %v4342 = vmul.f32 %v4225, %v4336
    %v4343 = vmul.f32 %v4226, %v4332
    %v4344 = vmul.f32 %v4227, %v4336
    %v4345 = vld [vmem:[#allocation15] sm:$0x3]
    %v4347 = vlaneseq
    %v4348 = vshrl.u32 %v4347, 7
    %v4349 = vsub.s32 0, %v4348
    %v4350 = vrot.slane %v4345, %v4349
    %v4351 = vlaneseq
    %v4352 = vshrl.u32 %v4351, 7
    %v4353 = vsub.s32 1, %v4352
    %v4354 = vrot.slane %v4345, %v4353
    %v4357 = vmul.f32 %v4337, %v4350
    %v4358 = vmul.f32 %v4338, %v4354
    %v4359 = vmul.f32 %v4339, %v4350
    %v4360 = vmul.f32 %v4340, %v4354
    %v4361 = vmul.f32 %v4341, %v4350
    %v4362 = vmul.f32 %v4342, %v4354
    %v4363 = vmul.f32 %v4343, %v4350
    %v4364 = vmul.f32 %v4344, %v4354
    %v4365 = vld [vmem:[#allocation16] sm:$0x3]
    %v4367 = vlaneseq
    %v4368 = vshrl.u32 %v4367, 7
    %v4369 = vsub.s32 0, %v4368
    %v4370 = vrot.slane %v4365, %v4369
    %v4371 = vlaneseq
    %v4372 = vshrl.u32 %v4371, 7
    %v4373 = vsub.s32 1, %v4372
    %v4374 = vrot.slane %v4365, %v4373
    %v4377 = vadd.f32 %v4357, %v4370
    %v4378 = vadd.f32 %v4358, %v4374
    %v4379 = vadd.f32 %v4359, %v4370
    %v4380 = vadd.f32 %v4360, %v4374
    %v4381 = vadd.f32 %v4361, %v4370
    %v4382 = vadd.f32 %v4362, %v4374
    %v4383 = vadd.f32 %v4363, %v4370
    %v4384 = vadd.f32 %v4364, %v4374
    %v4385 = vmax.f32 %v4377, 0.0
    %v4386 = vmax.f32 %v4378, 0.0
    %v4387 = vmax.f32 %v4379, 0.0
    %v4388 = vmax.f32 %v4380, 0.0
    %v4389 = vmax.f32 %v4381, 0.0
    %v4390 = vmax.f32 %v4382, 0.0
    %v4391 = vmax.f32 %v4383, 0.0
    %v4392 = vmax.f32 %v4384, 0.0
    %v4393 = vpack.c.bf16 %v4387, %v4385
    %v4394 = vpack.c.bf16 %v4388, %v4386
    %v4395 = vpack.c.bf16 %v4391, %v4389
    %v4396 = vpack.c.bf16 %v4392, %v4390
    %v4397 = vld [vmem:[#allocation12] sm:$0xf]
    %v4398 = vld [vmem:[#allocation12 + $0x4] sm:$0xf]
    %v4399 = vld [vmem:[#allocation12 + $0x8] sm:$0xf]
    %v4400 = vld [vmem:[#allocation12 + $0xc] sm:$0xf]
    %v4401 = vld [vmem:[#allocation12 + $0x10] sm:$0xf]
    %v4402 = vld [vmem:[#allocation12 + $0x14] sm:$0xf]
    %v4403 = vld [vmem:[#allocation12 + $0x18] sm:$0xf]
    %v4404 = vld [vmem:[#allocation12 + $0x1c] sm:$0xf]
    %v4405 = vld [vmem:[#allocation12 + $0x20] sm:$0xf]
    %v4406 = vld [vmem:[#allocation12 + $0x24] sm:$0xf]
    %v4407 = vld [vmem:[#allocation12 + $0x28] sm:$0xf]
    %v4408 = vld [vmem:[#allocation12 + $0x2c] sm:$0xf]
    %v4409 = vld [vmem:[#allocation12 + $0x30] sm:$0xf]
    %v4410 = vld [vmem:[#allocation12 + $0x34] sm:$0xf]
    %v4411 = vld [vmem:[#allocation12 + $0x38] sm:$0xf]
    %v4412 = vld [vmem:[#allocation12 + $0x3c] sm:$0xf]
    %v4413 = vld [vmem:[#allocation12 + $0x40] sm:$0xf]
    %v4414 = vld [vmem:[#allocation12 + $0x44] sm:$0xf]
    %v4415 = vld [vmem:[#allocation12 + $0x48] sm:$0xf]
    %v4416 = vld [vmem:[#allocation12 + $0x4c] sm:$0xf]
    %v4417 = vld [vmem:[#allocation12 + $0x50] sm:$0xf]
    %v4418 = vld [vmem:[#allocation12 + $0x54] sm:$0xf]
    %v4419 = vld [vmem:[#allocation12 + $0x58] sm:$0xf]
    %v4420 = vld [vmem:[#allocation12 + $0x5c] sm:$0xf]
    %v4421 = vld [vmem:[#allocation12 + $0x60] sm:$0xf]
    %v4422 = vld [vmem:[#allocation12 + $0x64] sm:$0xf]
    %v4423 = vld [vmem:[#allocation12 + $0x68] sm:$0xf]
    %v4424 = vld [vmem:[#allocation12 + $0x6c] sm:$0xf]
    %v4425 = vld [vmem:[#allocation12 + $0x70] sm:$0xf]
    %v4426 = vld [vmem:[#allocation12 + $0x74] sm:$0xf]
    %v4427 = vld [vmem:[#allocation12 + $0x78] sm:$0xf]
    %v4428 = vld [vmem:[#allocation12 + $0x7c] sm:$0xf]
    %v4461 = vunpack.c.l.b16 %v4397
    %v4462 = vunpack.c.l.b16 %v4398
    %v4463 = vunpack.c.l.b16 %v4399
    %v4464 = vunpack.c.l.b16 %v4400
    %v4465 = vunpack.c.l.b16 %v4401
    %v4466 = vunpack.c.l.b16 %v4402
    %v4467 = vunpack.c.l.b16 %v4403
    %v4468 = vunpack.c.l.b16 %v4404
    %v4469 = vunpack.c.l.b16 %v4405
    %v4470 = vunpack.c.l.b16 %v4406
    %v4471 = vunpack.c.l.b16 %v4407
    %v4472 = vunpack.c.l.b16 %v4408
    %v4473 = vunpack.c.l.b16 %v4409
    %v4474 = vunpack.c.l.b16 %v4410
    %v4475 = vunpack.c.l.b16 %v4411
    %v4476 = vunpack.c.l.b16 %v4412
    %v4477 = vunpack.c.l.b16 %v4413
    %v4478 = vunpack.c.l.b16 %v4414
    %v4479 = vunpack.c.l.b16 %v4415
    %v4480 = vunpack.c.l.b16 %v4416
    %v4481 = vunpack.c.l.b16 %v4417
    %v4482 = vunpack.c.l.b16 %v4418
    %v4483 = vunpack.c.l.b16 %v4419
    %v4484 = vunpack.c.l.b16 %v4420
    %v4485 = vunpack.c.l.b16 %v4421
    %v4486 = vunpack.c.l.b16 %v4422
    %v4487 = vunpack.c.l.b16 %v4423
    %v4488 = vunpack.c.l.b16 %v4424
    %v4489 = vunpack.c.l.b16 %v4425
    %v4490 = vunpack.c.l.b16 %v4426
    %v4491 = vunpack.c.l.b16 %v4427
    %v4492 = vunpack.c.l.b16 %v4428
    %v4493 = vpack.c.b16 %v4462, %v4461
    %v4494 = vpack.c.b16 %v4464, %v4463
    %v4495 = vpack.c.b16 %v4466, %v4465
    %v4496 = vpack.c.b16 %v4468, %v4467
    %v4497 = vpack.c.b16 %v4470, %v4469
    %v4498 = vpack.c.b16 %v4472, %v4471
    %v4499 = vpack.c.b16 %v4474, %v4473
    %v4500 = vpack.c.b16 %v4476, %v4475
    %v4501 = vpack.c.b16 %v4478, %v4477
    %v4502 = vpack.c.b16 %v4480, %v4479
    %v4503 = vpack.c.b16 %v4482, %v4481
    %v4504 = vpack.c.b16 %v4484, %v4483
    %v4505 = vpack.c.b16 %v4486, %v4485
    %v4506 = vpack.c.b16 %v4488, %v4487
    %v4507 = vpack.c.b16 %v4490, %v4489
    %v4508 = vpack.c.b16 %v4492, %v4491
    %4525 = vmatprep.subr.bf16.mxu0 0
    %4526 = vmatpush1.bf16.msra.mxu0 %v4500
    %4527 = vmatprep.subr.bf16.mxu0 0
    %4528 = vmatpush1.bf16.msra.mxu0 %v4499
    %4529 = vmatprep.subr.bf16.mxu0 0
    %4530 = vmatpush1.bf16.msra.mxu0 %v4498
    %4531 = vmatprep.subr.bf16.mxu0 0
    %4532 = vmatpush1.bf16.msra.mxu0 %v4497
    %4533 = vmatprep.subr.bf16.mxu0 0
    %4534 = vmatpush1.bf16.msra.mxu0 %v4496
    %4535 = vmatprep.subr.bf16.mxu0 0
    %4536 = vmatpush1.bf16.msra.mxu0 %v4495
    %4537 = vmatprep.subr.bf16.mxu0 0
    %4538 = vmatpush1.bf16.msra.mxu0 %v4494
    %4539 = vmatprep.subr.bf16.mxu0 0
    %4540 = vmatpush1.bf16.msra.mxu0 %v4493
    %4541 = vmatprep.subr.bf16.mxu0 0
    %4542 = vmatpush2.bf16.msra.mxu0 %v4508
    %4543 = vmatprep.subr.bf16.mxu0 0
    %4544 = vmatpush2.bf16.msra.mxu0 %v4507
    %4545 = vmatprep.subr.bf16.mxu0 0
    %4546 = vmatpush2.bf16.msra.mxu0 %v4506
    %4547 = vmatprep.subr.bf16.mxu0 0
    %4548 = vmatpush2.bf16.msra.mxu0 %v4505
    %4549 = vmatprep.subr.bf16.mxu0 0
    %4550 = vmatpush2.bf16.msra.mxu0 %v4504
    %4551 = vmatprep.subr.bf16.mxu0 0
    %4552 = vmatpush2.bf16.msra.mxu0 %v4503
    %4553 = vmatprep.subr.bf16.mxu0 0
    %4554 = vmatpush2.bf16.msra.mxu0 %v4502
    %4555 = vmatprep.subr.bf16.mxu0 0
    %4556 = vmatpush2.bf16.msra.mxu0 %v4501
    %4557 = vmatprep.mubr.bf16.mxu0 %v4394
    %4558 = vmatmul.mubr.bf16.gmra.mxu0 %v4393
    %v4559 = vpop.f32.mrf.mxu0
    %v4560 = vadd.f32 0.0, %v4559
    %v4561 = vpop.f32.mrf.mxu0
    %v4562 = vpop.f32.mrf.mxu0
    %v4563 = vadd.f32 0.0, %v4562
    %v4564 = vpop.f32.mrf.mxu0
    %4565 = vmatprep.mubr.bf16.mxu0 %v4396
    %4566 = vmatmul.mubr.bf16.gmra.mxu0 %v4395
    %v4567 = vpop.f32.mrf.mxu0
    %v4568 = vadd.f32 0.0, %v4567
    %v4569 = vpop.f32.mrf.mxu0
    %v4570 = vpop.f32.mrf.mxu0
    %v4571 = vadd.f32 0.0, %v4570
    %v4572 = vpop.f32.mrf.mxu0
    %4573 = vdwg.mxu0
    %v4574 = vld [vmem:[%s14] sm:$0xff]
    %v4575 = vld [vmem:[%s14 + $0x8] sm:$0xff]
    %v4576 = vld [vmem:[%s14 + $0x10] sm:$0xff]
    %v4577 = vld [vmem:[%s14 + $0x18] sm:$0xff]
    %v4578 = vld [vmem:[%s14 + $0x20] sm:$0xff]
    %v4579 = vld [vmem:[%s14 + $0x28] sm:$0xff]
    %v4580 = vld [vmem:[%s14 + $0x30] sm:$0xff]
    %v4581 = vld [vmem:[%s14 + $0x38] sm:$0xff]
    %s4582 = scalar_lea.vmem [#allocation12], 128
    %v4583 = vld [vmem:[%s4582] sm:$0xf]
    %v4584 = vld [vmem:[%s4582 + $0x4] sm:$0xf]
    %v4585 = vld [vmem:[%s4582 + $0x8] sm:$0xf]
    %v4586 = vld [vmem:[%s4582 + $0xc] sm:$0xf]
    %v4587 = vld [vmem:[%s4582 + $0x10] sm:$0xf]
    %v4588 = vld [vmem:[%s4582 + $0x14] sm:$0xf]
    %v4589 = vld [vmem:[%s4582 + $0x18] sm:$0xf]
    %v4590 = vld [vmem:[%s4582 + $0x1c] sm:$0xf]
    %v4591 = vld [vmem:[%s4582 + $0x20] sm:$0xf]
    %v4592 = vld [vmem:[%s4582 + $0x24] sm:$0xf]
    %v4593 = vld [vmem:[%s4582 + $0x28] sm:$0xf]
    %v4594 = vld [vmem:[%s4582 + $0x2c] sm:$0xf]
    %v4595 = vld [vmem:[%s4582 + $0x30] sm:$0xf]
    %v4596 = vld [vmem:[%s4582 + $0x34] sm:$0xf]
    %v4597 = vld [vmem:[%s4582 + $0x38] sm:$0xf]
    %v4598 = vld [vmem:[%s4582 + $0x3c] sm:$0xf]
    %v4599 = vld [vmem:[%s4582 + $0x40] sm:$0xf]
    %v4600 = vld [vmem:[%s4582 + $0x44] sm:$0xf]
    %v4601 = vld [vmem:[%s4582 + $0x48] sm:$0xf]
    %v4602 = vld [vmem:[%s4582 + $0x4c] sm:$0xf]
    %v4603 = vld [vmem:[%s4582 + $0x50] sm:$0xf]
    %v4604 = vld [vmem:[%s4582 + $0x54] sm:$0xf]
    %v4605 = vld [vmem:[%s4582 + $0x58] sm:$0xf]
    %v4606 = vld [vmem:[%s4582 + $0x5c] sm:$0xf]
    %v4607 = vld [vmem:[%s4582 + $0x60] sm:$0xf]
    %v4608 = vld [vmem:[%s4582 + $0x64] sm:$0xf]
    %v4609 = vld [vmem:[%s4582 + $0x68] sm:$0xf]
    %v4610 = vld [vmem:[%s4582 + $0x6c] sm:$0xf]
    %v4611 = vld [vmem:[%s4582 + $0x70] sm:$0xf]
    %v4612 = vld [vmem:[%s4582 + $0x74] sm:$0xf]
    %v4613 = vld [vmem:[%s4582 + $0x78] sm:$0xf]
    %v4614 = vld [vmem:[%s4582 + $0x7c] sm:$0xf]
    %v4647 = vunpack.c.l.b16 %v4583
    %v4648 = vunpack.c.l.b16 %v4584
    %v4649 = vunpack.c.l.b16 %v4585
    %v4650 = vunpack.c.l.b16 %v4586
    %v4651 = vunpack.c.l.b16 %v4587
    %v4652 = vunpack.c.l.b16 %v4588
    %v4653 = vunpack.c.l.b16 %v4589
    %v4654 = vunpack.c.l.b16 %v4590
    %v4655 = vunpack.c.l.b16 %v4591
    %v4656 = vunpack.c.l.b16 %v4592
    %v4657 = vunpack.c.l.b16 %v4593
    %v4658 = vunpack.c.l.b16 %v4594
    %v4659 = vunpack.c.l.b16 %v4595
    %v4660 = vunpack.c.l.b16 %v4596
    %v4661 = vunpack.c.l.b16 %v4597
    %v4662 = vunpack.c.l.b16 %v4598
    %v4663 = vunpack.c.l.b16 %v4599
    %v4664 = vunpack.c.l.b16 %v4600
    %v4665 = vunpack.c.l.b16 %v4601
    %v4666 = vunpack.c.l.b16 %v4602
    %v4667 = vunpack.c.l.b16 %v4603
    %v4668 = vunpack.c.l.b16 %v4604
    %v4669 = vunpack.c.l.b16 %v4605
    %v4670 = vunpack.c.l.b16 %v4606
    %v4671 = vunpack.c.l.b16 %v4607
    %v4672 = vunpack.c.l.b16 %v4608
    %v4673 = vunpack.c.l.b16 %v4609
    %v4674 = vunpack.c.l.b16 %v4610
    %v4675 = vunpack.c.l.b16 %v4611
    %v4676 = vunpack.c.l.b16 %v4612
    %v4677 = vunpack.c.l.b16 %v4613
    %v4678 = vunpack.c.l.b16 %v4614
    %v4679 = vpack.c.b16 %v4648, %v4647
    %v4680 = vpack.c.b16 %v4650, %v4649
    %v4681 = vpack.c.b16 %v4652, %v4651
    %v4682 = vpack.c.b16 %v4654, %v4653
    %v4683 = vpack.c.b16 %v4656, %v4655
    %v4684 = vpack.c.b16 %v4658, %v4657
    %v4685 = vpack.c.b16 %v4660, %v4659
    %v4686 = vpack.c.b16 %v4662, %v4661
    %v4687 = vpack.c.b16 %v4664, %v4663
    %v4688 = vpack.c.b16 %v4666, %v4665
    %v4689 = vpack.c.b16 %v4668, %v4667
    %v4690 = vpack.c.b16 %v4670, %v4669
    %v4691 = vpack.c.b16 %v4672, %v4671
    %v4692 = vpack.c.b16 %v4674, %v4673
    %v4693 = vpack.c.b16 %v4676, %v4675
    %v4694 = vpack.c.b16 %v4678, %v4677
    %4711 = vmatprep.subr.bf16.mxu0 0
    %4712 = vmatpush1.bf16.msra.mxu0 %v4686
    %4713 = vmatprep.subr.bf16.mxu0 0
    %4714 = vmatpush1.bf16.msra.mxu0 %v4685
    %4715 = vmatprep.subr.bf16.mxu0 0
    %4716 = vmatpush1.bf16.msra.mxu0 %v4684
    %4717 = vmatprep.subr.bf16.mxu0 0
    %4718 = vmatpush1.bf16.msra.mxu0 %v4683
    %4719 = vmatprep.subr.bf16.mxu0 0
    %4720 = vmatpush1.bf16.msra.mxu0 %v4682
    %4721 = vmatprep.subr.bf16.mxu0 0
    %4722 = vmatpush1.bf16.msra.mxu0 %v4681
    %4723 = vmatprep.subr.bf16.mxu0 0
    %4724 = vmatpush1.bf16.msra.mxu0 %v4680
    %4725 = vmatprep.subr.bf16.mxu0 0
    %4726 = vmatpush1.bf16.msra.mxu0 %v4679
    %4727 = vmatprep.subr.bf16.mxu0 0
    %4728 = vmatpush2.bf16.msra.mxu0 %v4694
    %4729 = vmatprep.subr.bf16.mxu0 0
    %4730 = vmatpush2.bf16.msra.mxu0 %v4693
    %4731 = vmatprep.subr.bf16.mxu0 0
    %4732 = vmatpush2.bf16.msra.mxu0 %v4692
    %4733 = vmatprep.subr.bf16.mxu0 0
    %4734 = vmatpush2.bf16.msra.mxu0 %v4691
    %4735 = vmatprep.subr.bf16.mxu0 0
    %4736 = vmatpush2.bf16.msra.mxu0 %v4690
    %4737 = vmatprep.subr.bf16.mxu0 0
    %4738 = vmatpush2.bf16.msra.mxu0 %v4689
    %4739 = vmatprep.subr.bf16.mxu0 0
    %4740 = vmatpush2.bf16.msra.mxu0 %v4688
    %4741 = vmatprep.subr.bf16.mxu0 0
    %4742 = vmatpush2.bf16.msra.mxu0 %v4687
    %4743 = vmatprep.mubr.bf16.mxu0 %v4394
    %4744 = vmatmul.mubr.bf16.gmra.mxu0 %v4393
    %v4745 = vpop.f32.mrf.mxu0
    %v4746 = vadd.f32 0.0, %v4745
    %v4747 = vpop.f32.mrf.mxu0
    %v4748 = vpop.f32.mrf.mxu0
    %v4749 = vadd.f32 0.0, %v4748
    %v4750 = vpop.f32.mrf.mxu0
    %4751 = vmatprep.mubr.bf16.mxu0 %v4396
    %4752 = vmatmul.mubr.bf16.gmra.mxu0 %v4395
    %v4753 = vpop.f32.mrf.mxu0
    %v4754 = vadd.f32 0.0, %v4753
    %v4755 = vpop.f32.mrf.mxu0
    %v4756 = vpop.f32.mrf.mxu0
    %v4757 = vadd.f32 0.0, %v4756
    %v4758 = vpop.f32.mrf.mxu0
    %4759 = vdwg.mxu0
    %s4760 = scalar_lea.vmem %s14, 64
    %v4761 = vld [vmem:[%s4760] sm:$0xff]
    %v4762 = vld [vmem:[%s4760 + $0x8] sm:$0xff]
    %v4763 = vld [vmem:[%s4760 + $0x10] sm:$0xff]
    %v4764 = vld [vmem:[%s4760 + $0x18] sm:$0xff]
    %v4765 = vld [vmem:[%s4760 + $0x20] sm:$0xff]
    %v4766 = vld [vmem:[%s4760 + $0x28] sm:$0xff]
    %v4767 = vld [vmem:[%s4760 + $0x30] sm:$0xff]
    %v4768 = vld [vmem:[%s4760 + $0x38] sm:$0xff]
    %v4770 = vsel %vm212, %v4761, 0
    %v4773 = vsel %vm212, %v4762, 0
    %v4776 = vsel %vm212, %v4763, 0
    %v4779 = vsel %vm212, %v4764, 0
    %v4782 = vsel %vm212, %v4765, 0
    %v4785 = vsel %vm212, %v4766, 0
    %v4788 = vsel %vm212, %v4767, 0
    %v4791 = vsel %vm212, %v4768, 0
    %4793 = vmatprep.subr.mxu0 0.0
    %4794 = vmatpush1.msra.mxu0 0.0
    %4795 = vmatprep.subr.mxu0 0.0
    %4796 = vmatpush1.msra.mxu0 0.0
    %4797 = vmatprep.subr.mxu0 0.0
    %4798 = vmatpush1.msra.mxu0 0.0
    %4799 = vmatprep.subr.mxu0 0.0
    %4800 = vmatpush1.msra.mxu0 0.0
    %4801 = vmatprep.subr.mxu0 0.0
    %4802 = vmatpush1.msra.mxu0 0.0
    %4803 = vmatprep.subr.mxu0 0.0
    %4804 = vmatpush1.msra.mxu0 0.0
    %4805 = vmatprep.subr.mxu0 0.0
    %4806 = vmatpush1.msra.mxu0 0.0
    %4807 = vmatprep.subr.mxu0 0.0
    %4808 = vmatpush1.msra.mxu0 0.0
    %4809 = vmatprep.subr.mxu0 0.0
    %4810 = vmatpush1.msra.mxu0 0.0
    %4811 = vmatprep.subr.mxu0 0.0
    %4812 = vmatpush1.msra.mxu0 0.0
    %4813 = vmatprep.subr.mxu0 0.0
    %4814 = vmatpush1.msra.mxu0 0.0
    %4815 = vmatprep.subr.mxu0 0.0
    %4816 = vmatpush1.msra.mxu0 0.0
    %4817 = vmatprep.subr.mxu0 0.0
    %4818 = vmatpush1.msra.mxu0 %v4757
    %4819 = vmatprep.subr.mxu0 0.0
    %4820 = vmatpush1.msra.mxu0 %v4754
    %4821 = vmatprep.subr.mxu0 0.0
    %4822 = vmatpush1.msra.mxu0 %v4749
    %4823 = vmatprep.subr.mxu0 0.0
    %4824 = vmatpush1.msra.mxu0 %v4746
    %4825 = vmatprep.subr.mxu0 0.0
    %4826 = vmatpush2.msra.mxu0 0.0
    %4827 = vmatprep.subr.mxu0 0.0
    %4828 = vmatpush2.msra.mxu0 0.0
    %4829 = vmatprep.subr.mxu0 0.0
    %4830 = vmatpush2.msra.mxu0 0.0
    %4831 = vmatprep.subr.mxu0 0.0
    %4832 = vmatpush2.msra.mxu0 0.0
    %4833 = vmatprep.subr.mxu0 0.0
    %4834 = vmatpush2.msra.mxu0 0.0
    %4835 = vmatprep.subr.mxu0 0.0
    %4836 = vmatpush2.msra.mxu0 0.0
    %4837 = vmatprep.subr.mxu0 0.0
    %4838 = vmatpush2.msra.mxu0 0.0
    %4839 = vmatprep.subr.mxu0 0.0
    %4840 = vmatpush2.msra.mxu0 0.0
    %4841 = vmatprep.subr.mxu0 0.0
    %4842 = vmatpush2.msra.mxu0 0.0
    %4843 = vmatprep.subr.mxu0 0.0
    %4844 = vmatpush2.msra.mxu0 0.0
    %4845 = vmatprep.subr.mxu0 0.0
    %4846 = vmatpush2.msra.mxu0 0.0
    %4847 = vmatprep.subr.mxu0 0.0
    %4848 = vmatpush2.msra.mxu0 0.0
    %4849 = vmatprep.subr.mxu0 0.0
    %4850 = vmatpush2.msra.mxu0 0.0
    %4851 = vmatprep.subr.mxu0 0.0
    %4852 = vmatpush2.msra.mxu0 0.0
    %4853 = vmatprep.subr.mxu0 0.0
    %4854 = vmatpush2.msra.mxu0 0.0
    %4855 = vmatprep.subr.mxu0 0.0
    %4856 = vmatpush2.msra.mxu0 0.0
    %4857 = vmatprep.mubr.f32.mxu0 0.0
    %4858 = vmatmul.mubr.f32.gmra.mxu0 %v4770
    %v4859 = vpop.f32.mrf.mxu0
    %v4860 = vadd.f32 0.0, %v4859
    %v4861 = vpop.f32.mrf.mxu0
    %4862 = vmatprep.mubr.f32.mxu0 0.0
    %4863 = vmatmul.mubr.f32.gmra.mxu0 %v4773
    %v4864 = vpop.f32.mrf.mxu0
    %v4865 = vadd.f32 0.0, %v4864
    %v4866 = vpop.f32.mrf.mxu0
    %4867 = vmatprep.mubr.f32.mxu0 0.0
    %4868 = vmatmul.mubr.f32.gmra.mxu0 %v4776
    %v4869 = vpop.f32.mrf.mxu0
    %v4870 = vadd.f32 0.0, %v4869
    %v4871 = vpop.f32.mrf.mxu0
    %4872 = vmatprep.mubr.f32.mxu0 0.0
    %4873 = vmatmul.mubr.f32.gmra.mxu0 %v4779
    %v4874 = vpop.f32.mrf.mxu0
    %v4875 = vadd.f32 0.0, %v4874
    %v4876 = vpop.f32.mrf.mxu0
    %4877 = vmatprep.mubr.f32.mxu0 0.0
    %4878 = vmatmul.mubr.f32.gmra.mxu0 %v4782
    %v4879 = vpop.f32.mrf.mxu0
    %v4880 = vadd.f32 0.0, %v4879
    %v4881 = vpop.f32.mrf.mxu0
    %4882 = vmatprep.mubr.f32.mxu0 0.0
    %4883 = vmatmul.mubr.f32.gmra.mxu0 %v4785
    %v4884 = vpop.f32.mrf.mxu0
    %v4885 = vadd.f32 0.0, %v4884
    %v4886 = vpop.f32.mrf.mxu0
    %4887 = vmatprep.mubr.f32.mxu0 0.0
    %4888 = vmatmul.mubr.f32.gmra.mxu0 %v4788
    %v4889 = vpop.f32.mrf.mxu0
    %v4890 = vadd.f32 0.0, %v4889
    %v4891 = vpop.f32.mrf.mxu0
    %4892 = vmatprep.mubr.f32.mxu0 0.0
    %4893 = vmatmul.mubr.f32.gmra.mxu0 %v4791
    %v4894 = vpop.f32.mrf.mxu0
    %v4895 = vadd.f32 0.0, %v4894
    %v4896 = vpop.f32.mrf.mxu0
    %4897 = vdwg.mxu0
    %v4899 = vsel %vm212, %v4574, 0
    %v4902 = vsel %vm212, %v4575, 0
    %v4905 = vsel %vm212, %v4576, 0
    %v4908 = vsel %vm212, %v4577, 0
    %v4911 = vsel %vm212, %v4578, 0
    %v4914 = vsel %vm212, %v4579, 0
    %v4917 = vsel %vm212, %v4580, 0
    %v4920 = vsel %vm212, %v4581, 0
    %4922 = vmatprep.subr.mxu0 0.0
    %4923 = vmatpush1.msra.mxu0 0.0
    %4924 = vmatprep.subr.mxu0 0.0
    %4925 = vmatpush1.msra.mxu0 0.0
    %4926 = vmatprep.subr.mxu0 0.0
    %4927 = vmatpush1.msra.mxu0 0.0
    %4928 = vmatprep.subr.mxu0 0.0
    %4929 = vmatpush1.msra.mxu0 0.0
    %4930 = vmatprep.subr.mxu0 0.0
    %4931 = vmatpush1.msra.mxu0 0.0
    %4932 = vmatprep.subr.mxu0 0.0
    %4933 = vmatpush1.msra.mxu0 0.0
    %4934 = vmatprep.subr.mxu0 0.0
    %4935 = vmatpush1.msra.mxu0 0.0
    %4936 = vmatprep.subr.mxu0 0.0
    %4937 = vmatpush1.msra.mxu0 0.0
    %4938 = vmatprep.subr.mxu0 0.0
    %4939 = vmatpush1.msra.mxu0 0.0
    %4940 = vmatprep.subr.mxu0 0.0
    %4941 = vmatpush1.msra.mxu0 0.0
    %4942 = vmatprep.subr.mxu0 0.0
    %4943 = vmatpush1.msra.mxu0 0.0
    %4944 = vmatprep.subr.mxu0 0.0
    %4945 = vmatpush1.msra.mxu0 0.0
    %4946 = vmatprep.subr.mxu0 0.0
    %4947 = vmatpush1.msra.mxu0 %v4571
    %4948 = vmatprep.subr.mxu0 0.0
    %4949 = vmatpush1.msra.mxu0 %v4568
    %4950 = vmatprep.subr.mxu0 0.0
    %4951 = vmatpush1.msra.mxu0 %v4563
    %4952 = vmatprep.subr.mxu0 0.0
    %4953 = vmatpush1.msra.mxu0 %v4560
    %4954 = vmatprep.subr.mxu0 0.0
    %4955 = vmatpush2.msra.mxu0 0.0
    %4956 = vmatprep.subr.mxu0 0.0
    %4957 = vmatpush2.msra.mxu0 0.0
    %4958 = vmatprep.subr.mxu0 0.0
    %4959 = vmatpush2.msra.mxu0 0.0
    %4960 = vmatprep.subr.mxu0 0.0
    %4961 = vmatpush2.msra.mxu0 0.0
    %4962 = vmatprep.subr.mxu0 0.0
    %4963 = vmatpush2.msra.mxu0 0.0
    %4964 = vmatprep.subr.mxu0 0.0
    %4965 = vmatpush2.msra.mxu0 0.0
    %4966 = vmatprep.subr.mxu0 0.0
    %4967 = vmatpush2.msra.mxu0 0.0
    %4968 = vmatprep.subr.mxu0 0.0
    %4969 = vmatpush2.msra.mxu0 0.0
    %4970 = vmatprep.subr.mxu0 0.0
    %4971 = vmatpush2.msra.mxu0 0.0
    %4972 = vmatprep.subr.mxu0 0.0
    %4973 = vmatpush2.msra.mxu0 0.0
    %4974 = vmatprep.subr.mxu0 0.0
    %4975 = vmatpush2.msra.mxu0 0.0
    %4976 = vmatprep.subr.mxu0 0.0
    %4977 = vmatpush2.msra.mxu0 0.0
    %4978 = vmatprep.subr.mxu0 0.0
    %4979 = vmatpush2.msra.mxu0 0.0
    %4980 = vmatprep.subr.mxu0 0.0
    %4981 = vmatpush2.msra.mxu0 0.0
    %4982 = vmatprep.subr.mxu0 0.0
    %4983 = vmatpush2.msra.mxu0 0.0
    %4984 = vmatprep.subr.mxu0 0.0
    %4985 = vmatpush2.msra.mxu0 0.0
    %4986 = vmatprep.mubr.f32.mxu0 0.0
    %4987 = vmatmul.mubr.f32.gmra.mxu0 %v4899
    %v4988 = vpop.f32.mrf.mxu0
    %v4989 = vadd.f32 %v4860, %v4988
    %v4990 = vpop.f32.mrf.mxu0
    %4991 = vmatprep.mubr.f32.mxu0 0.0
    %4992 = vmatmul.mubr.f32.gmra.mxu0 %v4902
    %v4993 = vpop.f32.mrf.mxu0
    %v4994 = vadd.f32 %v4865, %v4993
    %v4995 = vpop.f32.mrf.mxu0
    %4996 = vmatprep.mubr.f32.mxu0 0.0
    %4997 = vmatmul.mubr.f32.gmra.mxu0 %v4905
    %v4998 = vpop.f32.mrf.mxu0
    %v4999 = vadd.f32 %v4870, %v4998
    %v5000 = vpop.f32.mrf.mxu0
    %5001 = vmatprep.mubr.f32.mxu0 0.0
    %5002 = vmatmul.mubr.f32.gmra.mxu0 %v4908
    %v5003 = vpop.f32.mrf.mxu0
    %v5004 = vadd.f32 %v4875, %v5003
    %v5005 = vpop.f32.mrf.mxu0
    %5006 = vmatprep.mubr.f32.mxu0 0.0
    %5007 = vmatmul.mubr.f32.gmra.mxu0 %v4911
    %v5008 = vpop.f32.mrf.mxu0
    %v5009 = vadd.f32 %v4880, %v5008
    %v5010 = vpop.f32.mrf.mxu0
    %5011 = vmatprep.mubr.f32.mxu0 0.0
    %5012 = vmatmul.mubr.f32.gmra.mxu0 %v4914
    %v5013 = vpop.f32.mrf.mxu0
    %v5014 = vadd.f32 %v4885, %v5013
    %v5015 = vpop.f32.mrf.mxu0
    %5016 = vmatprep.mubr.f32.mxu0 0.0
    %5017 = vmatmul.mubr.f32.gmra.mxu0 %v4917
    %v5018 = vpop.f32.mrf.mxu0
    %v5019 = vadd.f32 %v4890, %v5018
    %v5020 = vpop.f32.mrf.mxu0
    %5021 = vmatprep.mubr.f32.mxu0 0.0
    %5022 = vmatmul.mubr.f32.gmra.mxu0 %v4920
    %v5023 = vpop.f32.mrf.mxu0
    %v5024 = vadd.f32 %v4895, %v5023
    %v5025 = vpop.f32.mrf.mxu0
    %5026 = vdwg.mxu0
    %s5027 = scalar_lea.vmem [#allocation12], 256
    %v5028 = vld [vmem:[%s5027] sm:$0xf]
    %v5029 = vld [vmem:[%s5027 + $0x4] sm:$0xf]
    %v5030 = vld [vmem:[%s5027 + $0x8] sm:$0xf]
    %v5031 = vld [vmem:[%s5027 + $0xc] sm:$0xf]
    %v5032 = vld [vmem:[%s5027 + $0x10] sm:$0xf]
    %v5033 = vld [vmem:[%s5027 + $0x14] sm:$0xf]
    %v5034 = vld [vmem:[%s5027 + $0x18] sm:$0xf]
    %v5035 = vld [vmem:[%s5027 + $0x1c] sm:$0xf]
    %v5036 = vld [vmem:[%s5027 + $0x20] sm:$0xf]
    %v5037 = vld [vmem:[%s5027 + $0x24] sm:$0xf]
    %v5038 = vld [vmem:[%s5027 + $0x28] sm:$0xf]
    %v5039 = vld [vmem:[%s5027 + $0x2c] sm:$0xf]
    %v5040 = vld [vmem:[%s5027 + $0x30] sm:$0xf]
    %v5041 = vld [vmem:[%s5027 + $0x34] sm:$0xf]
    %v5042 = vld [vmem:[%s5027 + $0x38] sm:$0xf]
    %v5043 = vld [vmem:[%s5027 + $0x3c] sm:$0xf]
    %v5044 = vld [vmem:[%s5027 + $0x40] sm:$0xf]
    %v5045 = vld [vmem:[%s5027 + $0x44] sm:$0xf]
    %v5046 = vld [vmem:[%s5027 + $0x48] sm:$0xf]
    %v5047 = vld [vmem:[%s5027 + $0x4c] sm:$0xf]
    %v5048 = vld [vmem:[%s5027 + $0x50] sm:$0xf]
    %v5049 = vld [vmem:[%s5027 + $0x54] sm:$0xf]
    %v5050 = vld [vmem:[%s5027 + $0x58] sm:$0xf]
    %v5051 = vld [vmem:[%s5027 + $0x5c] sm:$0xf]
    %v5052 = vld [vmem:[%s5027 + $0x60] sm:$0xf]
    %v5053 = vld [vmem:[%s5027 + $0x64] sm:$0xf]
    %v5054 = vld [vmem:[%s5027 + $0x68] sm:$0xf]
    %v5055 = vld [vmem:[%s5027 + $0x6c] sm:$0xf]
    %v5056 = vld [vmem:[%s5027 + $0x70] sm:$0xf]
    %v5057 = vld [vmem:[%s5027 + $0x74] sm:$0xf]
    %v5058 = vld [vmem:[%s5027 + $0x78] sm:$0xf]
    %v5059 = vld [vmem:[%s5027 + $0x7c] sm:$0xf]
    %v5092 = vunpack.c.l.b16 %v5028
    %v5093 = vunpack.c.l.b16 %v5029
    %v5094 = vunpack.c.l.b16 %v5030
    %v5095 = vunpack.c.l.b16 %v5031
    %v5096 = vunpack.c.l.b16 %v5032
    %v5097 = vunpack.c.l.b16 %v5033
    %v5098 = vunpack.c.l.b16 %v5034
    %v5099 = vunpack.c.l.b16 %v5035
    %v5100 = vunpack.c.l.b16 %v5036
    %v5101 = vunpack.c.l.b16 %v5037
    %v5102 = vunpack.c.l.b16 %v5038
    %v5103 = vunpack.c.l.b16 %v5039
    %v5104 = vunpack.c.l.b16 %v5040
    %v5105 = vunpack.c.l.b16 %v5041
    %v5106 = vunpack.c.l.b16 %v5042
    %v5107 = vunpack.c.l.b16 %v5043
    %v5108 = vunpack.c.l.b16 %v5044
    %v5109 = vunpack.c.l.b16 %v5045
    %v5110 = vunpack.c.l.b16 %v5046
    %v5111 = vunpack.c.l.b16 %v5047
    %v5112 = vunpack.c.l.b16 %v5048
    %v5113 = vunpack.c.l.b16 %v5049
    %v5114 = vunpack.c.l.b16 %v5050
    %v5115 = vunpack.c.l.b16 %v5051
    %v5116 = vunpack.c.l.b16 %v5052
    %v5117 = vunpack.c.l.b16 %v5053
    %v5118 = vunpack.c.l.b16 %v5054
    %v5119 = vunpack.c.l.b16 %v5055
    %v5120 = vunpack.c.l.b16 %v5056
    %v5121 = vunpack.c.l.b16 %v5057
    %v5122 = vunpack.c.l.b16 %v5058
    %v5123 = vunpack.c.l.b16 %v5059
    %v5124 = vpack.c.b16 %v5093, %v5092
    %v5125 = vpack.c.b16 %v5095, %v5094
    %v5126 = vpack.c.b16 %v5097, %v5096
    %v5127 = vpack.c.b16 %v5099, %v5098
    %v5128 = vpack.c.b16 %v5101, %v5100
    %v5129 = vpack.c.b16 %v5103, %v5102
    %v5130 = vpack.c.b16 %v5105, %v5104
    %v5131 = vpack.c.b16 %v5107, %v5106
    %v5132 = vpack.c.b16 %v5109, %v5108
    %v5133 = vpack.c.b16 %v5111, %v5110
    %v5134 = vpack.c.b16 %v5113, %v5112
    %v5135 = vpack.c.b16 %v5115, %v5114
    %v5136 = vpack.c.b16 %v5117, %v5116
    %v5137 = vpack.c.b16 %v5119, %v5118
    %v5138 = vpack.c.b16 %v5121, %v5120
    %v5139 = vpack.c.b16 %v5123, %v5122
    %5156 = vmatprep.subr.bf16.mxu0 0
    %5157 = vmatpush1.bf16.msra.mxu0 %v5131
    %5158 = vmatprep.subr.bf16.mxu0 0
    %5159 = vmatpush1.bf16.msra.mxu0 %v5130
    %5160 = vmatprep.subr.bf16.mxu0 0
    %5161 = vmatpush1.bf16.msra.mxu0 %v5129
    %5162 = vmatprep.subr.bf16.mxu0 0
    %5163 = vmatpush1.bf16.msra.mxu0 %v5128
    %5164 = vmatprep.subr.bf16.mxu0 0
    %5165 = vmatpush1.bf16.msra.mxu0 %v5127
    %5166 = vmatprep.subr.bf16.mxu0 0
    %5167 = vmatpush1.bf16.msra.mxu0 %v5126
    %5168 = vmatprep.subr.bf16.mxu0 0
    %5169 = vmatpush1.bf16.msra.mxu0 %v5125
    %5170 = vmatprep.subr.bf16.mxu0 0
    %5171 = vmatpush1.bf16.msra.mxu0 %v5124
    %5172 = vmatprep.subr.bf16.mxu0 0
    %5173 = vmatpush2.bf16.msra.mxu0 %v5139
    %5174 = vmatprep.subr.bf16.mxu0 0
    %5175 = vmatpush2.bf16.msra.mxu0 %v5138
    %5176 = vmatprep.subr.bf16.mxu0 0
    %5177 = vmatpush2.bf16.msra.mxu0 %v5137
    %5178 = vmatprep.subr.bf16.mxu0 0
    %5179 = vmatpush2.bf16.msra.mxu0 %v5136
    %5180 = vmatprep.subr.bf16.mxu0 0
    %5181 = vmatpush2.bf16.msra.mxu0 %v5135
    %5182 = vmatprep.subr.bf16.mxu0 0
    %5183 = vmatpush2.bf16.msra.mxu0 %v5134
    %5184 = vmatprep.subr.bf16.mxu0 0
    %5185 = vmatpush2.bf16.msra.mxu0 %v5133
    %5186 = vmatprep.subr.bf16.mxu0 0
    %5187 = vmatpush2.bf16.msra.mxu0 %v5132
    %5188 = vmatprep.mubr.bf16.mxu0 %v4394
    %5189 = vmatmul.mubr.bf16.gmra.mxu0 %v4393
    %v5190 = vpop.f32.mrf.mxu0
    %v5191 = vadd.f32 0.0, %v5190
    %v5192 = vpop.f32.mrf.mxu0
    %v5193 = vpop.f32.mrf.mxu0
    %v5194 = vadd.f32 0.0, %v5193
    %v5195 = vpop.f32.mrf.mxu0
    %5196 = vmatprep.mubr.bf16.mxu0 %v4396
    %5197 = vmatmul.mubr.bf16.gmra.mxu0 %v4395
    %v5198 = vpop.f32.mrf.mxu0
    %v5199 = vadd.f32 0.0, %v5198
    %v5200 = vpop.f32.mrf.mxu0
    %v5201 = vpop.f32.mrf.mxu0
    %v5202 = vadd.f32 0.0, %v5201
    %v5203 = vpop.f32.mrf.mxu0
    %5204 = vdwg.mxu0
    %s5205 = scalar_lea.vmem %s14, 128
    %v5206 = vld [vmem:[%s5205] sm:$0xff]
    %v5207 = vld [vmem:[%s5205 + $0x8] sm:$0xff]
    %v5208 = vld [vmem:[%s5205 + $0x10] sm:$0xff]
    %v5209 = vld [vmem:[%s5205 + $0x18] sm:$0xff]
    %v5210 = vld [vmem:[%s5205 + $0x20] sm:$0xff]
    %v5211 = vld [vmem:[%s5205 + $0x28] sm:$0xff]
    %v5212 = vld [vmem:[%s5205 + $0x30] sm:$0xff]
    %v5213 = vld [vmem:[%s5205 + $0x38] sm:$0xff]
    %v5215 = vsel %vm212, %v5206, 0
    %v5218 = vsel %vm212, %v5207, 0
    %v5221 = vsel %vm212, %v5208, 0
    %v5224 = vsel %vm212, %v5209, 0
    %v5227 = vsel %vm212, %v5210, 0
    %v5230 = vsel %vm212, %v5211, 0
    %v5233 = vsel %vm212, %v5212, 0
    %v5236 = vsel %vm212, %v5213, 0
    %5238 = vmatprep.subr.mxu0 0.0
    %5239 = vmatpush1.msra.mxu0 0.0
    %5240 = vmatprep.subr.mxu0 0.0
    %5241 = vmatpush1.msra.mxu0 0.0
    %5242 = vmatprep.subr.mxu0 0.0
    %5243 = vmatpush1.msra.mxu0 0.0
    %5244 = vmatprep.subr.mxu0 0.0
    %5245 = vmatpush1.msra.mxu0 0.0
    %5246 = vmatprep.subr.mxu0 0.0
    %5247 = vmatpush1.msra.mxu0 0.0
    %5248 = vmatprep.subr.mxu0 0.0
    %5249 = vmatpush1.msra.mxu0 0.0
    %5250 = vmatprep.subr.mxu0 0.0
    %5251 = vmatpush1.msra.mxu0 0.0
    %5252 = vmatprep.subr.mxu0 0.0
    %5253 = vmatpush1.msra.mxu0 0.0
    %5254 = vmatprep.subr.mxu0 0.0
    %5255 = vmatpush1.msra.mxu0 0.0
    %5256 = vmatprep.subr.mxu0 0.0
    %5257 = vmatpush1.msra.mxu0 0.0
    %5258 = vmatprep.subr.mxu0 0.0
    %5259 = vmatpush1.msra.mxu0 0.0
    %5260 = vmatprep.subr.mxu0 0.0
    %5261 = vmatpush1.msra.mxu0 0.0
    %5262 = vmatprep.subr.mxu0 0.0
    %5263 = vmatpush1.msra.mxu0 %v5202
    %5264 = vmatprep.subr.mxu0 0.0
    %5265 = vmatpush1.msra.mxu0 %v5199
    %5266 = vmatprep.subr.mxu0 0.0
    %5267 = vmatpush1.msra.mxu0 %v5194
    %5268 = vmatprep.subr.mxu0 0.0
    %5269 = vmatpush1.msra.mxu0 %v5191
    %5270 = vmatprep.subr.mxu0 0.0
    %5271 = vmatpush2.msra.mxu0 0.0
    %5272 = vmatprep.subr.mxu0 0.0
    %5273 = vmatpush2.msra.mxu0 0.0
    %5274 = vmatprep.subr.mxu0 0.0
    %5275 = vmatpush2.msra.mxu0 0.0
    %5276 = vmatprep.subr.mxu0 0.0
    %5277 = vmatpush2.msra.mxu0 0.0
    %5278 = vmatprep.subr.mxu0 0.0
    %5279 = vmatpush2.msra.mxu0 0.0
    %5280 = vmatprep.subr.mxu0 0.0
    %5281 = vmatpush2.msra.mxu0 0.0
    %5282 = vmatprep.subr.mxu0 0.0
    %5283 = vmatpush2.msra.mxu0 0.0
    %5284 = vmatprep.subr.mxu0 0.0
    %5285 = vmatpush2.msra.mxu0 0.0
    %5286 = vmatprep.subr.mxu0 0.0
    %5287 = vmatpush2.msra.mxu0 0.0
    %5288 = vmatprep.subr.mxu0 0.0
    %5289 = vmatpush2.msra.mxu0 0.0
    %5290 = vmatprep.subr.mxu0 0.0
    %5291 = vmatpush2.msra.mxu0 0.0
    %5292 = vmatprep.subr.mxu0 0.0
    %5293 = vmatpush2.msra.mxu0 0.0
    %5294 = vmatprep.subr.mxu0 0.0
    %5295 = vmatpush2.msra.mxu0 0.0
    %5296 = vmatprep.subr.mxu0 0.0
    %5297 = vmatpush2.msra.mxu0 0.0
    %5298 = vmatprep.subr.mxu0 0.0
    %5299 = vmatpush2.msra.mxu0 0.0
    %5300 = vmatprep.subr.mxu0 0.0
    %5301 = vmatpush2.msra.mxu0 0.0
    %5302 = vmatprep.mubr.f32.mxu0 0.0
    %5303 = vmatmul.mubr.f32.gmra.mxu0 %v5215
    %v5304 = vpop.f32.mrf.mxu0
    %v5305 = vadd.f32 0.0, %v5304
    %v5306 = vpop.f32.mrf.mxu0
    %5307 = vmatprep.mubr.f32.mxu0 0.0
    %5308 = vmatmul.mubr.f32.gmra.mxu0 %v5218
    %v5309 = vpop.f32.mrf.mxu0
    %v5310 = vadd.f32 0.0, %v5309
    %v5311 = vpop.f32.mrf.mxu0
    %5312 = vmatprep.mubr.f32.mxu0 0.0
    %5313 = vmatmul.mubr.f32.gmra.mxu0 %v5221
    %v5314 = vpop.f32.mrf.mxu0
    %v5315 = vadd.f32 0.0, %v5314
    %v5316 = vpop.f32.mrf.mxu0
    %5317 = vmatprep.mubr.f32.mxu0 0.0
    %5318 = vmatmul.mubr.f32.gmra.mxu0 %v5224
    %v5319 = vpop.f32.mrf.mxu0
    %v5320 = vadd.f32 0.0, %v5319
    %v5321 = vpop.f32.mrf.mxu0
    %5322 = vmatprep.mubr.f32.mxu0 0.0
    %5323 = vmatmul.mubr.f32.gmra.mxu0 %v5227
    %v5324 = vpop.f32.mrf.mxu0
    %v5325 = vadd.f32 0.0, %v5324
    %v5326 = vpop.f32.mrf.mxu0
    %5327 = vmatprep.mubr.f32.mxu0 0.0
    %5328 = vmatmul.mubr.f32.gmra.mxu0 %v5230
    %v5329 = vpop.f32.mrf.mxu0
    %v5330 = vadd.f32 0.0, %v5329
    %v5331 = vpop.f32.mrf.mxu0
    %5332 = vmatprep.mubr.f32.mxu0 0.0
    %5333 = vmatmul.mubr.f32.gmra.mxu0 %v5233
    %v5334 = vpop.f32.mrf.mxu0
    %v5335 = vadd.f32 0.0, %v5334
    %v5336 = vpop.f32.mrf.mxu0
    %5337 = vmatprep.mubr.f32.mxu0 0.0
    %5338 = vmatmul.mubr.f32.gmra.mxu0 %v5236
    %v5339 = vpop.f32.mrf.mxu0
    %v5340 = vadd.f32 0.0, %v5339
    %v5341 = vpop.f32.mrf.mxu0
    %5342 = vdwg.mxu0
    %v5343 = vadd.f32 %v4989, %v5305
    %v5344 = vadd.f32 %v4994, %v5310
    %v5345 = vadd.f32 %v4999, %v5315
    %v5346 = vadd.f32 %v5004, %v5320
    %v5347 = vadd.f32 %v5009, %v5325
    %v5348 = vadd.f32 %v5014, %v5330
    %v5349 = vadd.f32 %v5019, %v5335
    %v5350 = vadd.f32 %v5024, %v5340
    %s5351 = scalar_lea.vmem [#allocation12], 384
    %v5352 = vld [vmem:[%s5351] sm:$0xf]
    %v5353 = vld [vmem:[%s5351 + $0x4] sm:$0xf]
    %v5354 = vld [vmem:[%s5351 + $0x8] sm:$0xf]
    %v5355 = vld [vmem:[%s5351 + $0xc] sm:$0xf]
    %v5356 = vld [vmem:[%s5351 + $0x10] sm:$0xf]
    %v5357 = vld [vmem:[%s5351 + $0x14] sm:$0xf]
    %v5358 = vld [vmem:[%s5351 + $0x18] sm:$0xf]
    %v5359 = vld [vmem:[%s5351 + $0x1c] sm:$0xf]
    %v5360 = vld [vmem:[%s5351 + $0x20] sm:$0xf]
    %v5361 = vld [vmem:[%s5351 + $0x24] sm:$0xf]
    %v5362 = vld [vmem:[%s5351 + $0x28] sm:$0xf]
    %v5363 = vld [vmem:[%s5351 + $0x2c] sm:$0xf]
    %v5364 = vld [vmem:[%s5351 + $0x30] sm:$0xf]
    %v5365 = vld [vmem:[%s5351 + $0x34] sm:$0xf]
    %v5366 = vld [vmem:[%s5351 + $0x38] sm:$0xf]
    %v5367 = vld [vmem:[%s5351 + $0x3c] sm:$0xf]
    %v5368 = vld [vmem:[%s5351 + $0x40] sm:$0xf]
    %v5369 = vld [vmem:[%s5351 + $0x44] sm:$0xf]
    %v5370 = vld [vmem:[%s5351 + $0x48] sm:$0xf]
    %v5371 = vld [vmem:[%s5351 + $0x4c] sm:$0xf]
    %v5372 = vld [vmem:[%s5351 + $0x50] sm:$0xf]
    %v5373 = vld [vmem:[%s5351 + $0x54] sm:$0xf]
    %v5374 = vld [vmem:[%s5351 + $0x58] sm:$0xf]
    %v5375 = vld [vmem:[%s5351 + $0x5c] sm:$0xf]
    %v5376 = vld [vmem:[%s5351 + $0x60] sm:$0xf]
    %v5377 = vld [vmem:[%s5351 + $0x64] sm:$0xf]
    %v5378 = vld [vmem:[%s5351 + $0x68] sm:$0xf]
    %v5379 = vld [vmem:[%s5351 + $0x6c] sm:$0xf]
    %v5380 = vld [vmem:[%s5351 + $0x70] sm:$0xf]
    %v5381 = vld [vmem:[%s5351 + $0x74] sm:$0xf]
    %v5382 = vld [vmem:[%s5351 + $0x78] sm:$0xf]
    %v5383 = vld [vmem:[%s5351 + $0x7c] sm:$0xf]
    %v5416 = vunpack.c.l.b16 %v5352
    %v5417 = vunpack.c.l.b16 %v5353
    %v5418 = vunpack.c.l.b16 %v5354
    %v5419 = vunpack.c.l.b16 %v5355
    %v5420 = vunpack.c.l.b16 %v5356
    %v5421 = vunpack.c.l.b16 %v5357
    %v5422 = vunpack.c.l.b16 %v5358
    %v5423 = vunpack.c.l.b16 %v5359
    %v5424 = vunpack.c.l.b16 %v5360
    %v5425 = vunpack.c.l.b16 %v5361
    %v5426 = vunpack.c.l.b16 %v5362
    %v5427 = vunpack.c.l.b16 %v5363
    %v5428 = vunpack.c.l.b16 %v5364
    %v5429 = vunpack.c.l.b16 %v5365
    %v5430 = vunpack.c.l.b16 %v5366
    %v5431 = vunpack.c.l.b16 %v5367
    %v5432 = vunpack.c.l.b16 %v5368
    %v5433 = vunpack.c.l.b16 %v5369
    %v5434 = vunpack.c.l.b16 %v5370
    %v5435 = vunpack.c.l.b16 %v5371
    %v5436 = vunpack.c.l.b16 %v5372
    %v5437 = vunpack.c.l.b16 %v5373
    %v5438 = vunpack.c.l.b16 %v5374
    %v5439 = vunpack.c.l.b16 %v5375
    %v5440 = vunpack.c.l.b16 %v5376
    %v5441 = vunpack.c.l.b16 %v5377
    %v5442 = vunpack.c.l.b16 %v5378
    %v5443 = vunpack.c.l.b16 %v5379
    %v5444 = vunpack.c.l.b16 %v5380
    %v5445 = vunpack.c.l.b16 %v5381
    %v5446 = vunpack.c.l.b16 %v5382
    %v5447 = vunpack.c.l.b16 %v5383
    %v5448 = vpack.c.b16 %v5417, %v5416
    %v5449 = vpack.c.b16 %v5419, %v5418
    %v5450 = vpack.c.b16 %v5421, %v5420
    %v5451 = vpack.c.b16 %v5423, %v5422
    %v5452 = vpack.c.b16 %v5425, %v5424
    %v5453 = vpack.c.b16 %v5427, %v5426
    %v5454 = vpack.c.b16 %v5429, %v5428
    %v5455 = vpack.c.b16 %v5431, %v5430
    %v5456 = vpack.c.b16 %v5433, %v5432
    %v5457 = vpack.c.b16 %v5435, %v5434
    %v5458 = vpack.c.b16 %v5437, %v5436
    %v5459 = vpack.c.b16 %v5439, %v5438
    %v5460 = vpack.c.b16 %v5441, %v5440
    %v5461 = vpack.c.b16 %v5443, %v5442
    %v5462 = vpack.c.b16 %v5445, %v5444
    %v5463 = vpack.c.b16 %v5447, %v5446
    %5480 = vmatprep.subr.bf16.mxu0 0
    %5481 = vmatpush1.bf16.msra.mxu0 %v5455
    %5482 = vmatprep.subr.bf16.mxu0 0
    %5483 = vmatpush1.bf16.msra.mxu0 %v5454
    %5484 = vmatprep.subr.bf16.mxu0 0
    %5485 = vmatpush1.bf16.msra.mxu0 %v5453
    %5486 = vmatprep.subr.bf16.mxu0 0
    %5487 = vmatpush1.bf16.msra.mxu0 %v5452
    %5488 = vmatprep.subr.bf16.mxu0 0
    %5489 = vmatpush1.bf16.msra.mxu0 %v5451
    %5490 = vmatprep.subr.bf16.mxu0 0
    %5491 = vmatpush1.bf16.msra.mxu0 %v5450
    %5492 = vmatprep.subr.bf16.mxu0 0
    %5493 = vmatpush1.bf16.msra.mxu0 %v5449
    %5494 = vmatprep.subr.bf16.mxu0 0
    %5495 = vmatpush1.bf16.msra.mxu0 %v5448
    %5496 = vmatprep.subr.bf16.mxu0 0
    %5497 = vmatpush2.bf16.msra.mxu0 %v5463
    %5498 = vmatprep.subr.bf16.mxu0 0
    %5499 = vmatpush2.bf16.msra.mxu0 %v5462
    %5500 = vmatprep.subr.bf16.mxu0 0
    %5501 = vmatpush2.bf16.msra.mxu0 %v5461
    %5502 = vmatprep.subr.bf16.mxu0 0
    %5503 = vmatpush2.bf16.msra.mxu0 %v5460
    %5504 = vmatprep.subr.bf16.mxu0 0
    %5505 = vmatpush2.bf16.msra.mxu0 %v5459
    %5506 = vmatprep.subr.bf16.mxu0 0
    %5507 = vmatpush2.bf16.msra.mxu0 %v5458
    %5508 = vmatprep.subr.bf16.mxu0 0
    %5509 = vmatpush2.bf16.msra.mxu0 %v5457
    %5510 = vmatprep.subr.bf16.mxu0 0
    %5511 = vmatpush2.bf16.msra.mxu0 %v5456
    %5512 = vmatprep.mubr.bf16.mxu0 %v4394
    %5513 = vmatmul.mubr.bf16.gmra.mxu0 %v4393
    %v5514 = vpop.f32.mrf.mxu0
    %v5515 = vadd.f32 0.0, %v5514
    %v5516 = vpop.f32.mrf.mxu0
    %v5517 = vpop.f32.mrf.mxu0
    %v5518 = vadd.f32 0.0, %v5517
    %v5519 = vpop.f32.mrf.mxu0
    %5520 = vmatprep.mubr.bf16.mxu0 %v4396
    %5521 = vmatmul.mubr.bf16.gmra.mxu0 %v4395
    %v5522 = vpop.f32.mrf.mxu0
    %v5523 = vadd.f32 0.0, %v5522
    %v5524 = vpop.f32.mrf.mxu0
    %v5525 = vpop.f32.mrf.mxu0
    %v5526 = vadd.f32 0.0, %v5525
    %v5527 = vpop.f32.mrf.mxu0
    %5528 = vdwg.mxu0
    %s5529 = scalar_lea.vmem %s14, 192
    %v5530 = vld [vmem:[%s5529] sm:$0xff]
    %v5531 = vld [vmem:[%s5529 + $0x8] sm:$0xff]
    %v5532 = vld [vmem:[%s5529 + $0x10] sm:$0xff]
    %v5533 = vld [vmem:[%s5529 + $0x18] sm:$0xff]
    %v5534 = vld [vmem:[%s5529 + $0x20] sm:$0xff]
    %v5535 = vld [vmem:[%s5529 + $0x28] sm:$0xff]
    %v5536 = vld [vmem:[%s5529 + $0x30] sm:$0xff]
    %v5537 = vld [vmem:[%s5529 + $0x38] sm:$0xff]
    %v5539 = vsel %vm212, %v5530, 0
    %v5542 = vsel %vm212, %v5531, 0
    %v5545 = vsel %vm212, %v5532, 0
    %v5548 = vsel %vm212, %v5533, 0
    %v5551 = vsel %vm212, %v5534, 0
    %v5554 = vsel %vm212, %v5535, 0
    %v5557 = vsel %vm212, %v5536, 0
    %v5560 = vsel %vm212, %v5537, 0
    %5562 = vmatprep.subr.mxu0 0.0
    %5563 = vmatpush1.msra.mxu0 0.0
    %5564 = vmatprep.subr.mxu0 0.0
    %5565 = vmatpush1.msra.mxu0 0.0
    %5566 = vmatprep.subr.mxu0 0.0
    %5567 = vmatpush1.msra.mxu0 0.0
    %5568 = vmatprep.subr.mxu0 0.0
    %5569 = vmatpush1.msra.mxu0 0.0
    %5570 = vmatprep.subr.mxu0 0.0
    %5571 = vmatpush1.msra.mxu0 0.0
    %5572 = vmatprep.subr.mxu0 0.0
    %5573 = vmatpush1.msra.mxu0 0.0
    %5574 = vmatprep.subr.mxu0 0.0
    %5575 = vmatpush1.msra.mxu0 0.0
    %5576 = vmatprep.subr.mxu0 0.0
    %5577 = vmatpush1.msra.mxu0 0.0
    %5578 = vmatprep.subr.mxu0 0.0
    %5579 = vmatpush1.msra.mxu0 0.0
    %5580 = vmatprep.subr.mxu0 0.0
    %5581 = vmatpush1.msra.mxu0 0.0
    %5582 = vmatprep.subr.mxu0 0.0
    %5583 = vmatpush1.msra.mxu0 0.0
    %5584 = vmatprep.subr.mxu0 0.0
    %5585 = vmatpush1.msra.mxu0 0.0
    %5586 = vmatprep.subr.mxu0 0.0
    %5587 = vmatpush1.msra.mxu0 %v5526
    %5588 = vmatprep.subr.mxu0 0.0
    %5589 = vmatpush1.msra.mxu0 %v5523
    %5590 = vmatprep.subr.mxu0 0.0
    %5591 = vmatpush1.msra.mxu0 %v5518
    %5592 = vmatprep.subr.mxu0 0.0
    %5593 = vmatpush1.msra.mxu0 %v5515
    %5594 = vmatprep.subr.mxu0 0.0
    %5595 = vmatpush2.msra.mxu0 0.0
    %5596 = vmatprep.subr.mxu0 0.0
    %5597 = vmatpush2.msra.mxu0 0.0
    %5598 = vmatprep.subr.mxu0 0.0
    %5599 = vmatpush2.msra.mxu0 0.0
    %5600 = vmatprep.subr.mxu0 0.0
    %5601 = vmatpush2.msra.mxu0 0.0
    %5602 = vmatprep.subr.mxu0 0.0
    %5603 = vmatpush2.msra.mxu0 0.0
    %5604 = vmatprep.subr.mxu0 0.0
    %5605 = vmatpush2.msra.mxu0 0.0
    %5606 = vmatprep.subr.mxu0 0.0
    %5607 = vmatpush2.msra.mxu0 0.0
    %5608 = vmatprep.subr.mxu0 0.0
    %5609 = vmatpush2.msra.mxu0 0.0
    %5610 = vmatprep.subr.mxu0 0.0
    %5611 = vmatpush2.msra.mxu0 0.0
    %5612 = vmatprep.subr.mxu0 0.0
    %5613 = vmatpush2.msra.mxu0 0.0
    %5614 = vmatprep.subr.mxu0 0.0
    %5615 = vmatpush2.msra.mxu0 0.0
    %5616 = vmatprep.subr.mxu0 0.0
    %5617 = vmatpush2.msra.mxu0 0.0
    %5618 = vmatprep.subr.mxu0 0.0
    %5619 = vmatpush2.msra.mxu0 0.0
    %5620 = vmatprep.subr.mxu0 0.0
    %5621 = vmatpush2.msra.mxu0 0.0
    %5622 = vmatprep.subr.mxu0 0.0
    %5623 = vmatpush2.msra.mxu0 0.0
    %5624 = vmatprep.subr.mxu0 0.0
    %5625 = vmatpush2.msra.mxu0 0.0
    %5626 = vmatprep.mubr.f32.mxu0 0.0
    %5627 = vmatmul.mubr.f32.gmra.mxu0 %v5539
    %v5628 = vpop.f32.mrf.mxu0
    %v5629 = vadd.f32 0.0, %v5628
    %v5630 = vpop.f32.mrf.mxu0
    %5631 = vmatprep.mubr.f32.mxu0 0.0
    %5632 = vmatmul.mubr.f32.gmra.mxu0 %v5542
    %v5633 = vpop.f32.mrf.mxu0
    %v5634 = vadd.f32 0.0, %v5633
    %v5635 = vpop.f32.mrf.mxu0
    %5636 = vmatprep.mubr.f32.mxu0 0.0
    %5637 = vmatmul.mubr.f32.gmra.mxu0 %v5545
    %v5638 = vpop.f32.mrf.mxu0
    %v5639 = vadd.f32 0.0, %v5638
    %v5640 = vpop.f32.mrf.mxu0
    %5641 = vmatprep.mubr.f32.mxu0 0.0
    %5642 = vmatmul.mubr.f32.gmra.mxu0 %v5548
    %v5643 = vpop.f32.mrf.mxu0
    %v5644 = vadd.f32 0.0, %v5643
    %v5645 = vpop.f32.mrf.mxu0
    %5646 = vmatprep.mubr.f32.mxu0 0.0
    %5647 = vmatmul.mubr.f32.gmra.mxu0 %v5551
    %v5648 = vpop.f32.mrf.mxu0
    %v5649 = vadd.f32 0.0, %v5648
    %v5650 = vpop.f32.mrf.mxu0
    %5651 = vmatprep.mubr.f32.mxu0 0.0
    %5652 = vmatmul.mubr.f32.gmra.mxu0 %v5554
    %v5653 = vpop.f32.mrf.mxu0
    %v5654 = vadd.f32 0.0, %v5653
    %v5655 = vpop.f32.mrf.mxu0
    %5656 = vmatprep.mubr.f32.mxu0 0.0
    %5657 = vmatmul.mubr.f32.gmra.mxu0 %v5557
    %v5658 = vpop.f32.mrf.mxu0
    %v5659 = vadd.f32 0.0, %v5658
    %v5660 = vpop.f32.mrf.mxu0
    %5661 = vmatprep.mubr.f32.mxu0 0.0
    %5662 = vmatmul.mubr.f32.gmra.mxu0 %v5560
    %v5663 = vpop.f32.mrf.mxu0
    %v5664 = vadd.f32 0.0, %v5663
    %v5665 = vpop.f32.mrf.mxu0
    %5666 = vdwg.mxu0
    %v5667 = vadd.f32 %v5343, %v5629
    %v5668 = vadd.f32 %v5344, %v5634
    %v5669 = vadd.f32 %v5345, %v5639
    %v5670 = vadd.f32 %v5346, %v5644
    %v5671 = vadd.f32 %v5347, %v5649
    %v5672 = vadd.f32 %v5348, %v5654
    %v5673 = vadd.f32 %v5349, %v5659
    %v5674 = vadd.f32 %v5350, %v5664
    %v5675 = vtanh.pop %v5667
    %v5676 = vtanh.pop %v5668
    %v5677 = vtanh.pop %v5669
    %v5678 = vtanh.pop %v5670
    %v5679 = vtanh.pop %v5671
    %v5680 = vtanh.pop %v5672
    %v5681 = vtanh.pop %v5673
    %v5682 = vtanh.pop %v5674
    %5683 = vst [vmem:[%s18] sm:$0xff] %v5675
    %5684 = vst [vmem:[%s18 + $0x8] sm:$0xff] %v5676
    %5685 = vst [vmem:[%s18 + $0x10] sm:$0xff] %v5677
    %5686 = vst [vmem:[%s18 + $0x18] sm:$0xff] %v5678
    %5687 = vst [vmem:[%s18 + $0x20] sm:$0xff] %v5679
    %5688 = vst [vmem:[%s18 + $0x28] sm:$0xff] %v5680
    %5689 = vst [vmem:[%s18 + $0x30] sm:$0xff] %v5681
    %5690 = vst [vmem:[%s18 + $0x38] sm:$0xff] %v5682
    // Predicated region
    $region114: #{dcgan_forward.1} parent=1 // pred_check
      _
    $region115: #{dcgan_forward.1} parent=1 // pred_check_branch
      %5692 = sbr.rel (0) target = $region117
    $region116: #{dcgan_forward.1} parent=1 // pred_region
      _
    $region117: #{dcgan_forward.1} parent=1 // pred_fallthru
      _
    // Predicated region
    $region118: #{dcgan_forward.1} parent=1 // pred_check
      _
    $region119: #{dcgan_forward.1} parent=1 // pred_check_branch
      %5694 = sbr.rel (0) target = $region121
    $region120: #{dcgan_forward.1} parent=1 // pred_region
      _
    $region121: #{dcgan_forward.1} parent=1 // pred_fallthru
      _
    %5695 = vsyncpa [#allocation3], 1
    %5696 = vsyncpa [#allocation5], 1
    %5697 = vsyncpa [#allocation8], 1
    %5698 = vsyncpa [#allocation11], 1
    %5699 = vsyncpa [#allocation14], 1
    %5700 = vsyncpa [#allocation17], 1

</llo_original>
